<compile_context>
chip_gen: v5e
topology: v5e:2x2
jax: 0.10.0
libtpu: 0.0.40
codegen_flags: <defaults>
</compile_context>

<pallas_src>
import jax
import jax.numpy as jnp
from jax import lax
from jax.experimental import pallas as pl
from jax.experimental.pallas import tpu as pltpu

K1 = 61                 # firstConv kernel (1, 61)
K3 = 25                 # separableConv kernel (1, 25)
P1 = (K1 - 1) // 2      # 30
P3 = (K3 - 1) // 2      # 12
N3 = 256                # lane-padded width of the post-pool4 time axis (>= 187)
NE = 384                # lane-dense width of the padded pooled signal (>= N3 + K3 - 1)


def _elu(z):
    # ELU(alpha=1): x if x>0 else exp(x)-1   (clamp arg of exp for safety)
    return jnp.where(z > 0, z, jnp.exp(jnp.minimum(z, 0.0)) - 1.0)


def eegnet_kernel(xcol_ref, w12_ref, b12_ref, pool4_ref, w3s_ref, b3_ref,
                  pool8_ref, wfc_ref, bfc_ref, out_ref, x3col_ref):
    block_b = xcol_ref.shape[0]
    for i in range(block_b):
        # ---- stage 1: firstConv + BN1 + depthwise(2x1) + BN2 folded into one
        #      (32,128)@(128,768) matmul over the host-precomputed bf16 im2col.
        d = jnp.dot(w12_ref[...], xcol_ref[i],
                    preferred_element_type=jnp.float32)            # (32, 768)
        d = _elu(d + b12_ref[...])                                  # f32 on VPU

        # ---- AvgPool(1,4) + separableConv zero padding folded into one
        #      pooling-matrix matmul -> P3-padded pooled signal (32, 384).
        pp = jnp.dot(d.astype(jnp.bfloat16), pool4_ref[...],
                     preferred_element_type=jnp.float32)
        ppb = pp.astype(jnp.bfloat16)                               # single cast

        # ---- separableConv: 25-tap im2col with lane-dense (32,256) stores,
        #      then ONE (32,800)@(800,256) matmul (BN3 scale folded in w3s).
        for k in range(K3):
            x3col_ref[32 * k:32 * (k + 1), :] = ppb[:, k:k + N3]
        s = jnp.dot(w3s_ref[...], x3col_ref[...],
                    preferred_element_type=jnp.float32)             # (32, 256)
        s = _elu(s + b3_ref[...])                                   # f32 on VPU

        # ---- AvgPool(1,8): zero rows in pool8 discard the padded columns.
        q = jnp.dot(s.astype(jnp.bfloat16), pool8_ref[...],
                    preferred_element_type=jnp.float32)             # (32, 23)

        # ---- classify: flatten (channel-major) + Linear(32*23 -> 2), on VPU.
        t1 = jnp.sum(wfc_ref[...] * q[None, :, :], axis=-1)         # (2, 32)
        logits = jnp.sum(t1, axis=-1, keepdims=True) + bfc_ref[...] # (2, 1)
        out_ref[i] = logits


def eegnet_forward_pallas(x, params, *, block_b=None):
    """x: (B, 1, 2, T) float32 -> logits (B, 2)."""
    B, _, R, T = x.shape
    assert R == 2
    prm = params
    eps = 1e-5
    T4 = (T - 4) // 4 + 1
    T8 = (T4 - 8) // 8 + 1
    assert 32 * T8 == prm["wfc"].shape[1]       # classifier expects 32*23
    TPAD = ((T + 127) // 128) * 128             # 768 for T=750
    assert N3 >= T4 and NE >= N3 + K3 - 1

    if block_b is None:
        # >=2 grid steps keeps both v7x TensorCores busy; fold more samples
        # per step (amortize fixed per-step cost) only when B allows it.
        block_b = 1
        for cand in (4, 2):
            if B % cand == 0 and B // cand >= 2:
                block_b = cand
                break
    assert B % block_b == 0

    def fold(g, b, m, v):
        a = g / jnp.sqrt(v + eps)
        return a, b - m * a

    a1, b1 = fold(prm["bn1_g"], prm["bn1_b"], prm["bn1_m"], prm["bn1_v"])  # (16,)
    a2, b2 = fold(prm["bn2_g"], prm["bn2_b"], prm["bn2_m"], prm["bn2_v"])  # (32,)
    a3, b3 = fold(prm["bn3_g"], prm["bn3_b"], prm["bn3_m"], prm["bn3_v"])  # (32,)

    # --- fuse firstConv + BN1 + depthwise(2x1,groups=16) + BN2-scale ---------
    w1 = prm["w1"].reshape(16, K1)                           # (16, 61)
    w2 = prm["w2"].reshape(32, 2)                            # (oc2, eeg-row tap)
    sel = jnp.repeat(jnp.eye(16, dtype=jnp.float32), 2, axis=0)          # (32, 16)
    w2m = jnp.concatenate([sel * w2[:, 0:1], sel * w2[:, 1:2]], axis=1)  # (32, 32)
    a1cat = jnp.concatenate([a1, a1])                        # (32,)
    b1cat = jnp.concatenate([b1, b1])                        # (32,)

    # W1stack[ic, 2k+h]: firstConv tap k of EEG row h feeding "channel" ic
    w1s = jnp.zeros((32, 2 * K1), jnp.float32)
    w1s = w1s.at[:16, 0::2].set(w1)                          # row-0 channels
    w1s = w1s.at[16:, 1::2].set(w1)                          # row-1 channels
    w2eff = (a2[:, None] * w2m) * a1cat[None, :]             # (32, 32)
    w12 = jnp.pad(w2eff @ w1s, ((0, 0), (0, 128 - 2 * K1)))  # (32, 128)
    b12 = (a2 * (w2m @ b1cat) + b2).reshape(32, 1)           # fused bias

    # --- separableConv weight, tap-major stacked, BN3 scale folded ----------
    w3 = prm["w3"][:, :, 0, :]                               # (oc, ic, k)
    w3s = a3[:, None] * jnp.transpose(w3, (0, 2, 1)).reshape(32, K3 * 32)
    b3c = b3.reshape(32, 1)

    # --- constant pooling matrices (padding folded in, lane-dense widths) ----
    tau = jnp.arange(TPAD)[:, None]
    col = jnp.arange(NE)[None, :]
    pool4e = jnp.where((tau < 4 * T4) & (col >= P3) & (col < P3 + T4)
                       & (tau // 4 == col - P3),
                       0.25, 0.0).astype(jnp.bfloat16)       # (768, 384)
    row = jnp.arange(N3)[:, None]
    m8 = jnp.arange(T8)[None, :]
    pool8 = jnp.where((row < 8 * T8) & (row // 8 == m8),
                      0.125, 0.0).astype(jnp.bfloat16)       # (256, 23)

    wfc3 = prm["wfc"].reshape(2, 32, T8)
    bfc2 = prm["bfc"].reshape(2, 1)

    # --- host-side stage-1 im2col: xcol[b, 2k+h, t] = xpad[b, h, t+k] --------
    xpad = jnp.pad(x[:, 0], ((0, 0), (0, 0), (P1, P1)))      # (B, 2, T + 60)
    xg = jnp.stack([xpad[:, :, k:k + T] for k in range(K1)], axis=1)  # (B,61,2,T)
    xcol = xg.reshape(B, 2 * K1, T)
    xcol = jnp.pad(xcol, ((0, 0), (0, 128 - 2 * K1), (0, TPAD - T)))
    xcol = xcol.astype(jnp.bfloat16)                         # (B, 128, 768)

    w12b = w12.astype(jnp.bfloat16)
    w3sb = w3s.astype(jnp.bfloat16)

    out = pl.pallas_call(
        eegnet_kernel,
        out_shape=jax.ShapeDtypeStruct((B, 2, 1), jnp.float32),
        grid=(B // block_b,),
        in_specs=[
            pl.BlockSpec((block_b, 128, TPAD), lambda b: (b, 0, 0)),  # im2col
            pl.BlockSpec((32, 128), lambda b: (0, 0)),                # w12
            pl.BlockSpec((32, 1), lambda b: (0, 0)),                  # b12
            pl.BlockSpec((TPAD, NE), lambda b: (0, 0)),               # pool4e
            pl.BlockSpec((32, K3 * 32), lambda b: (0, 0)),            # w3s
            pl.BlockSpec((32, 1), lambda b: (0, 0)),                  # b3
            pl.BlockSpec((N3, T8), lambda b: (0, 0)),                 # pool8
            pl.BlockSpec((2, 32, T8), lambda b: (0, 0, 0)),           # wfc
            pl.BlockSpec((2, 1), lambda b: (0, 0)),                   # bfc
        ],
        out_specs=pl.BlockSpec((block_b, 2, 1), lambda b: (b, 0, 0)),
        scratch_shapes=[
            pltpu.VMEM((K3 * 32, N3), jnp.bfloat16),   # separable-conv im2col
        ],
        compiler_params=pltpu.CompilerParams(dimension_semantics=("parallel",)),
    )(xcol, w12b, b12, pool4e, w3sb, b3c, pool8, wfc3, bfc2)
    return out.reshape(B, 2)


def eegnet_forward_ref(x, params):
    """Plain-JAX reference mirroring the PyTorch forward (inference mode)."""
    p = params
    eps = 1e-5
    dn = ("NCHW", "OIHW", "NCHW")

    def bn(h, g, b, m, v):
        g = g[None, :, None, None]; b = b[None, :, None, None]
        m = m[None, :, None, None]; v = v[None, :, None, None]
        return g * (h - m) / jnp.sqrt(v + eps) + b

    h = lax.conv_general_dilated(x, p["w1"], (1, 1), [(0, 0), (30, 30)],
                                 dimension_numbers=dn)
    h = bn(h, p["bn1_g"], p["bn1_b"], p["bn1_m"], p["bn1_v"])

    h = lax.conv_general_dilated(h, p["w2"], (1, 1), [(0, 0), (0, 0)],
                                 dimension_numbers=dn, feature_group_count=16)
    h = bn(h, p["bn2_g"], p["bn2_b"], p["bn2_m"], p["bn2_v"])
    h = jax.nn.elu(h)
    B, C, H, W = h.shape
    T4 = (W - 4) // 4 + 1
    h = h[..., :T4 * 4].reshape(B, C, H, T4, 4).mean(-1)

    h = lax.conv_general_dilated(h, p["w3"], (1, 1), [(0, 0), (12, 12)],
                                 dimension_numbers=dn)
    h = bn(h, p["bn3_g"], p["bn3_b"], p["bn3_m"], p["bn3_v"])
    h = jax.nn.elu(h)
    W2 = h.shape[-1]
    T8 = (W2 - 8) // 8 + 1
    h = h[..., :T8 * 8].reshape(B, C, H, T8, 8).mean(-1)

    flat = h.reshape(B, -1)
    return flat @ p["wfc"].T + p["bfc"]


def init_params(key):
    ks = jax.random.split(key, 20)
    n = jax.random.normal
    u = jax.random.uniform
    p = {}
    p["w1"] = n(ks[0], (16, 1, 1, 61), jnp.float32) / jnp.sqrt(61.0)
    p["bn1_g"] = 1.0 + 0.1 * n(ks[1], (16,), jnp.float32)
    p["bn1_b"] = 0.1 * n(ks[2], (16,), jnp.float32)
    p["bn1_m"] = 0.1 * n(ks[3], (16,), jnp.float32)
    p["bn1_v"] = 0.5 + u(ks[4], (16,), jnp.float32)

    p["w2"] = n(ks[5], (32, 1, 2, 1), jnp.float32) / jnp.sqrt(2.0)
    p["bn2_g"] = 1.0 + 0.1 * n(ks[6], (32,), jnp.float32)
    p["bn2_b"] = 0.1 * n(ks[7], (32,), jnp.float32)
    p["bn2_m"] = 0.1 * n(ks[8], (32,), jnp.float32)
    p["bn2_v"] = 0.5 + u(ks[9], (32,), jnp.float32)

    p["w3"] = n(ks[10], (32, 32, 1, 25), jnp.float32) / jnp.sqrt(32.0 * 25.0)
    p["bn3_g"] = 1.0 + 0.1 * n(ks[11], (32,), jnp.float32)
    p["bn3_b"] = 0.1 * n(ks[12], (32,), jnp.float32)
    p["bn3_m"] = 0.1 * n(ks[13], (32,), jnp.float32)
    p["bn3_v"] = 0.5 + u(ks[14], (32,), jnp.float32)

    p["wfc"] = n(ks[15], (2, 32 * 23), jnp.float32) / jnp.sqrt(32.0 * 23.0)
    p["bfc"] = 0.1 * n(ks[16], (2,), jnp.float32)
    return p


if __name__ == "__main__":
    key = jax.random.PRNGKey(0)
    pkey, xkey = jax.random.split(key)
    params = init_params(pkey)

    B, T = 2, 750   # T=750 is required so that 32*((T//4)//8) == 736 features
    x = jax.random.normal(xkey, (B, 1, 2, T), jnp.float32)

    out = jax.jit(eegnet_forward_pallas)(x, params)
    out = jax.block_until_ready(out)

    ref = eegnet_forward_ref(x, params)
    assert out.shape == (B, 2)
    assert bool(jnp.all(jnp.isfinite(out)))
    assert bool(jnp.allclose(out, ref, rtol=5e-2, atol=5e-2)), (out, ref)
    print("KERNEL_OK")
</pallas_src>

<mosaic_0001>
module attributes {stable_mosaic.version = 11 : i64} {
  func.func @eegnet_kernel(%arg0: i32, %arg1: memref<1x128x768xbf16, #tpu.memory_space<vmem>>, %arg2: memref<32x128xbf16, #tpu.memory_space<vmem>>, %arg3: memref<32x1xf32, #tpu.memory_space<vmem>>, %arg4: memref<768x384xbf16, #tpu.memory_space<vmem>>, %arg5: memref<32x800xbf16, #tpu.memory_space<vmem>>, %arg6: memref<32x1xf32, #tpu.memory_space<vmem>>, %arg7: memref<256x23xbf16, #tpu.memory_space<vmem>>, %arg8: memref<2x32x23xf32, #tpu.memory_space<vmem>>, %arg9: memref<2x1xf32, #tpu.memory_space<vmem>>, %arg10: memref<1x2x1xf32, #tpu.memory_space<vmem>>, %arg11: memref<800x256xbf16, #tpu.memory_space<vmem>>) attributes {dimension_semantics = [#tpu.dimension_semantics<parallel>], iteration_bounds = array<i64: 2>, scalar_prefetch = 0 : i64, scratch_operands = 1 : i64, tpu.core_type = #tpu.core_type<tc>, window_params = [{transform_indices = @transform_0, window_bounds = array<i64: 1, 128, 768>}, {pipeline_mode = #tpu.pipeline_mode<synchronous>, transform_indices = @transform_1, window_bounds = array<i64: 32, 128>}, {pipeline_mode = #tpu.pipeline_mode<synchronous>, transform_indices = @transform_2, window_bounds = array<i64: 32, 1>}, {pipeline_mode = #tpu.pipeline_mode<synchronous>, transform_indices = @transform_3, window_bounds = array<i64: 768, 384>}, {pipeline_mode = #tpu.pipeline_mode<synchronous>, transform_indices = @transform_4, window_bounds = array<i64: 32, 800>}, {pipeline_mode = #tpu.pipeline_mode<synchronous>, transform_indices = @transform_5, window_bounds = array<i64: 32, 1>}, {pipeline_mode = #tpu.pipeline_mode<synchronous>, transform_indices = @transform_6, window_bounds = array<i64: 256, 23>}, {pipeline_mode = #tpu.pipeline_mode<synchronous>, transform_indices = @transform_7, window_bounds = array<i64: 2, 32, 23>}, {pipeline_mode = #tpu.pipeline_mode<synchronous>, transform_indices = @transform_8, window_bounds = array<i64: 2, 1>}, {transform_indices = @transform_9, window_bounds = array<i64: 1, 2, 1>}]} {
    %c0 = arith.constant 0 : index
    %c0_0 = arith.constant 0 : index
    %0 = vector.load %arg2[%c0, %c0_0] : memref<32x128xbf16, #tpu.memory_space<vmem>>, vector<32x128xbf16>
    %c0_1 = arith.constant 0 : index
    %c0_2 = arith.constant 0 : index
    %c0_3 = arith.constant 0 : index
    %1 = vector.load %arg1[%c0_1, %c0_2, %c0_3] : memref<1x128x768xbf16, #tpu.memory_space<vmem>>, vector<1x128x768xbf16>
    %2 = vector.shape_cast %1 : vector<1x128x768xbf16> to vector<128x768xbf16>
    %cst = arith.constant dense<0.000000e+00> : vector<32x768xf32>
    %3 = tpu.matmul %0, %2, %cst {dimension_numbers = #tpu.dot_dimension_numbers<[1], [0], [0], [1], [0, 0, 1, 1], [], []>} : vector<32x128xbf16>, vector<128x768xbf16>, vector<32x768xf32> -> vector<32x768xf32>
    %c0_4 = arith.constant 0 : index
    %c0_5 = arith.constant 0 : index
    %4 = vector.load %arg3[%c0_4, %c0_5] : memref<32x1xf32, #tpu.memory_space<vmem>>, vector<32x1xf32>
    %5 = vector.broadcast %4 : vector<32x1xf32> to vector<32x768xf32>
    %6 = arith.addf %3, %5 : vector<32x768xf32>
    %cst_6 = arith.constant 0.000000e+00 : f32
    %7 = vector.broadcast %cst_6 : f32 to vector<32x768xf32>
    %8 = arith.cmpf ogt, %6, %7 : vector<32x768xf32>
    %cst_7 = arith.constant 0.000000e+00 : f32
    %9 = vector.broadcast %cst_7 : f32 to vector<32x768xf32>
    %10 = arith.minimumf %6, %9 : vector<32x768xf32>
    %11 = math.exp %10 : vector<32x768xf32>
    %cst_8 = arith.constant 1.000000e+00 : f32
    %12 = vector.broadcast %cst_8 : f32 to vector<32x768xf32>
    %13 = arith.subf %11, %12 : vector<32x768xf32>
    %14 = arith.select %8, %6, %13 : vector<32x768xi1>, vector<32x768xf32>
    %15 = arith.truncf %14 : vector<32x768xf32> to vector<32x768xbf16>
    %c0_9 = arith.constant 0 : index
    %c0_10 = arith.constant 0 : index
    %16 = vector.load %arg4[%c0_9, %c0_10] : memref<768x384xbf16, #tpu.memory_space<vmem>>, vector<768x384xbf16>
    %cst_11 = arith.constant dense<0.000000e+00> : vector<32x384xf32>
    %17 = tpu.matmul %15, %16, %cst_11 {dimension_numbers = #tpu.dot_dimension_numbers<[1], [0], [0], [1], [0, 0, 1, 1], [], []>} : vector<32x768xbf16>, vector<768x384xbf16>, vector<32x384xf32> -> vector<32x384xf32>
    %18 = arith.truncf %17 : vector<32x384xf32> to vector<32x384xbf16>
    %19 = vector.extract_strided_slice %18 {offsets = [0, 0], sizes = [32, 256], strides = [1, 1]} : vector<32x384xbf16> to vector<32x256xbf16>
    %c0_12 = arith.constant 0 : index
    %c0_13 = arith.constant 0 : index
    %20 = vector.load %arg11[%c0_12, %c0_13] : memref<800x256xbf16, #tpu.memory_space<vmem>>, vector<32x256xbf16>
    tpu.vector_store %arg11[%c0_12, %c0_13], %19 {strides = array<i32>} : memref<800x256xbf16, #tpu.memory_space<vmem>>, vector<32x256xbf16>,
    %21 = vector.extract_strided_slice %18 {offsets = [0, 1], sizes = [32, 256], strides = [1, 1]} : vector<32x384xbf16> to vector<32x256xbf16>
    %c32 = arith.constant 32 : index
    %c0_14 = arith.constant 0 : index
    %22 = vector.load %arg11[%c32, %c0_14] : memref<800x256xbf16, #tpu.memory_space<vmem>>, vector<32x256xbf16>
    tpu.vector_store %arg11[%c32, %c0_14], %21 {strides = array<i32>} : memref<800x256xbf16, #tpu.memory_space<vmem>>, vector<32x256xbf16>,
    %23 = vector.extract_strided_slice %18 {offsets = [0, 2], sizes = [32, 256], strides = [1, 1]} : vector<32x384xbf16> to vector<32x256xbf16>
    %c64 = arith.constant 64 : index
    %c0_15 = arith.constant 0 : index
    %24 = vector.load %arg11[%c64, %c0_15] : memref<800x256xbf16, #tpu.memory_space<vmem>>, vector<32x256xbf16>
    tpu.vector_store %arg11[%c64, %c0_15], %23 {strides = array<i32>} : memref<800x256xbf16, #tpu.memory_space<vmem>>, vector<32x256xbf16>,
    %25 = vector.extract_strided_slice %18 {offsets = [0, 3], sizes = [32, 256], strides = [1, 1]} : vector<32x384xbf16> to vector<32x256xbf16>
    %c96 = arith.constant 96 : index
    %c0_16 = arith.constant 0 : index
    %26 = vector.load %arg11[%c96, %c0_16] : memref<800x256xbf16, #tpu.memory_space<vmem>>, vector<32x256xbf16>
    tpu.vector_store %arg11[%c96, %c0_16], %25 {strides = array<i32>} : memref<800x256xbf16, #tpu.memory_space<vmem>>, vector<32x256xbf16>,
    %27 = vector.extract_strided_slice %18 {offsets = [0, 4], sizes = [32, 256], strides = [1, 1]} : vector<32x384xbf16> to vector<32x256xbf16>
    %c128 = arith.constant 128 : index
    %c0_17 = arith.constant 0 : index
    %28 = vector.load %arg11[%c128, %c0_17] : memref<800x256xbf16, #tpu.memory_space<vmem>>, vector<32x256xbf16>
    tpu.vector_store %arg11[%c128, %c0_17], %27 {strides = array<i32>} : memref<800x256xbf16, #tpu.memory_space<vmem>>, vector<32x256xbf16>,
    %29 = vector.extract_strided_slice %18 {offsets = [0, 5], sizes = [32, 256], strides = [1, 1]} : vector<32x384xbf16> to vector<32x256xbf16>
    %c160 = arith.constant 160 : index
    %c0_18 = arith.constant 0 : index
    %30 = vector.load %arg11[%c160, %c0_18] : memref<800x256xbf16, #tpu.memory_space<vmem>>, vector<32x256xbf16>
    tpu.vector_store %arg11[%c160, %c0_18], %29 {strides = array<i32>} : memref<800x256xbf16, #tpu.memory_space<vmem>>, vector<32x256xbf16>,
    %31 = vector.extract_strided_slice %18 {offsets = [0, 6], sizes = [32, 256], strides = [1, 1]} : vector<32x384xbf16> to vector<32x256xbf16>
    %c192 = arith.constant 192 : index
    %c0_19 = arith.constant 0 : index
    %32 = vector.load %arg11[%c192, %c0_19] : memref<800x256xbf16, #tpu.memory_space<vmem>>, vector<32x256xbf16>
    tpu.vector_store %arg11[%c192, %c0_19], %31 {strides = array<i32>} : memref<800x256xbf16, #tpu.memory_space<vmem>>, vector<32x256xbf16>,
    %33 = vector.extract_strided_slice %18 {offsets = [0, 7], sizes = [32, 256], strides = [1, 1]} : vector<32x384xbf16> to vector<32x256xbf16>
    %c224 = arith.constant 224 : index
    %c0_20 = arith.constant 0 : index
    %34 = vector.load %arg11[%c224, %c0_20] : memref<800x256xbf16, #tpu.memory_space<vmem>>, vector<32x256xbf16>
    tpu.vector_store %arg11[%c224, %c0_20], %33 {strides = array<i32>} : memref<800x256xbf16, #tpu.memory_space<vmem>>, vector<32x256xbf16>,
    %35 = vector.extract_strided_slice %18 {offsets = [0, 8], sizes = [32, 256], strides = [1, 1]} : vector<32x384xbf16> to vector<32x256xbf16>
    %c256 = arith.constant 256 : index
    %c0_21 = arith.constant 0 : index
    %36 = vector.load %arg11[%c256, %c0_21] : memref<800x256xbf16, #tpu.memory_space<vmem>>, vector<32x256xbf16>
    tpu.vector_store %arg11[%c256, %c0_21], %35 {strides = array<i32>} : memref<800x256xbf16, #tpu.memory_space<vmem>>, vector<32x256xbf16>,
    %37 = vector.extract_strided_slice %18 {offsets = [0, 9], sizes = [32, 256], strides = [1, 1]} : vector<32x384xbf16> to vector<32x256xbf16>
    %c288 = arith.constant 288 : index
    %c0_22 = arith.constant 0 : index
    %38 = vector.load %arg11[%c288, %c0_22] : memref<800x256xbf16, #tpu.memory_space<vmem>>, vector<32x256xbf16>
    tpu.vector_store %arg11[%c288, %c0_22], %37 {strides = array<i32>} : memref<800x256xbf16, #tpu.memory_space<vmem>>, vector<32x256xbf16>,
    %39 = vector.extract_strided_slice %18 {offsets = [0, 10], sizes = [32, 256], strides = [1, 1]} : vector<32x384xbf16> to vector<32x256xbf16>
    %c320 = arith.constant 320 : index
    %c0_23 = arith.constant 0 : index
    %40 = vector.load %arg11[%c320, %c0_23] : memref<800x256xbf16, #tpu.memory_space<vmem>>, vector<32x256xbf16>
    tpu.vector_store %arg11[%c320, %c0_23], %39 {strides = array<i32>} : memref<800x256xbf16, #tpu.memory_space<vmem>>, vector<32x256xbf16>,
    %41 = vector.extract_strided_slice %18 {offsets = [0, 11], sizes = [32, 256], strides = [1, 1]} : vector<32x384xbf16> to vector<32x256xbf16>
    %c352 = arith.constant 352 : index
    %c0_24 = arith.constant 0 : index
    %42 = vector.load %arg11[%c352, %c0_24] : memref<800x256xbf16, #tpu.memory_space<vmem>>, vector<32x256xbf16>
    tpu.vector_store %arg11[%c352, %c0_24], %41 {strides = array<i32>} : memref<800x256xbf16, #tpu.memory_space<vmem>>, vector<32x256xbf16>,
    %43 = vector.extract_strided_slice %18 {offsets = [0, 12], sizes = [32, 256], strides = [1, 1]} : vector<32x384xbf16> to vector<32x256xbf16>
    %c384 = arith.constant 384 : index
    %c0_25 = arith.constant 0 : index
    %44 = vector.load %arg11[%c384, %c0_25] : memref<800x256xbf16, #tpu.memory_space<vmem>>, vector<32x256xbf16>
    tpu.vector_store %arg11[%c384, %c0_25], %43 {strides = array<i32>} : memref<800x256xbf16, #tpu.memory_space<vmem>>, vector<32x256xbf16>,
    %45 = vector.extract_strided_slice %18 {offsets = [0, 13], sizes = [32, 256], strides = [1, 1]} : vector<32x384xbf16> to vector<32x256xbf16>
    %c416 = arith.constant 416 : index
    %c0_26 = arith.constant 0 : index
    %46 = vector.load %arg11[%c416, %c0_26] : memref<800x256xbf16, #tpu.memory_space<vmem>>, vector<32x256xbf16>
    tpu.vector_store %arg11[%c416, %c0_26], %45 {strides = array<i32>} : memref<800x256xbf16, #tpu.memory_space<vmem>>, vector<32x256xbf16>,
    %47 = vector.extract_strided_slice %18 {offsets = [0, 14], sizes = [32, 256], strides = [1, 1]} : vector<32x384xbf16> to vector<32x256xbf16>
    %c448 = arith.constant 448 : index
    %c0_27 = arith.constant 0 : index
    %48 = vector.load %arg11[%c448, %c0_27] : memref<800x256xbf16, #tpu.memory_space<vmem>>, vector<32x256xbf16>
    tpu.vector_store %arg11[%c448, %c0_27], %47 {strides = array<i32>} : memref<800x256xbf16, #tpu.memory_space<vmem>>, vector<32x256xbf16>,
    %49 = vector.extract_strided_slice %18 {offsets = [0, 15], sizes = [32, 256], strides = [1, 1]} : vector<32x384xbf16> to vector<32x256xbf16>
    %c480 = arith.constant 480 : index
    %c0_28 = arith.constant 0 : index
    %50 = vector.load %arg11[%c480, %c0_28] : memref<800x256xbf16, #tpu.memory_space<vmem>>, vector<32x256xbf16>
    tpu.vector_store %arg11[%c480, %c0_28], %49 {strides = array<i32>} : memref<800x256xbf16, #tpu.memory_space<vmem>>, vector<32x256xbf16>,
    %51 = vector.extract_strided_slice %18 {offsets = [0, 16], sizes = [32, 256], strides = [1, 1]} : vector<32x384xbf16> to vector<32x256xbf16>
    %c512 = arith.constant 512 : index
    %c0_29 = arith.constant 0 : index
    %52 = vector.load %arg11[%c512, %c0_29] : memref<800x256xbf16, #tpu.memory_space<vmem>>, vector<32x256xbf16>
    tpu.vector_store %arg11[%c512, %c0_29], %51 {strides = array<i32>} : memref<800x256xbf16, #tpu.memory_space<vmem>>, vector<32x256xbf16>,
    %53 = vector.extract_strided_slice %18 {offsets = [0, 17], sizes = [32, 256], strides = [1, 1]} : vector<32x384xbf16> to vector<32x256xbf16>
    %c544 = arith.constant 544 : index
    %c0_30 = arith.constant 0 : index
    %54 = vector.load %arg11[%c544, %c0_30] : memref<800x256xbf16, #tpu.memory_space<vmem>>, vector<32x256xbf16>
    tpu.vector_store %arg11[%c544, %c0_30], %53 {strides = array<i32>} : memref<800x256xbf16, #tpu.memory_space<vmem>>, vector<32x256xbf16>,
    %55 = vector.extract_strided_slice %18 {offsets = [0, 18], sizes = [32, 256], strides = [1, 1]} : vector<32x384xbf16> to vector<32x256xbf16>
    %c576 = arith.constant 576 : index
    %c0_31 = arith.constant 0 : index
    %56 = vector.load %arg11[%c576, %c0_31] : memref<800x256xbf16, #tpu.memory_space<vmem>>, vector<32x256xbf16>
    tpu.vector_store %arg11[%c576, %c0_31], %55 {strides = array<i32>} : memref<800x256xbf16, #tpu.memory_space<vmem>>, vector<32x256xbf16>,
    %57 = vector.extract_strided_slice %18 {offsets = [0, 19], sizes = [32, 256], strides = [1, 1]} : vector<32x384xbf16> to vector<32x256xbf16>
    %c608 = arith.constant 608 : index
    %c0_32 = arith.constant 0 : index
    %58 = vector.load %arg11[%c608, %c0_32] : memref<800x256xbf16, #tpu.memory_space<vmem>>, vector<32x256xbf16>
    tpu.vector_store %arg11[%c608, %c0_32], %57 {strides = array<i32>} : memref<800x256xbf16, #tpu.memory_space<vmem>>, vector<32x256xbf16>,
    %59 = vector.extract_strided_slice %18 {offsets = [0, 20], sizes = [32, 256], strides = [1, 1]} : vector<32x384xbf16> to vector<32x256xbf16>
    %c640 = arith.constant 640 : index
    %c0_33 = arith.constant 0 : index
    %60 = vector.load %arg11[%c640, %c0_33] : memref<800x256xbf16, #tpu.memory_space<vmem>>, vector<32x256xbf16>
    tpu.vector_store %arg11[%c640, %c0_33], %59 {strides = array<i32>} : memref<800x256xbf16, #tpu.memory_space<vmem>>, vector<32x256xbf16>,
    %61 = vector.extract_strided_slice %18 {offsets = [0, 21], sizes = [32, 256], strides = [1, 1]} : vector<32x384xbf16> to vector<32x256xbf16>
    %c672 = arith.constant 672 : index
    %c0_34 = arith.constant 0 : index
    %62 = vector.load %arg11[%c672, %c0_34] : memref<800x256xbf16, #tpu.memory_space<vmem>>, vector<32x256xbf16>
    tpu.vector_store %arg11[%c672, %c0_34], %61 {strides = array<i32>} : memref<800x256xbf16, #tpu.memory_space<vmem>>, vector<32x256xbf16>,
    %63 = vector.extract_strided_slice %18 {offsets = [0, 22], sizes = [32, 256], strides = [1, 1]} : vector<32x384xbf16> to vector<32x256xbf16>
    %c704 = arith.constant 704 : index
    %c0_35 = arith.constant 0 : index
    %64 = vector.load %arg11[%c704, %c0_35] : memref<800x256xbf16, #tpu.memory_space<vmem>>, vector<32x256xbf16>
    tpu.vector_store %arg11[%c704, %c0_35], %63 {strides = array<i32>} : memref<800x256xbf16, #tpu.memory_space<vmem>>, vector<32x256xbf16>,
    %65 = vector.extract_strided_slice %18 {offsets = [0, 23], sizes = [32, 256], strides = [1, 1]} : vector<32x384xbf16> to vector<32x256xbf16>
    %c736 = arith.constant 736 : index
    %c0_36 = arith.constant 0 : index
    %66 = vector.load %arg11[%c736, %c0_36] : memref<800x256xbf16, #tpu.memory_space<vmem>>, vector<32x256xbf16>
    tpu.vector_store %arg11[%c736, %c0_36], %65 {strides = array<i32>} : memref<800x256xbf16, #tpu.memory_space<vmem>>, vector<32x256xbf16>,
    %67 = vector.extract_strided_slice %18 {offsets = [0, 24], sizes = [32, 256], strides = [1, 1]} : vector<32x384xbf16> to vector<32x256xbf16>
    %c768 = arith.constant 768 : index
    %c0_37 = arith.constant 0 : index
    %68 = vector.load %arg11[%c768, %c0_37] : memref<800x256xbf16, #tpu.memory_space<vmem>>, vector<32x256xbf16>
    tpu.vector_store %arg11[%c768, %c0_37], %67 {strides = array<i32>} : memref<800x256xbf16, #tpu.memory_space<vmem>>, vector<32x256xbf16>,
    %c0_38 = arith.constant 0 : index
    %c0_39 = arith.constant 0 : index
    %69 = vector.load %arg5[%c0_38, %c0_39] : memref<32x800xbf16, #tpu.memory_space<vmem>>, vector<32x800xbf16>
    %c0_40 = arith.constant 0 : index
    %c0_41 = arith.constant 0 : index
    %70 = vector.load %arg11[%c0_40, %c0_41] : memref<800x256xbf16, #tpu.memory_space<vmem>>, vector<800x256xbf16>
    %cst_42 = arith.constant dense<0.000000e+00> : vector<32x256xf32>
    %71 = tpu.matmul %69, %70, %cst_42 {dimension_numbers = #tpu.dot_dimension_numbers<[1], [0], [0], [1], [0, 0, 1, 1], [], []>} : vector<32x800xbf16>, vector<800x256xbf16>, vector<32x256xf32> -> vector<32x256xf32>
    %c0_43 = arith.constant 0 : index
    %c0_44 = arith.constant 0 : index
    %72 = vector.load %arg6[%c0_43, %c0_44] : memref<32x1xf32, #tpu.memory_space<vmem>>, vector<32x1xf32>
    %73 = vector.broadcast %72 : vector<32x1xf32> to vector<32x256xf32>
    %74 = arith.addf %71, %73 : vector<32x256xf32>
    %cst_45 = arith.constant 0.000000e+00 : f32
    %75 = vector.broadcast %cst_45 : f32 to vector<32x256xf32>
    %76 = arith.cmpf ogt, %74, %75 : vector<32x256xf32>
    %cst_46 = arith.constant 0.000000e+00 : f32
    %77 = vector.broadcast %cst_46 : f32 to vector<32x256xf32>
    %78 = arith.minimumf %74, %77 : vector<32x256xf32>
    %79 = math.exp %78 : vector<32x256xf32>
    %cst_47 = arith.constant 1.000000e+00 : f32
    %80 = vector.broadcast %cst_47 : f32 to vector<32x256xf32>
    %81 = arith.subf %79, %80 : vector<32x256xf32>
    %82 = arith.select %76, %74, %81 : vector<32x256xi1>, vector<32x256xf32>
    %83 = arith.truncf %82 : vector<32x256xf32> to vector<32x256xbf16>
    %c0_48 = arith.constant 0 : index
    %c0_49 = arith.constant 0 : index
    %84 = vector.load %arg7[%c0_48, %c0_49] : memref<256x23xbf16, #tpu.memory_space<vmem>>, vector<256x23xbf16>
    %cst_50 = arith.constant dense<0.000000e+00> : vector<32x23xf32>
    %85 = tpu.matmul %83, %84, %cst_50 {dimension_numbers = #tpu.dot_dimension_numbers<[1], [0], [0], [1], [0, 0, 1, 1], [], []>} : vector<32x256xbf16>, vector<256x23xbf16>, vector<32x23xf32> -> vector<32x23xf32>
    %c0_51 = arith.constant 0 : index
    %c0_52 = arith.constant 0 : index
    %c0_53 = arith.constant 0 : index
    %86 = vector.load %arg8[%c0_51, %c0_52, %c0_53] : memref<2x32x23xf32, #tpu.memory_space<vmem>>, vector<2x32x23xf32>
    %87 = vector.shape_cast %85 : vector<32x23xf32> to vector<1x32x23xf32>
    %88 = vector.broadcast %87 : vector<1x32x23xf32> to vector<2x32x23xf32>
    %89 = arith.mulf %86, %88 : vector<2x32x23xf32>
    %cst_54 = arith.constant dense<0.000000e+00> : vector<2x32xf32>
    %90 = vector.multi_reduction <add>, %89, %cst_54 [2] : vector<2x32x23xf32> to vector<2x32xf32>
    %cst_55 = arith.constant dense<0.000000e+00> : vector<2xf32>
    %91 = vector.multi_reduction <add>, %90, %cst_55 [1] : vector<2x32xf32> to vector<2xf32>
    %92 = vector.shape_cast %91 : vector<2xf32> to vector<2x1xf32>
    %c0_56 = arith.constant 0 : index
    %c0_57 = arith.constant 0 : index
    %93 = vector.load %arg9[%c0_56, %c0_57] : memref<2x1xf32, #tpu.memory_space<vmem>>, vector<2x1xf32>
    %94 = arith.addf %92, %93 : vector<2x1xf32>
    %c0_58 = arith.constant 0 : index
    %c0_59 = arith.constant 0 : index
    %c0_60 = arith.constant 0 : index
    %95 = vector.load %arg10[%c0_58, %c0_59, %c0_60] : memref<1x2x1xf32, #tpu.memory_space<vmem>>, vector<1x2x1xf32>
    %96 = vector.shape_cast %95 : vector<1x2x1xf32> to vector<2x1xf32>
    %97 = vector.shape_cast %94 : vector<2x1xf32> to vector<1x2x1xf32>
    tpu.vector_store %arg10[%c0_58, %c0_59, %c0_60], %97 {strides = array<i32>} : memref<1x2x1xf32, #tpu.memory_space<vmem>>, vector<1x2x1xf32>,
    return
  }
  func.func @transform_0(%arg0: i32) -> (i32, i32, i32) {
    %c0_i32 = arith.constant 0 : i32
    %c0_i32_0 = arith.constant 0 : i32
    %c0_i32_1 = arith.constant 0 : i32
    return %arg0, %c0_i32, %c0_i32_0 : i32, i32, i32
  }
  func.func @transform_1(%arg0: i32) -> (i32, i32) {
    %c0_i32 = arith.constant 0 : i32
    %c0_i32_0 = arith.constant 0 : i32
    %c0_i32_1 = arith.constant 0 : i32
    return %c0_i32, %c0_i32_0 : i32, i32
  }
  func.func @transform_2(%arg0: i32) -> (i32, i32) {
    %c0_i32 = arith.constant 0 : i32
    %c0_i32_0 = arith.constant 0 : i32
    %c0_i32_1 = arith.constant 0 : i32
    return %c0_i32, %c0_i32_0 : i32, i32
  }
  func.func @transform_3(%arg0: i32) -> (i32, i32) {
    %c0_i32 = arith.constant 0 : i32
    %c0_i32_0 = arith.constant 0 : i32
    %c0_i32_1 = arith.constant 0 : i32
    return %c0_i32, %c0_i32_0 : i32, i32
  }
  func.func @transform_4(%arg0: i32) -> (i32, i32) {
    %c0_i32 = arith.constant 0 : i32
    %c0_i32_0 = arith.constant 0 : i32
    %c0_i32_1 = arith.constant 0 : i32
    return %c0_i32, %c0_i32_0 : i32, i32
  }
  func.func @transform_5(%arg0: i32) -> (i32, i32) {
    %c0_i32 = arith.constant 0 : i32
    %c0_i32_0 = arith.constant 0 : i32
    %c0_i32_1 = arith.constant 0 : i32
    return %c0_i32, %c0_i32_0 : i32, i32
  }
  func.func @transform_6(%arg0: i32) -> (i32, i32) {
    %c0_i32 = arith.constant 0 : i32
    %c0_i32_0 = arith.constant 0 : i32
    %c0_i32_1 = arith.constant 0 : i32
    return %c0_i32, %c0_i32_0 : i32, i32
  }
  func.func @transform_7(%arg0: i32) -> (i32, i32, i32) {
    %c0_i32 = arith.constant 0 : i32
    %c0_i32_0 = arith.constant 0 : i32
    %c0_i32_1 = arith.constant 0 : i32
    %c0_i32_2 = arith.constant 0 : i32
    return %c0_i32, %c0_i32_0, %c0_i32_1 : i32, i32, i32
  }
  func.func @transform_8(%arg0: i32) -> (i32, i32) {
    %c0_i32 = arith.constant 0 : i32
    %c0_i32_0 = arith.constant 0 : i32
    %c0_i32_1 = arith.constant 0 : i32
    return %c0_i32, %c0_i32_0 : i32, i32
  }
  func.func @transform_9(%arg0: i32) -> (i32, i32, i32) {
    %c0_i32 = arith.constant 0 : i32
    %c0_i32_0 = arith.constant 0 : i32
    %c0_i32_1 = arith.constant 0 : i32
    return %arg0, %c0_i32, %c0_i32_0 : i32, i32, i32
  }
}

</mosaic_0001>

<llo_original>
// kernel: eegnet_forward_pallas.1
$region0: #{eegnet_forward_pallas.1}
  #allocation0 [shape = 'u32[]', space=smem, size = 0x4, offset = 0x4, fixed_abs, tag = 'smem constant byte address 0x4 - core index']
  #allocation1 [shape = 'u32[72,128]{1,0:T(1,128)}', space=vmem, size = 0x9000, scoped, tag = 'internal scratch']
  #allocation2 [shape = 'bf16[800,256]{1,0:T(8,128)(2,1)}', space=vmem, size = 0x64000, scoped, tag = 'scratch operand']
  %s0 = inlined_call_operand.vmem [shape: bf16[2,128,768], index: 0, kind: input, shape index: {}]
  %s1 = inlined_call_operand.vmem [shape: bf16[32,128], index: 1, kind: input, shape index: {}]
  %s2 = inlined_call_operand.vmem [shape: f32[32,1], index: 2, kind: input, shape index: {}]
  %s3 = inlined_call_operand.vmem [shape: bf16[768,384], index: 3, kind: input, shape index: {}]
  %s4 = inlined_call_operand.vmem [shape: bf16[32,800], index: 4, kind: input, shape index: {}]
  %s5 = inlined_call_operand.vmem [shape: f32[32,1], index: 5, kind: input, shape index: {}]
  %s6 = inlined_call_operand.vmem [shape: bf16[256,23], index: 6, kind: input, shape index: {}]
  %s7 = inlined_call_operand.vmem [shape: f32[2,32,23], index: 7, kind: input, shape index: {}]
  %s8 = inlined_call_operand.vmem [shape: f32[2,1], index: 8, kind: input, shape index: {}]
  %s9 = inlined_call_operand.vmem [shape: f32[2,2,1], index: 9, kind: output, shape index: {}]
  %s10 = sld [smem:[#allocation0]]
  $region69: #{eegnet_forward_pallas.1} parent=0
    _
  %s12 = ssub.s32 1, %s10
  %s13 = scalar_select 0, %s12, %s10
  loop: start=0, step=1, limit=4
  $region2: #{eegnet_forward_pallas.1} parent=0 // loop_pre_header
    _
  $region3: #{eegnet_forward_pallas.1} parent=0 // loop_header
    %s15 = sphi 0, %s19
    %p16 = scmp.ge.s32.totalorder %s15, 4
    %s25 = sphi 0, %s27
    %s28 = sphi 0, %s25
    %s29 = sphi 0, %s28
    %s45 = sphi 0, %s29
    %s49 = sphi 0, %s49
    %s51 = sphi 0, %s49
    %s52 = sphi 0, %s51
    %s66 = sphi 0, %s52
    %s70 = sphi 0, %s70
    %s72 = sphi 0, %s70
    %s73 = sphi 0, %s72
    %s87 = sphi 0, %s73
    %s91 = sphi 0, %s91
    %s93 = sphi 0, %s91
    %s94 = sphi 0, %s93
    %s108 = sphi 0, %s94
    %s112 = sphi 0, %s112
    %s114 = sphi 0, %s112
    %s115 = sphi 0, %s114
    %s129 = sphi 0, %s115
    %s133 = sphi 0, %s133
    %s135 = sphi 0, %s133
    %s136 = sphi 0, %s135
    %s150 = sphi 0, %s136
    %s154 = sphi 0, %s154
    %s156 = sphi 0, %s154
    %s157 = sphi 0, %s156
    %s171 = sphi 0, %s157
    %s175 = sphi 0, %s175
    %s177 = sphi 0, %s175
    %s178 = sphi 0, %s177
    %s192 = sphi 0, %s178
    %s196 = sphi 0, %s196
    %s198 = sphi 0, %s196
    %s199 = sphi 0, %s198
    %s213 = sphi 0, %s199
    %s219 = sphi 0, %s221
    %s222 = sphi 0, %s219
    %s223 = sphi 0, %s222
    %s239 = sphi 0, %s223
  $region4: #{eegnet_forward_pallas.1} parent=0 // loop_header_branch
    %18 = sbr.rel (%p16) target = $region8
  $region5: #{eegnet_forward_pallas.1} parent=0 // loop_body
    %s20 = ssub.s32 %s15, 1
    %s21 = ssub.s32 %s15, 2
    %s22 = sadd.s32 %s15, 1
    %s23 = ssub.s32 %s15, %s22
    %p24 = scmp.eq.s32.totalorder %s23, 0
    %s26 = sadd.s32 %s25, 1
    %s27 = scalar_select %p24, %s25, %s26
    %p30 = pneg %p24
    %p31 = scmp.eq.s32.totalorder %s15, 1
    %p32 = por %p30, %p31
    %p33 = scmp.ne.s32.totalorder %s25, %s28
    %p34 = scmp.eq.s32.totalorder %s15, 0
    %p35 = por %p33, %p34
    %p36 = scmp.ne.s32.totalorder %s25, %s28
    %p37 = scmp.eq.s32.totalorder %s20, 1
    %p38 = por %p36, %p37
    %p39 = scmp.ne.s32.totalorder %s28, %s29
    %p40 = scmp.eq.s32.totalorder %s20, 0
    %p41 = por %p39, %p40
    %p42 = scmp.ne.s32.totalorder %s28, %s29
    %p43 = scmp.eq.s32.totalorder %s21, 1
    %p44 = por %p42, %p43
    %p46 = scmp.ne.s32.totalorder %s29, %s45
    %p47 = scmp.eq.s32.totalorder %s21, 0
    %p48 = por %p46, %p47
    %s50 = sadd.s32 %s49, 1
    %p53 = scmp.eq.s32.totalorder %s15, 1
    %p54 = scmp.ne.s32.totalorder %s49, %s51
    %p55 = scmp.eq.s32.totalorder %s15, 0
    %p56 = por %p54, %p55
    %p57 = scmp.ne.s32.totalorder %s49, %s51
    %p58 = scmp.eq.s32.totalorder %s20, 1
    %p59 = por %p57, %p58
    %p60 = scmp.ne.s32.totalorder %s51, %s52
    %p61 = scmp.eq.s32.totalorder %s20, 0
    %p62 = por %p60, %p61
    %p63 = scmp.ne.s32.totalorder %s51, %s52
    %p64 = scmp.eq.s32.totalorder %s21, 1
    %p65 = por %p63, %p64
    %p67 = scmp.ne.s32.totalorder %s52, %s66
    %p68 = scmp.eq.s32.totalorder %s21, 0
    %p69 = por %p67, %p68
    %s71 = sadd.s32 %s70, 1
    %p74 = scmp.eq.s32.totalorder %s15, 1
    %p75 = scmp.ne.s32.totalorder %s70, %s72
    %p76 = scmp.eq.s32.totalorder %s15, 0
    %p77 = por %p75, %p76
    %p78 = scmp.ne.s32.totalorder %s70, %s72
    %p79 = scmp.eq.s32.totalorder %s20, 1
    %p80 = por %p78, %p79
    %p81 = scmp.ne.s32.totalorder %s72, %s73
    %p82 = scmp.eq.s32.totalorder %s20, 0
    %p83 = por %p81, %p82
    %p84 = scmp.ne.s32.totalorder %s72, %s73
    %p85 = scmp.eq.s32.totalorder %s21, 1
    %p86 = por %p84, %p85
    %p88 = scmp.ne.s32.totalorder %s73, %s87
    %p89 = scmp.eq.s32.totalorder %s21, 0
    %p90 = por %p88, %p89
    %s92 = sadd.s32 %s91, 1
    %p95 = scmp.eq.s32.totalorder %s15, 1
    %p96 = scmp.ne.s32.totalorder %s91, %s93
    %p97 = scmp.eq.s32.totalorder %s15, 0
    %p98 = por %p96, %p97
    %p99 = scmp.ne.s32.totalorder %s91, %s93
    %p100 = scmp.eq.s32.totalorder %s20, 1
    %p101 = por %p99, %p100
    %p102 = scmp.ne.s32.totalorder %s93, %s94
    %p103 = scmp.eq.s32.totalorder %s20, 0
    %p104 = por %p102, %p103
    %p105 = scmp.ne.s32.totalorder %s93, %s94
    %p106 = scmp.eq.s32.totalorder %s21, 1
    %p107 = por %p105, %p106
    %p109 = scmp.ne.s32.totalorder %s94, %s108
    %p110 = scmp.eq.s32.totalorder %s21, 0
    %p111 = por %p109, %p110
    %s113 = sadd.s32 %s112, 1
    %p116 = scmp.eq.s32.totalorder %s15, 1
    %p117 = scmp.ne.s32.totalorder %s112, %s114
    %p118 = scmp.eq.s32.totalorder %s15, 0
    %p119 = por %p117, %p118
    %p120 = scmp.ne.s32.totalorder %s112, %s114
    %p121 = scmp.eq.s32.totalorder %s20, 1
    %p122 = por %p120, %p121
    %p123 = scmp.ne.s32.totalorder %s114, %s115
    %p124 = scmp.eq.s32.totalorder %s20, 0
    %p125 = por %p123, %p124
    %p126 = scmp.ne.s32.totalorder %s114, %s115
    %p127 = scmp.eq.s32.totalorder %s21, 1
    %p128 = por %p126, %p127
    %p130 = scmp.ne.s32.totalorder %s115, %s129
    %p131 = scmp.eq.s32.totalorder %s21, 0
    %p132 = por %p130, %p131
    %s134 = sadd.s32 %s133, 1
    %p137 = scmp.eq.s32.totalorder %s15, 1
    %p138 = scmp.ne.s32.totalorder %s133, %s135
    %p139 = scmp.eq.s32.totalorder %s15, 0
    %p140 = por %p138, %p139
    %p141 = scmp.ne.s32.totalorder %s133, %s135
    %p142 = scmp.eq.s32.totalorder %s20, 1
    %p143 = por %p141, %p142
    %p144 = scmp.ne.s32.totalorder %s135, %s136
    %p145 = scmp.eq.s32.totalorder %s20, 0
    %p146 = por %p144, %p145
    %p147 = scmp.ne.s32.totalorder %s135, %s136
    %p148 = scmp.eq.s32.totalorder %s21, 1
    %p149 = por %p147, %p148
    %p151 = scmp.ne.s32.totalorder %s136, %s150
    %p152 = scmp.eq.s32.totalorder %s21, 0
    %p153 = por %p151, %p152
    %s155 = sadd.s32 %s154, 1
    %p158 = scmp.eq.s32.totalorder %s15, 1
    %p159 = scmp.ne.s32.totalorder %s154, %s156
    %p160 = scmp.eq.s32.totalorder %s15, 0
    %p161 = por %p159, %p160
    %p162 = scmp.ne.s32.totalorder %s154, %s156
    %p163 = scmp.eq.s32.totalorder %s20, 1
    %p164 = por %p162, %p163
    %p165 = scmp.ne.s32.totalorder %s156, %s157
    %p166 = scmp.eq.s32.totalorder %s20, 0
    %p167 = por %p165, %p166
    %p168 = scmp.ne.s32.totalorder %s156, %s157
    %p169 = scmp.eq.s32.totalorder %s21, 1
    %p170 = por %p168, %p169
    %p172 = scmp.ne.s32.totalorder %s157, %s171
    %p173 = scmp.eq.s32.totalorder %s21, 0
    %p174 = por %p172, %p173
    %s176 = sadd.s32 %s175, 1
    %p179 = scmp.eq.s32.totalorder %s15, 1
    %p180 = scmp.ne.s32.totalorder %s175, %s177
    %p181 = scmp.eq.s32.totalorder %s15, 0
    %p182 = por %p180, %p181
    %p183 = scmp.ne.s32.totalorder %s175, %s177
    %p184 = scmp.eq.s32.totalorder %s20, 1
    %p185 = por %p183, %p184
    %p186 = scmp.ne.s32.totalorder %s177, %s178
    %p187 = scmp.eq.s32.totalorder %s20, 0
    %p188 = por %p186, %p187
    %p189 = scmp.ne.s32.totalorder %s177, %s178
    %p190 = scmp.eq.s32.totalorder %s21, 1
    %p191 = por %p189, %p190
    %p193 = scmp.ne.s32.totalorder %s178, %s192
    %p194 = scmp.eq.s32.totalorder %s21, 0
    %p195 = por %p193, %p194
    %s197 = sadd.s32 %s196, 1
    %p200 = scmp.eq.s32.totalorder %s15, 1
    %p201 = scmp.ne.s32.totalorder %s196, %s198
    %p202 = scmp.eq.s32.totalorder %s15, 0
    %p203 = por %p201, %p202
    %p204 = scmp.ne.s32.totalorder %s196, %s198
    %p205 = scmp.eq.s32.totalorder %s20, 1
    %p206 = por %p204, %p205
    %p207 = scmp.ne.s32.totalorder %s198, %s199
    %p208 = scmp.eq.s32.totalorder %s20, 0
    %p209 = por %p207, %p208
    %p210 = scmp.ne.s32.totalorder %s198, %s199
    %p211 = scmp.eq.s32.totalorder %s21, 1
    %p212 = por %p210, %p211
    %p214 = scmp.ne.s32.totalorder %s199, %s213
    %p215 = scmp.eq.s32.totalorder %s21, 0
    %p216 = por %p214, %p215
    %s217 = ssub.s32 %s15, %s22
    %p218 = scmp.eq.s32.totalorder %s217, 0
    %s220 = sadd.s32 %s219, 1
    %s221 = scalar_select %p218, %s219, %s220
    %p224 = pneg %p218
    %p225 = scmp.eq.s32.totalorder %s15, 1
    %p226 = por %p224, %p225
    %p227 = scmp.ne.s32.totalorder %s219, %s222
    %p228 = scmp.eq.s32.totalorder %s15, 0
    %p229 = por %p227, %p228
    %p230 = scmp.ne.s32.totalorder %s219, %s222
    %p231 = scmp.eq.s32.totalorder %s20, 1
    %p232 = por %p230, %p231
    %p233 = scmp.ne.s32.totalorder %s222, %s223
    %p234 = scmp.eq.s32.totalorder %s20, 0
    %p235 = por %p233, %p234
    %p236 = scmp.ne.s32.totalorder %s222, %s223
    %p237 = scmp.eq.s32.totalorder %s21, 1
    %p238 = por %p236, %p237
    %p240 = scmp.ne.s32.totalorder %s223, %s239
    %p241 = scmp.eq.s32.totalorder %s21, 0
    %p242 = por %p240, %p241
    %p243 = scmp.le.s32.totalorder 1, %s15
    %p244 = scmp.lt.s32.totalorder %s15, 3
    %p245 = pnand %p243, %p244
    %p246 = pneg %p245
    // Predicated region
    $region9: #{eegnet_forward_pallas.1} parent=5 // pred_check
      _
    $region10: #{eegnet_forward_pallas.1} parent=5 // pred_check_branch
      %248 = sbr.rel (%p245) target = $region12
    $region11: #{eegnet_forward_pallas.1} parent=5 // pred_region
      %s249 = ssub.s32 %s15, 1
      // Predicated region
      $region13: #{eegnet_forward_pallas.1} parent=11 // pred_check
        %p250 = pneg %p62
      $region14: #{eegnet_forward_pallas.1} parent=11 // pred_check_branch
        %252 = sbr.rel (%p250) target = $region16
      $region15: #{eegnet_forward_pallas.1} parent=11 // pred_region
        _
      $region16: #{eegnet_forward_pallas.1} parent=11 // pred_fallthru
        _
      // Predicated region
      $region17: #{eegnet_forward_pallas.1} parent=11 // pred_check
        %p253 = pneg %p83
      $region18: #{eegnet_forward_pallas.1} parent=11 // pred_check_branch
        %255 = sbr.rel (%p253) target = $region20
      $region19: #{eegnet_forward_pallas.1} parent=11 // pred_region
        _
      $region20: #{eegnet_forward_pallas.1} parent=11 // pred_fallthru
        _
      // Predicated region
      $region21: #{eegnet_forward_pallas.1} parent=11 // pred_check
        %p256 = pneg %p104
      $region22: #{eegnet_forward_pallas.1} parent=11 // pred_check_branch
        %258 = sbr.rel (%p256) target = $region24
      $region23: #{eegnet_forward_pallas.1} parent=11 // pred_region
        _
      $region24: #{eegnet_forward_pallas.1} parent=11 // pred_fallthru
        _
      // Predicated region
      $region25: #{eegnet_forward_pallas.1} parent=11 // pred_check
        %p259 = pneg %p125
      $region26: #{eegnet_forward_pallas.1} parent=11 // pred_check_branch
        %261 = sbr.rel (%p259) target = $region28
      $region27: #{eegnet_forward_pallas.1} parent=11 // pred_region
        _
      $region28: #{eegnet_forward_pallas.1} parent=11 // pred_fallthru
        _
      // Predicated region
      $region29: #{eegnet_forward_pallas.1} parent=11 // pred_check
        %p262 = pneg %p146
      $region30: #{eegnet_forward_pallas.1} parent=11 // pred_check_branch
        %264 = sbr.rel (%p262) target = $region32
      $region31: #{eegnet_forward_pallas.1} parent=11 // pred_region
        _
      $region32: #{eegnet_forward_pallas.1} parent=11 // pred_fallthru
        _
      // Predicated region
      $region33: #{eegnet_forward_pallas.1} parent=11 // pred_check
        %p265 = pneg %p167
      $region34: #{eegnet_forward_pallas.1} parent=11 // pred_check_branch
        %267 = sbr.rel (%p265) target = $region36
      $region35: #{eegnet_forward_pallas.1} parent=11 // pred_region
        _
      $region36: #{eegnet_forward_pallas.1} parent=11 // pred_fallthru
        _
      // Predicated region
      $region37: #{eegnet_forward_pallas.1} parent=11 // pred_check
        %p268 = pneg %p188
      $region38: #{eegnet_forward_pallas.1} parent=11 // pred_check_branch
        %270 = sbr.rel (%p268) target = $region40
      $region39: #{eegnet_forward_pallas.1} parent=11 // pred_region
        _
      $region40: #{eegnet_forward_pallas.1} parent=11 // pred_fallthru
        _
      // Predicated region
      $region41: #{eegnet_forward_pallas.1} parent=11 // pred_check
        %p271 = pneg %p209
      $region42: #{eegnet_forward_pallas.1} parent=11 // pred_check_branch
        %273 = sbr.rel (%p271) target = $region44
      $region43: #{eegnet_forward_pallas.1} parent=11 // pred_region
        _
      $region44: #{eegnet_forward_pallas.1} parent=11 // pred_fallthru
        _
    $region12: #{eegnet_forward_pallas.1} parent=5 // pred_fallthru
      _
    %p274 = scmp.lt.s32.totalorder %s15, 2
    // Predicated region
    $region45: #{eegnet_forward_pallas.1} parent=5 // pred_check
      %p275 = pneg %p274
    $region46: #{eegnet_forward_pallas.1} parent=5 // pred_check_branch
      %277 = sbr.rel (%p275) target = $region48
    $region47: #{eegnet_forward_pallas.1} parent=5 // pred_region
      // Predicated region
      $region49: #{eegnet_forward_pallas.1} parent=47 // pred_check
        %p278 = pneg %p35
      $region50: #{eegnet_forward_pallas.1} parent=47 // pred_check_branch
        %280 = sbr.rel (%p278) target = $region52
      $region51: #{eegnet_forward_pallas.1} parent=47 // pred_region
        %p281 = scmp.lt.s32.totalorder %s15, 1
        %s282 = scalar_select %p281, %s15, 1
        %s283 = smul.addr %s282, 96
        %s284 = smul.addr %s283, 4
        %s285 = scalar_lea.vmem %s0, %s284
      $region52: #{eegnet_forward_pallas.1} parent=47 // pred_fallthru
        _
    $region48: #{eegnet_forward_pallas.1} parent=5 // pred_fallthru
      _
    %p286 = scmp.le.s32.totalorder 1, %s15
    %p287 = scmp.lt.s32.totalorder %s15, 3
    %p288 = pnand %p286, %p287
    %p289 = pneg %p288
    // Predicated region
    $region53: #{eegnet_forward_pallas.1} parent=5 // pred_check
      _
    $region54: #{eegnet_forward_pallas.1} parent=5 // pred_check_branch
      %291 = sbr.rel (%p288) target = $region56
    $region55: #{eegnet_forward_pallas.1} parent=5 // pred_region
      %s292 = ssub.s32 %s15, 1
      %p293 = scmp.lt.s32.totalorder %s20, 1
      %s294 = scalar_select %p293, %s20, 1
      %s295 = smul.addr %s294, 96
      %s296 = smul.addr %s295, 4
      %s297 = scalar_lea.vmem %s0, %s296
      %p298 = pneg %p41
      %p299 = pneg %p38
      %p300 = pneg %p62
      %p301 = pneg %p59
      %p302 = pneg %p83
      %p303 = pneg %p80
      %p304 = pneg %p104
      %p305 = pneg %p101
      %p306 = pneg %p125
      %p307 = pneg %p122
      %p308 = pneg %p146
      %p309 = pneg %p143
      %p310 = pneg %p167
      %p311 = pneg %p164
      %p312 = pneg %p188
      %p313 = pneg %p185
      %p314 = pneg %p209
      %p315 = pneg %p206
      %p316 = pneg %p235
      %p317 = pneg %p232
      %p318 = scmp.lt.s32.totalorder %s20, 1
      %s319 = scalar_select %p318, %s20, 1
      %s320 = smul.addr %s319, 2
      %s321 = scalar_lea.vmem %s9, %s320
      %p322 = scmp.lt.s32.totalorder %s20, 1
      %s323 = scalar_select %p322, %s20, 1
      %s324 = smul.addr %s323, 96
      %s325 = smul.addr %s324, 4
      %s326 = scalar_lea.vmem %s0, %s325
      %p327 = scmp.lt.s32.totalorder %s20, 1
      %s328 = scalar_select %p327, %s20, 1
      %s329 = smul.addr %s328, 2
      %s330 = scalar_lea.vmem %s9, %s329
      %v332 = vld [vmem:[%s1] sm:$0xf]
      %v333 = vld [vmem:[%s1 + $0x4] sm:$0xf]
      %v334 = vld [vmem:[%s1 + $0x8] sm:$0xf]
      %v335 = vld [vmem:[%s1 + $0xc] sm:$0xf]
      %v336 = vld [vmem:[%s326] sm:$0xff]
      %v337 = vld [vmem:[%s326 + $0x8] sm:$0xff]
      %v338 = vld [vmem:[%s326 + $0x10] sm:$0xff]
      %v339 = vld [vmem:[%s326 + $0x18] sm:$0xff]
      %v340 = vld [vmem:[%s326 + $0x20] sm:$0xff]
      %v341 = vld [vmem:[%s326 + $0x28] sm:$0xff]
      %v342 = vld [vmem:[%s326 + $0x30] sm:$0xff]
      %v343 = vld [vmem:[%s326 + $0x38] sm:$0xff]
      %v344 = vld [vmem:[%s326 + $0x40] sm:$0xff]
      %v345 = vld [vmem:[%s326 + $0x48] sm:$0xff]
      %v346 = vld [vmem:[%s326 + $0x50] sm:$0xff]
      %v347 = vld [vmem:[%s326 + $0x58] sm:$0xff]
      %v348 = vld [vmem:[%s326 + $0x60] sm:$0xff]
      %v349 = vld [vmem:[%s326 + $0x68] sm:$0xff]
      %v350 = vld [vmem:[%s326 + $0x70] sm:$0xff]
      %v351 = vld [vmem:[%s326 + $0x78] sm:$0xff]
      %v352 = vld [vmem:[%s326 + $0x80] sm:$0xff]
      %v353 = vld [vmem:[%s326 + $0x88] sm:$0xff]
      %v354 = vld [vmem:[%s326 + $0x90] sm:$0xff]
      %v355 = vld [vmem:[%s326 + $0x98] sm:$0xff]
      %v356 = vld [vmem:[%s326 + $0xa0] sm:$0xff]
      %v357 = vld [vmem:[%s326 + $0xa8] sm:$0xff]
      %v358 = vld [vmem:[%s326 + $0xb0] sm:$0xff]
      %v359 = vld [vmem:[%s326 + $0xb8] sm:$0xff]
      %v360 = vld [vmem:[%s326 + $0xc0] sm:$0xff]
      %v361 = vld [vmem:[%s326 + $0xc8] sm:$0xff]
      %v362 = vld [vmem:[%s326 + $0xd0] sm:$0xff]
      %v363 = vld [vmem:[%s326 + $0xd8] sm:$0xff]
      %v364 = vld [vmem:[%s326 + $0xe0] sm:$0xff]
      %v365 = vld [vmem:[%s326 + $0xe8] sm:$0xff]
      %v366 = vld [vmem:[%s326 + $0xf0] sm:$0xff]
      %v367 = vld [vmem:[%s326 + $0xf8] sm:$0xff]
      %v368 = vld [vmem:[%s326 + $0x100] sm:$0xff]
      %v369 = vld [vmem:[%s326 + $0x108] sm:$0xff]
      %v370 = vld [vmem:[%s326 + $0x110] sm:$0xff]
      %v371 = vld [vmem:[%s326 + $0x118] sm:$0xff]
      %v372 = vld [vmem:[%s326 + $0x120] sm:$0xff]
      %v373 = vld [vmem:[%s326 + $0x128] sm:$0xff]
      %v374 = vld [vmem:[%s326 + $0x130] sm:$0xff]
      %v375 = vld [vmem:[%s326 + $0x138] sm:$0xff]
      %v376 = vld [vmem:[%s326 + $0x140] sm:$0xff]
      %v377 = vld [vmem:[%s326 + $0x148] sm:$0xff]
      %v378 = vld [vmem:[%s326 + $0x150] sm:$0xff]
      %v379 = vld [vmem:[%s326 + $0x158] sm:$0xff]
      %v380 = vld [vmem:[%s326 + $0x160] sm:$0xff]
      %v381 = vld [vmem:[%s326 + $0x168] sm:$0xff]
      %v382 = vld [vmem:[%s326 + $0x170] sm:$0xff]
      %v383 = vld [vmem:[%s326 + $0x178] sm:$0xff]
      %v384 = vld [vmem:[%s2] sm:$0xff]
      %v385 = vld [vmem:[%s2 + $0x8] sm:$0xff]
      %v386 = vld [vmem:[%s2 + $0x10] sm:$0xff]
      %v387 = vld [vmem:[%s2 + $0x18] sm:$0xff]
      %389 = vset.pattern.permute.xlu0 0
      %390 = vperm.xlu0 %389, %v384
      %v391 = vpop.permute.xlu0 %390
      %394 = vset.pattern.permute.xlu0 0
      %395 = vperm.xlu0 %394, %v385
      %v396 = vpop.permute.xlu0 %395
      %399 = vset.pattern.permute.xlu0 0
      %400 = vperm.xlu0 %399, %v386
      %v401 = vpop.permute.xlu0 %400
      %404 = vset.pattern.permute.xlu0 0
      %405 = vperm.xlu0 %404, %v387
      %v406 = vpop.permute.xlu0 %405
      %v412 = vunpack.c.l.b16 %v332
      %v413 = vunpack.c.l.b16 %v333
      %v414 = vunpack.c.l.b16 %v334
      %v415 = vunpack.c.l.b16 %v335
      %v416 = vpack.c.b16 %v413, %v412
      %v417 = vpack.c.b16 %v415, %v414
      %v468 = vunpack.c.l.b16 %v336
      %v469 = vunpack.c.h.b16 %v336
      %v470 = vunpack.c.l.b16 %v337
      %v471 = vunpack.c.h.b16 %v337
      %v472 = vunpack.c.l.b16 %v338
      %v473 = vunpack.c.h.b16 %v338
      %v474 = vunpack.c.l.b16 %v339
      %v475 = vunpack.c.h.b16 %v339
      %v476 = vunpack.c.l.b16 %v340
      %v477 = vunpack.c.h.b16 %v340
      %v478 = vunpack.c.l.b16 %v341
      %v479 = vunpack.c.h.b16 %v341
      %v480 = vunpack.c.l.b16 %v342
      %v481 = vunpack.c.h.b16 %v342
      %v482 = vunpack.c.l.b16 %v343
      %v483 = vunpack.c.h.b16 %v343
      %v484 = vunpack.c.l.b16 %v344
      %v485 = vunpack.c.h.b16 %v344
      %v486 = vunpack.c.l.b16 %v345
      %v487 = vunpack.c.h.b16 %v345
      %v488 = vunpack.c.l.b16 %v346
      %v489 = vunpack.c.h.b16 %v346
      %v490 = vunpack.c.l.b16 %v347
      %v491 = vunpack.c.h.b16 %v347
      %v492 = vunpack.c.l.b16 %v348
      %v493 = vunpack.c.h.b16 %v348
      %v494 = vunpack.c.l.b16 %v349
      %v495 = vunpack.c.h.b16 %v349
      %v496 = vunpack.c.l.b16 %v350
      %v497 = vunpack.c.h.b16 %v350
      %v498 = vunpack.c.l.b16 %v351
      %v499 = vunpack.c.h.b16 %v351
      %v500 = vunpack.c.l.b16 %v352
      %v501 = vunpack.c.h.b16 %v352
      %v502 = vunpack.c.l.b16 %v353
      %v503 = vunpack.c.h.b16 %v353
      %v504 = vunpack.c.l.b16 %v354
      %v505 = vunpack.c.h.b16 %v354
      %v506 = vunpack.c.l.b16 %v355
      %v507 = vunpack.c.h.b16 %v355
      %v508 = vunpack.c.l.b16 %v356
      %v509 = vunpack.c.h.b16 %v356
      %v510 = vunpack.c.l.b16 %v357
      %v511 = vunpack.c.h.b16 %v357
      %v512 = vunpack.c.l.b16 %v358
      %v513 = vunpack.c.h.b16 %v358
      %v514 = vunpack.c.l.b16 %v359
      %v515 = vunpack.c.h.b16 %v359
      %v516 = vunpack.c.l.b16 %v360
      %v517 = vunpack.c.h.b16 %v360
      %v518 = vunpack.c.l.b16 %v361
      %v519 = vunpack.c.h.b16 %v361
      %v520 = vunpack.c.l.b16 %v362
      %v521 = vunpack.c.h.b16 %v362
      %v522 = vunpack.c.l.b16 %v363
      %v523 = vunpack.c.h.b16 %v363
      %v524 = vunpack.c.l.b16 %v364
      %v525 = vunpack.c.h.b16 %v364
      %v526 = vunpack.c.l.b16 %v365
      %v527 = vunpack.c.h.b16 %v365
      %v528 = vunpack.c.l.b16 %v366
      %v529 = vunpack.c.h.b16 %v366
      %v530 = vunpack.c.l.b16 %v367
      %v531 = vunpack.c.h.b16 %v367
      %v532 = vunpack.c.l.b16 %v368
      %v533 = vunpack.c.h.b16 %v368
      %v534 = vunpack.c.l.b16 %v369
      %v535 = vunpack.c.h.b16 %v369
      %v536 = vunpack.c.l.b16 %v370
      %v537 = vunpack.c.h.b16 %v370
      %v538 = vunpack.c.l.b16 %v371
      %v539 = vunpack.c.h.b16 %v371
      %v540 = vunpack.c.l.b16 %v372
      %v541 = vunpack.c.h.b16 %v372
      %v542 = vunpack.c.l.b16 %v373
      %v543 = vunpack.c.h.b16 %v373
      %v544 = vunpack.c.l.b16 %v374
      %v545 = vunpack.c.h.b16 %v374
      %v546 = vunpack.c.l.b16 %v375
      %v547 = vunpack.c.h.b16 %v375
      %v548 = vunpack.c.l.b16 %v376
      %v549 = vunpack.c.h.b16 %v376
      %v550 = vunpack.c.l.b16 %v377
      %v551 = vunpack.c.h.b16 %v377
      %v552 = vunpack.c.l.b16 %v378
      %v553 = vunpack.c.h.b16 %v378
      %v554 = vunpack.c.l.b16 %v379
      %v555 = vunpack.c.h.b16 %v379
      %v556 = vunpack.c.l.b16 %v380
      %v557 = vunpack.c.h.b16 %v380
      %v558 = vunpack.c.l.b16 %v381
      %v559 = vunpack.c.h.b16 %v381
      %v560 = vunpack.c.l.b16 %v382
      %v561 = vunpack.c.h.b16 %v382
      %v562 = vunpack.c.l.b16 %v383
      %v563 = vunpack.c.h.b16 %v383
      %v564 = vpack.c.b16 %v474, %v468
      %v565 = vpack.c.b16 %v475, %v469
      %v566 = vpack.c.b16 %v476, %v470
      %v567 = vpack.c.b16 %v477, %v471
      %v568 = vpack.c.b16 %v478, %v472
      %v569 = vpack.c.b16 %v479, %v473
      %v570 = vpack.c.b16 %v486, %v480
      %v571 = vpack.c.b16 %v487, %v481
      %v572 = vpack.c.b16 %v488, %v482
      %v573 = vpack.c.b16 %v489, %v483
      %v574 = vpack.c.b16 %v490, %v484
      %v575 = vpack.c.b16 %v491, %v485
      %v576 = vpack.c.b16 %v498, %v492
      %v577 = vpack.c.b16 %v499, %v493
      %v578 = vpack.c.b16 %v500, %v494
      %v579 = vpack.c.b16 %v501, %v495
      %v580 = vpack.c.b16 %v502, %v496
      %v581 = vpack.c.b16 %v503, %v497
      %v582 = vpack.c.b16 %v510, %v504
      %v583 = vpack.c.b16 %v511, %v505
      %v584 = vpack.c.b16 %v512, %v506
      %v585 = vpack.c.b16 %v513, %v507
      %v586 = vpack.c.b16 %v514, %v508
      %v587 = vpack.c.b16 %v515, %v509
      %v588 = vpack.c.b16 %v522, %v516
      %v589 = vpack.c.b16 %v523, %v517
      %v590 = vpack.c.b16 %v524, %v518
      %v591 = vpack.c.b16 %v525, %v519
      %v592 = vpack.c.b16 %v526, %v520
      %v593 = vpack.c.b16 %v527, %v521
      %v594 = vpack.c.b16 %v534, %v528
      %v595 = vpack.c.b16 %v535, %v529
      %v596 = vpack.c.b16 %v536, %v530
      %v597 = vpack.c.b16 %v537, %v531
      %v598 = vpack.c.b16 %v538, %v532
      %v599 = vpack.c.b16 %v539, %v533
      %v600 = vpack.c.b16 %v546, %v540
      %v601 = vpack.c.b16 %v547, %v541
      %v602 = vpack.c.b16 %v548, %v542
      %v603 = vpack.c.b16 %v549, %v543
      %v604 = vpack.c.b16 %v550, %v544
      %v605 = vpack.c.b16 %v551, %v545
      %v606 = vpack.c.b16 %v558, %v552
      %v607 = vpack.c.b16 %v559, %v553
      %v608 = vpack.c.b16 %v560, %v554
      %v609 = vpack.c.b16 %v561, %v555
      %v610 = vpack.c.b16 %v562, %v556
      %v611 = vpack.c.b16 %v563, %v557
      %660 = vmatpush.bf16.msra.mxu0 %v606
      %661 = vmatpush.bf16.msra.mxu0 %v600
      %662 = vmatpush.bf16.msra.mxu0 %v594
      %663 = vmatpush.bf16.msra.mxu0 %v588
      %664 = vmatpush.bf16.msra.mxu0 %v582
      %665 = vmatpush.bf16.msra.mxu0 %v576
      %666 = vmatpush.bf16.msra.mxu0 %v570
      %667 = vmatpush.bf16.msra.mxu0 %v564
      %668 = vmatmul.bf16.gmra.mxu0 %v416
      %v669 = vpop.f32.mrf.mxu0
      %v670 = vadd.f32 %v391, %v669
      %v671 = vpop.f32.mrf.mxu0
      %v672 = vadd.f32 %v396, %v671
      %673 = vmatmul.bf16.gmra.mxu0 %v417
      %v674 = vpop.f32.mrf.mxu0
      %v675 = vadd.f32 %v401, %v674
      %v676 = vpop.f32.mrf.mxu0
      %v677 = vadd.f32 %v406, %v676
      %678 = vdwg.mxu0
      %679 = vmatpush.bf16.msra.mxu0 %v607
      %680 = vmatpush.bf16.msra.mxu0 %v601
      %681 = vmatpush.bf16.msra.mxu0 %v595
      %682 = vmatpush.bf16.msra.mxu0 %v589
      %683 = vmatpush.bf16.msra.mxu0 %v583
      %684 = vmatpush.bf16.msra.mxu0 %v577
      %685 = vmatpush.bf16.msra.mxu0 %v571
      %686 = vmatpush.bf16.msra.mxu0 %v565
      %687 = vmatmul.bf16.gmra.mxu0 %v416
      %v688 = vpop.f32.mrf.mxu0
      %v689 = vadd.f32 %v391, %v688
      %v690 = vpop.f32.mrf.mxu0
      %v691 = vadd.f32 %v396, %v690
      %692 = vmatmul.bf16.gmra.mxu0 %v417
      %v693 = vpop.f32.mrf.mxu0
      %v694 = vadd.f32 %v401, %v693
      %v695 = vpop.f32.mrf.mxu0
      %v696 = vadd.f32 %v406, %v695
      %697 = vdwg.mxu0
      %698 = vmatpush.bf16.msra.mxu0 %v608
      %699 = vmatpush.bf16.msra.mxu0 %v602
      %700 = vmatpush.bf16.msra.mxu0 %v596
      %701 = vmatpush.bf16.msra.mxu0 %v590
      %702 = vmatpush.bf16.msra.mxu0 %v584
      %703 = vmatpush.bf16.msra.mxu0 %v578
      %704 = vmatpush.bf16.msra.mxu0 %v572
      %705 = vmatpush.bf16.msra.mxu0 %v566
      %706 = vmatmul.bf16.gmra.mxu0 %v416
      %v707 = vpop.f32.mrf.mxu0
      %v708 = vadd.f32 %v391, %v707
      %v709 = vpop.f32.mrf.mxu0
      %v710 = vadd.f32 %v396, %v709
      %711 = vmatmul.bf16.gmra.mxu0 %v417
      %v712 = vpop.f32.mrf.mxu0
      %v713 = vadd.f32 %v401, %v712
      %v714 = vpop.f32.mrf.mxu0
      %v715 = vadd.f32 %v406, %v714
      %716 = vdwg.mxu0
      %717 = vmatpush.bf16.msra.mxu0 %v609
      %718 = vmatpush.bf16.msra.mxu0 %v603
      %719 = vmatpush.bf16.msra.mxu0 %v597
      %720 = vmatpush.bf16.msra.mxu0 %v591
      %721 = vmatpush.bf16.msra.mxu0 %v585
      %722 = vmatpush.bf16.msra.mxu0 %v579
      %723 = vmatpush.bf16.msra.mxu0 %v573
      %724 = vmatpush.bf16.msra.mxu0 %v567
      %725 = vmatmul.bf16.gmra.mxu0 %v416
      %v726 = vpop.f32.mrf.mxu0
      %v727 = vadd.f32 %v391, %v726
      %v728 = vpop.f32.mrf.mxu0
      %v729 = vadd.f32 %v396, %v728
      %730 = vmatmul.bf16.gmra.mxu0 %v417
      %v731 = vpop.f32.mrf.mxu0
      %v732 = vadd.f32 %v401, %v731
      %v733 = vpop.f32.mrf.mxu0
      %v734 = vadd.f32 %v406, %v733
      %735 = vdwg.mxu0
      %736 = vmatpush.bf16.msra.mxu0 %v610
      %737 = vmatpush.bf16.msra.mxu0 %v604
      %738 = vmatpush.bf16.msra.mxu0 %v598
      %739 = vmatpush.bf16.msra.mxu0 %v592
      %740 = vmatpush.bf16.msra.mxu0 %v586
      %741 = vmatpush.bf16.msra.mxu0 %v580
      %742 = vmatpush.bf16.msra.mxu0 %v574
      %743 = vmatpush.bf16.msra.mxu0 %v568
      %744 = vmatmul.bf16.gmra.mxu0 %v416
      %v745 = vpop.f32.mrf.mxu0
      %v746 = vadd.f32 %v391, %v745
      %v747 = vpop.f32.mrf.mxu0
      %v748 = vadd.f32 %v396, %v747
      %749 = vmatmul.bf16.gmra.mxu0 %v417
      %v750 = vpop.f32.mrf.mxu0
      %v751 = vadd.f32 %v401, %v750
      %v752 = vpop.f32.mrf.mxu0
      %v753 = vadd.f32 %v406, %v752
      %754 = vdwg.mxu0
      %755 = vmatpush.bf16.msra.mxu0 %v611
      %756 = vmatpush.bf16.msra.mxu0 %v605
      %757 = vmatpush.bf16.msra.mxu0 %v599
      %758 = vmatpush.bf16.msra.mxu0 %v593
      %759 = vmatpush.bf16.msra.mxu0 %v587
      %760 = vmatpush.bf16.msra.mxu0 %v581
      %761 = vmatpush.bf16.msra.mxu0 %v575
      %762 = vmatpush.bf16.msra.mxu0 %v569
      %763 = vmatmul.bf16.gmra.mxu0 %v416
      %v764 = vpop.f32.mrf.mxu0
      %v765 = vadd.f32 %v391, %v764
      %v766 = vpop.f32.mrf.mxu0
      %v767 = vadd.f32 %v396, %v766
      %768 = vmatmul.bf16.gmra.mxu0 %v417
      %v769 = vpop.f32.mrf.mxu0
      %v770 = vadd.f32 %v401, %v769
      %v771 = vpop.f32.mrf.mxu0
      %v772 = vadd.f32 %v406, %v771
      %773 = vdwg.mxu0
      %vm774 = vcmp.gt.f32.partialorder %v670, 0.0
      %vm775 = vcmp.gt.f32.partialorder %v689, 0.0
      %vm776 = vcmp.gt.f32.partialorder %v708, 0.0
      %vm777 = vcmp.gt.f32.partialorder %v727, 0.0
      %vm778 = vcmp.gt.f32.partialorder %v746, 0.0
      %vm779 = vcmp.gt.f32.partialorder %v765, 0.0
      %vm780 = vcmp.gt.f32.partialorder %v672, 0.0
      %vm781 = vcmp.gt.f32.partialorder %v691, 0.0
      %vm782 = vcmp.gt.f32.partialorder %v710, 0.0
      %vm783 = vcmp.gt.f32.partialorder %v729, 0.0
      %vm784 = vcmp.gt.f32.partialorder %v748, 0.0
      %vm785 = vcmp.gt.f32.partialorder %v767, 0.0
      %vm786 = vcmp.gt.f32.partialorder %v675, 0.0
      %vm787 = vcmp.gt.f32.partialorder %v694, 0.0
      %vm788 = vcmp.gt.f32.partialorder %v713, 0.0
      %vm789 = vcmp.gt.f32.partialorder %v732, 0.0
      %vm790 = vcmp.gt.f32.partialorder %v751, 0.0
      %vm791 = vcmp.gt.f32.partialorder %v770, 0.0
      %vm792 = vcmp.gt.f32.partialorder %v677, 0.0
      %vm793 = vcmp.gt.f32.partialorder %v696, 0.0
      %vm794 = vcmp.gt.f32.partialorder %v715, 0.0
      %vm795 = vcmp.gt.f32.partialorder %v734, 0.0
      %vm796 = vcmp.gt.f32.partialorder %v753, 0.0
      %vm797 = vcmp.gt.f32.partialorder %v772, 0.0
      %v798 = vmin.f32 %v670, 0.0
      %v799 = vmin.f32 %v689, 0.0
      %v800 = vmin.f32 %v708, 0.0
      %v801 = vmin.f32 %v727, 0.0
      %v802 = vmin.f32 %v746, 0.0
      %v803 = vmin.f32 %v765, 0.0
      %v804 = vmin.f32 %v672, 0.0
      %v805 = vmin.f32 %v691, 0.0
      %v806 = vmin.f32 %v710, 0.0
      %v807 = vmin.f32 %v729, 0.0
      %v808 = vmin.f32 %v748, 0.0
      %v809 = vmin.f32 %v767, 0.0
      %v810 = vmin.f32 %v675, 0.0
      %v811 = vmin.f32 %v694, 0.0
      %v812 = vmin.f32 %v713, 0.0
      %v813 = vmin.f32 %v732, 0.0
      %v814 = vmin.f32 %v751, 0.0
      %v815 = vmin.f32 %v770, 0.0
      %v816 = vmin.f32 %v677, 0.0
      %v817 = vmin.f32 %v696, 0.0
      %v818 = vmin.f32 %v715, 0.0
      %v819 = vmin.f32 %v734, 0.0
      %v820 = vmin.f32 %v753, 0.0
      %v821 = vmin.f32 %v772, 0.0
      %v822 = vmul.f32 %v798, 1.442695
      %v823 = vpow.pop %v822
      %v824 = vmul.f32 %v799, 1.442695
      %v825 = vpow.pop %v824
      %v826 = vmul.f32 %v800, 1.442695
      %v827 = vpow.pop %v826
      %v828 = vmul.f32 %v801, 1.442695
      %v829 = vpow.pop %v828
      %v830 = vmul.f32 %v802, 1.442695
      %v831 = vpow.pop %v830
      %v832 = vmul.f32 %v803, 1.442695
      %v833 = vpow.pop %v832
      %v834 = vmul.f32 %v804, 1.442695
      %v835 = vpow.pop %v834
      %v836 = vmul.f32 %v805, 1.442695
      %v837 = vpow.pop %v836
      %v838 = vmul.f32 %v806, 1.442695
      %v839 = vpow.pop %v838
      %v840 = vmul.f32 %v807, 1.442695
      %v841 = vpow.pop %v840
      %v842 = vmul.f32 %v808, 1.442695
      %v843 = vpow.pop %v842
      %v844 = vmul.f32 %v809, 1.442695
      %v845 = vpow.pop %v844
      %v846 = vmul.f32 %v810, 1.442695
      %v847 = vpow.pop %v846
      %v848 = vmul.f32 %v811, 1.442695
      %v849 = vpow.pop %v848
      %v850 = vmul.f32 %v812, 1.442695
      %v851 = vpow.pop %v850
      %v852 = vmul.f32 %v813, 1.442695
      %v853 = vpow.pop %v852
      %v854 = vmul.f32 %v814, 1.442695
      %v855 = vpow.pop %v854
      %v856 = vmul.f32 %v815, 1.442695
      %v857 = vpow.pop %v856
      %v858 = vmul.f32 %v816, 1.442695
      %v859 = vpow.pop %v858
      %v860 = vmul.f32 %v817, 1.442695
      %v861 = vpow.pop %v860
      %v862 = vmul.f32 %v818, 1.442695
      %v863 = vpow.pop %v862
      %v864 = vmul.f32 %v819, 1.442695
      %v865 = vpow.pop %v864
      %v866 = vmul.f32 %v820, 1.442695
      %v867 = vpow.pop %v866
      %v868 = vmul.f32 %v821, 1.442695
      %v869 = vpow.pop %v868
      %v870 = vsub.f32 %v823, 1.0
      %v871 = vsub.f32 %v825, 1.0
      %v872 = vsub.f32 %v827, 1.0
      %v873 = vsub.f32 %v829, 1.0
      %v874 = vsub.f32 %v831, 1.0
      %v875 = vsub.f32 %v833, 1.0
      %v876 = vsub.f32 %v835, 1.0
      %v877 = vsub.f32 %v837, 1.0
      %v878 = vsub.f32 %v839, 1.0
      %v879 = vsub.f32 %v841, 1.0
      %v880 = vsub.f32 %v843, 1.0
      %v881 = vsub.f32 %v845, 1.0
      %v882 = vsub.f32 %v847, 1.0
      %v883 = vsub.f32 %v849, 1.0
      %v884 = vsub.f32 %v851, 1.0
      %v885 = vsub.f32 %v853, 1.0
      %v886 = vsub.f32 %v855, 1.0
      %v887 = vsub.f32 %v857, 1.0
      %v888 = vsub.f32 %v859, 1.0
      %v889 = vsub.f32 %v861, 1.0
      %v890 = vsub.f32 %v863, 1.0
      %v891 = vsub.f32 %v865, 1.0
      %v892 = vsub.f32 %v867, 1.0
      %v893 = vsub.f32 %v869, 1.0
      %v894 = vsel %vm774, %v670, %v870
      %v895 = vsel %vm775, %v689, %v871
      %v896 = vsel %vm776, %v708, %v872
      %v897 = vsel %vm777, %v727, %v873
      %v898 = vsel %vm778, %v746, %v874
      %v899 = vsel %vm779, %v765, %v875
      %v900 = vsel %vm780, %v672, %v876
      %v901 = vsel %vm781, %v691, %v877
      %v902 = vsel %vm782, %v710, %v878
      %v903 = vsel %vm783, %v729, %v879
      %v904 = vsel %vm784, %v748, %v880
      %v905 = vsel %vm785, %v767, %v881
      %v906 = vsel %vm786, %v675, %v882
      %v907 = vsel %vm787, %v694, %v883
      %v908 = vsel %vm788, %v713, %v884
      %v909 = vsel %vm789, %v732, %v885
      %v910 = vsel %vm790, %v751, %v886
      %v911 = vsel %vm791, %v770, %v887
      %v912 = vsel %vm792, %v677, %v888
      %v913 = vsel %vm793, %v696, %v889
      %v914 = vsel %vm794, %v715, %v890
      %v915 = vsel %vm795, %v734, %v891
      %v916 = vsel %vm796, %v753, %v892
      %v917 = vsel %vm797, %v772, %v893
      %v918 = vpack.c.bf16 %v900, %v894
      %v919 = vpack.c.bf16 %v901, %v895
      %v920 = vpack.c.bf16 %v902, %v896
      %v921 = vpack.c.bf16 %v903, %v897
      %v922 = vpack.c.bf16 %v904, %v898
      %v923 = vpack.c.bf16 %v905, %v899
      %v924 = vpack.c.bf16 %v912, %v906
      %v925 = vpack.c.bf16 %v913, %v907
      %v926 = vpack.c.bf16 %v914, %v908
      %v927 = vpack.c.bf16 %v915, %v909
      %v928 = vpack.c.bf16 %v916, %v910
      %v929 = vpack.c.bf16 %v917, %v911
      %v930 = vld [vmem:[%s3] sm:$0xff]
      %v931 = vld [vmem:[%s3 + $0x8] sm:$0xf]
      %v932 = vld [vmem:[%s3 + $0xc] sm:$0xff]
      %v933 = vld [vmem:[%s3 + $0x14] sm:$0xf]
      %v934 = vld [vmem:[%s3 + $0x18] sm:$0xff]
      %v935 = vld [vmem:[%s3 + $0x20] sm:$0xf]
      %v936 = vld [vmem:[%s3 + $0x24] sm:$0xff]
      %v937 = vld [vmem:[%s3 + $0x2c] sm:$0xf]
      %v938 = vld [vmem:[%s3 + $0x30] sm:$0xff]
      %v939 = vld [vmem:[%s3 + $0x38] sm:$0xf]
      %v940 = vld [vmem:[%s3 + $0x3c] sm:$0xff]
      %v941 = vld [vmem:[%s3 + $0x44] sm:$0xf]
      %v942 = vld [vmem:[%s3 + $0x48] sm:$0xff]
      %v943 = vld [vmem:[%s3 + $0x50] sm:$0xf]
      %v944 = vld [vmem:[%s3 + $0x54] sm:$0xff]
      %v945 = vld [vmem:[%s3 + $0x5c] sm:$0xf]
      %v946 = vld [vmem:[%s3 + $0x60] sm:$0xff]
      %v947 = vld [vmem:[%s3 + $0x68] sm:$0xf]
      %v948 = vld [vmem:[%s3 + $0x6c] sm:$0xff]
      %v949 = vld [vmem:[%s3 + $0x74] sm:$0xf]
      %v950 = vld [vmem:[%s3 + $0x78] sm:$0xff]
      %v951 = vld [vmem:[%s3 + $0x80] sm:$0xf]
      %v952 = vld [vmem:[%s3 + $0x84] sm:$0xff]
      %v953 = vld [vmem:[%s3 + $0x8c] sm:$0xf]
      %v954 = vld [vmem:[%s3 + $0x90] sm:$0xff]
      %v955 = vld [vmem:[%s3 + $0x98] sm:$0xf]
      %v956 = vld [vmem:[%s3 + $0x9c] sm:$0xff]
      %v957 = vld [vmem:[%s3 + $0xa4] sm:$0xf]
      %v958 = vld [vmem:[%s3 + $0xa8] sm:$0xff]
      %v959 = vld [vmem:[%s3 + $0xb0] sm:$0xf]
      %v960 = vld [vmem:[%s3 + $0xb4] sm:$0xff]
      %v961 = vld [vmem:[%s3 + $0xbc] sm:$0xf]
      %v962 = vld [vmem:[%s3 + $0xc0] sm:$0xff]
      %v963 = vld [vmem:[%s3 + $0xc8] sm:$0xf]
      %v964 = vld [vmem:[%s3 + $0xcc] sm:$0xff]
      %v965 = vld [vmem:[%s3 + $0xd4] sm:$0xf]
      %v966 = vld [vmem:[%s3 + $0xd8] sm:$0xff]
      %v967 = vld [vmem:[%s3 + $0xe0] sm:$0xf]
      %v968 = vld [vmem:[%s3 + $0xe4] sm:$0xff]
      %v969 = vld [vmem:[%s3 + $0xec] sm:$0xf]
      %v970 = vld [vmem:[%s3 + $0xf0] sm:$0xff]
      %v971 = vld [vmem:[%s3 + $0xf8] sm:$0xf]
      %v972 = vld [vmem:[%s3 + $0xfc] sm:$0xff]
      %v973 = vld [vmem:[%s3 + $0x104] sm:$0xf]
      %v974 = vld [vmem:[%s3 + $0x108] sm:$0xff]
      %v975 = vld [vmem:[%s3 + $0x110] sm:$0xf]
      %v976 = vld [vmem:[%s3 + $0x114] sm:$0xff]
      %v977 = vld [vmem:[%s3 + $0x11c] sm:$0xf]
      %v978 = vld [vmem:[%s3 + $0x120] sm:$0xff]
      %v979 = vld [vmem:[%s3 + $0x128] sm:$0xf]
      %v980 = vld [vmem:[%s3 + $0x12c] sm:$0xff]
      %v981 = vld [vmem:[%s3 + $0x134] sm:$0xf]
      %v982 = vld [vmem:[%s3 + $0x138] sm:$0xff]
      %v983 = vld [vmem:[%s3 + $0x140] sm:$0xf]
      %v984 = vld [vmem:[%s3 + $0x144] sm:$0xff]
      %v985 = vld [vmem:[%s3 + $0x14c] sm:$0xf]
      %v986 = vld [vmem:[%s3 + $0x150] sm:$0xff]
      %v987 = vld [vmem:[%s3 + $0x158] sm:$0xf]
      %v988 = vld [vmem:[%s3 + $0x15c] sm:$0xff]
      %v989 = vld [vmem:[%s3 + $0x164] sm:$0xf]
      %v990 = vld [vmem:[%s3 + $0x168] sm:$0xff]
      %v991 = vld [vmem:[%s3 + $0x170] sm:$0xf]
      %v992 = vld [vmem:[%s3 + $0x174] sm:$0xff]
      %v993 = vld [vmem:[%s3 + $0x17c] sm:$0xf]
      %v994 = vld [vmem:[%s3 + $0x180] sm:$0xff]
      %v995 = vld [vmem:[%s3 + $0x188] sm:$0xf]
      %v996 = vld [vmem:[%s3 + $0x18c] sm:$0xff]
      %v997 = vld [vmem:[%s3 + $0x194] sm:$0xf]
      %v998 = vld [vmem:[%s3 + $0x198] sm:$0xff]
      %v999 = vld [vmem:[%s3 + $0x1a0] sm:$0xf]
      %v1000 = vld [vmem:[%s3 + $0x1a4] sm:$0xff]
      %v1001 = vld [vmem:[%s3 + $0x1ac] sm:$0xf]
      %v1002 = vld [vmem:[%s3 + $0x1b0] sm:$0xff]
      %v1003 = vld [vmem:[%s3 + $0x1b8] sm:$0xf]
      %v1004 = vld [vmem:[%s3 + $0x1bc] sm:$0xff]
      %v1005 = vld [vmem:[%s3 + $0x1c4] sm:$0xf]
      %v1006 = vld [vmem:[%s3 + $0x1c8] sm:$0xff]
      %v1007 = vld [vmem:[%s3 + $0x1d0] sm:$0xf]
      %v1008 = vld [vmem:[%s3 + $0x1d4] sm:$0xff]
      %v1009 = vld [vmem:[%s3 + $0x1dc] sm:$0xf]
      %v1010 = vld [vmem:[%s3 + $0x1e0] sm:$0xff]
      %v1011 = vld [vmem:[%s3 + $0x1e8] sm:$0xf]
      %v1012 = vld [vmem:[%s3 + $0x1ec] sm:$0xff]
      %v1013 = vld [vmem:[%s3 + $0x1f4] sm:$0xf]
      %v1014 = vld [vmem:[%s3 + $0x1f8] sm:$0xff]
      %v1015 = vld [vmem:[%s3 + $0x200] sm:$0xf]
      %v1016 = vld [vmem:[%s3 + $0x204] sm:$0xff]
      %v1017 = vld [vmem:[%s3 + $0x20c] sm:$0xf]
      %v1018 = vld [vmem:[%s3 + $0x210] sm:$0xff]
      %v1019 = vld [vmem:[%s3 + $0x218] sm:$0xf]
      %v1020 = vld [vmem:[%s3 + $0x21c] sm:$0xff]
      %v1021 = vld [vmem:[%s3 + $0x224] sm:$0xf]
      %v1022 = vld [vmem:[%s3 + $0x228] sm:$0xff]
      %v1023 = vld [vmem:[%s3 + $0x230] sm:$0xf]
      %v1024 = vld [vmem:[%s3 + $0x234] sm:$0xff]
      %v1025 = vld [vmem:[%s3 + $0x23c] sm:$0xf]
      %v1026 = vld [vmem:[%s3 + $0x240] sm:$0xff]
      %v1027 = vld [vmem:[%s3 + $0x248] sm:$0xf]
      %v1028 = vld [vmem:[%s3 + $0x24c] sm:$0xff]
      %v1029 = vld [vmem:[%s3 + $0x254] sm:$0xf]
      %v1030 = vld [vmem:[%s3 + $0x258] sm:$0xff]
      %v1031 = vld [vmem:[%s3 + $0x260] sm:$0xf]
      %v1032 = vld [vmem:[%s3 + $0x264] sm:$0xff]
      %v1033 = vld [vmem:[%s3 + $0x26c] sm:$0xf]
      %v1034 = vld [vmem:[%s3 + $0x270] sm:$0xff]
      %v1035 = vld [vmem:[%s3 + $0x278] sm:$0xf]
      %v1036 = vld [vmem:[%s3 + $0x27c] sm:$0xff]
      %v1037 = vld [vmem:[%s3 + $0x284] sm:$0xf]
      %v1038 = vld [vmem:[%s3 + $0x288] sm:$0xff]
      %v1039 = vld [vmem:[%s3 + $0x290] sm:$0xf]
      %v1040 = vld [vmem:[%s3 + $0x294] sm:$0xff]
      %v1041 = vld [vmem:[%s3 + $0x29c] sm:$0xf]
      %v1042 = vld [vmem:[%s3 + $0x2a0] sm:$0xff]
      %v1043 = vld [vmem:[%s3 + $0x2a8] sm:$0xf]
      %v1044 = vld [vmem:[%s3 + $0x2ac] sm:$0xff]
      %v1045 = vld [vmem:[%s3 + $0x2b4] sm:$0xf]
      %v1046 = vld [vmem:[%s3 + $0x2b8] sm:$0xff]
      %v1047 = vld [vmem:[%s3 + $0x2c0] sm:$0xf]
      %v1048 = vld [vmem:[%s3 + $0x2c4] sm:$0xff]
      %v1049 = vld [vmem:[%s3 + $0x2cc] sm:$0xf]
      %v1050 = vld [vmem:[%s3 + $0x2d0] sm:$0xff]
      %v1051 = vld [vmem:[%s3 + $0x2d8] sm:$0xf]
      %v1052 = vld [vmem:[%s3 + $0x2dc] sm:$0xff]
      %v1053 = vld [vmem:[%s3 + $0x2e4] sm:$0xf]
      %v1054 = vld [vmem:[%s3 + $0x2e8] sm:$0xff]
      %v1055 = vld [vmem:[%s3 + $0x2f0] sm:$0xf]
      %v1056 = vld [vmem:[%s3 + $0x2f4] sm:$0xff]
      %v1057 = vld [vmem:[%s3 + $0x2fc] sm:$0xf]
      %v1058 = vld [vmem:[%s3 + $0x300] sm:$0xff]
      %v1059 = vld [vmem:[%s3 + $0x308] sm:$0xf]
      %v1060 = vld [vmem:[%s3 + $0x30c] sm:$0xff]
      %v1061 = vld [vmem:[%s3 + $0x314] sm:$0xf]
      %v1062 = vld [vmem:[%s3 + $0x318] sm:$0xff]
      %v1063 = vld [vmem:[%s3 + $0x320] sm:$0xf]
      %v1064 = vld [vmem:[%s3 + $0x324] sm:$0xff]
      %v1065 = vld [vmem:[%s3 + $0x32c] sm:$0xf]
      %v1066 = vld [vmem:[%s3 + $0x330] sm:$0xff]
      %v1067 = vld [vmem:[%s3 + $0x338] sm:$0xf]
      %v1068 = vld [vmem:[%s3 + $0x33c] sm:$0xff]
      %v1069 = vld [vmem:[%s3 + $0x344] sm:$0xf]
      %v1070 = vld [vmem:[%s3 + $0x348] sm:$0xff]
      %v1071 = vld [vmem:[%s3 + $0x350] sm:$0xf]
      %v1072 = vld [vmem:[%s3 + $0x354] sm:$0xff]
      %v1073 = vld [vmem:[%s3 + $0x35c] sm:$0xf]
      %v1074 = vld [vmem:[%s3 + $0x360] sm:$0xff]
      %v1075 = vld [vmem:[%s3 + $0x368] sm:$0xf]
      %v1076 = vld [vmem:[%s3 + $0x36c] sm:$0xff]
      %v1077 = vld [vmem:[%s3 + $0x374] sm:$0xf]
      %v1078 = vld [vmem:[%s3 + $0x378] sm:$0xff]
      %v1079 = vld [vmem:[%s3 + $0x380] sm:$0xf]
      %v1080 = vld [vmem:[%s3 + $0x384] sm:$0xff]
      %v1081 = vld [vmem:[%s3 + $0x38c] sm:$0xf]
      %v1082 = vld [vmem:[%s3 + $0x390] sm:$0xff]
      %v1083 = vld [vmem:[%s3 + $0x398] sm:$0xf]
      %v1084 = vld [vmem:[%s3 + $0x39c] sm:$0xff]
      %v1085 = vld [vmem:[%s3 + $0x3a4] sm:$0xf]
      %v1086 = vld [vmem:[%s3 + $0x3a8] sm:$0xff]
      %v1087 = vld [vmem:[%s3 + $0x3b0] sm:$0xf]
      %v1088 = vld [vmem:[%s3 + $0x3b4] sm:$0xff]
      %v1089 = vld [vmem:[%s3 + $0x3bc] sm:$0xf]
      %v1090 = vld [vmem:[%s3 + $0x3c0] sm:$0xff]
      %v1091 = vld [vmem:[%s3 + $0x3c8] sm:$0xf]
      %v1092 = vld [vmem:[%s3 + $0x3cc] sm:$0xff]
      %v1093 = vld [vmem:[%s3 + $0x3d4] sm:$0xf]
      %v1094 = vld [vmem:[%s3 + $0x3d8] sm:$0xff]
      %v1095 = vld [vmem:[%s3 + $0x3e0] sm:$0xf]
      %v1096 = vld [vmem:[%s3 + $0x3e4] sm:$0xff]
      %v1097 = vld [vmem:[%s3 + $0x3ec] sm:$0xf]
      %v1098 = vld [vmem:[%s3 + $0x3f0] sm:$0xff]
      %v1099 = vld [vmem:[%s3 + $0x3f8] sm:$0xf]
      %v1100 = vld [vmem:[%s3 + $0x3fc] sm:$0xff]
      %v1101 = vld [vmem:[%s3 + $0x404] sm:$0xf]
      %v1102 = vld [vmem:[%s3 + $0x408] sm:$0xff]
      %v1103 = vld [vmem:[%s3 + $0x410] sm:$0xf]
      %v1104 = vld [vmem:[%s3 + $0x414] sm:$0xff]
      %v1105 = vld [vmem:[%s3 + $0x41c] sm:$0xf]
      %v1106 = vld [vmem:[%s3 + $0x420] sm:$0xff]
      %v1107 = vld [vmem:[%s3 + $0x428] sm:$0xf]
      %v1108 = vld [vmem:[%s3 + $0x42c] sm:$0xff]
      %v1109 = vld [vmem:[%s3 + $0x434] sm:$0xf]
      %v1110 = vld [vmem:[%s3 + $0x438] sm:$0xff]
      %v1111 = vld [vmem:[%s3 + $0x440] sm:$0xf]
      %v1112 = vld [vmem:[%s3 + $0x444] sm:$0xff]
      %v1113 = vld [vmem:[%s3 + $0x44c] sm:$0xf]
      %v1114 = vld [vmem:[%s3 + $0x450] sm:$0xff]
      %v1115 = vld [vmem:[%s3 + $0x458] sm:$0xf]
      %v1116 = vld [vmem:[%s3 + $0x45c] sm:$0xff]
      %v1117 = vld [vmem:[%s3 + $0x464] sm:$0xf]
      %v1118 = vld [vmem:[%s3 + $0x468] sm:$0xff]
      %v1119 = vld [vmem:[%s3 + $0x470] sm:$0xf]
      %v1120 = vld [vmem:[%s3 + $0x474] sm:$0xff]
      %v1121 = vld [vmem:[%s3 + $0x47c] sm:$0xf]
      %v1314 = vunpack.c.l.b16 %v930
      %v1315 = vunpack.c.h.b16 %v930
      %v1316 = vunpack.c.l.b16 %v931
      %v1317 = vunpack.c.l.b16 %v932
      %v1318 = vunpack.c.h.b16 %v932
      %v1319 = vunpack.c.l.b16 %v933
      %v1320 = vunpack.c.l.b16 %v934
      %v1321 = vunpack.c.h.b16 %v934
      %v1322 = vunpack.c.l.b16 %v935
      %v1323 = vunpack.c.l.b16 %v936
      %v1324 = vunpack.c.h.b16 %v936
      %v1325 = vunpack.c.l.b16 %v937
      %v1326 = vunpack.c.l.b16 %v938
      %v1327 = vunpack.c.h.b16 %v938
      %v1328 = vunpack.c.l.b16 %v939
      %v1329 = vunpack.c.l.b16 %v940
      %v1330 = vunpack.c.h.b16 %v940
      %v1331 = vunpack.c.l.b16 %v941
      %v1332 = vunpack.c.l.b16 %v942
      %v1333 = vunpack.c.h.b16 %v942
      %v1334 = vunpack.c.l.b16 %v943
      %v1335 = vunpack.c.l.b16 %v944
      %v1336 = vunpack.c.h.b16 %v944
      %v1337 = vunpack.c.l.b16 %v945
      %v1338 = vunpack.c.l.b16 %v946
      %v1339 = vunpack.c.h.b16 %v946
      %v1340 = vunpack.c.l.b16 %v947
      %v1341 = vunpack.c.l.b16 %v948
      %v1342 = vunpack.c.h.b16 %v948
      %v1343 = vunpack.c.l.b16 %v949
      %v1344 = vunpack.c.l.b16 %v950
      %v1345 = vunpack.c.h.b16 %v950
      %v1346 = vunpack.c.l.b16 %v951
      %v1347 = vunpack.c.l.b16 %v952
      %v1348 = vunpack.c.h.b16 %v952
      %v1349 = vunpack.c.l.b16 %v953
      %v1350 = vunpack.c.l.b16 %v954
      %v1351 = vunpack.c.h.b16 %v954
      %v1352 = vunpack.c.l.b16 %v955
      %v1353 = vunpack.c.l.b16 %v956
      %v1354 = vunpack.c.h.b16 %v956
      %v1355 = vunpack.c.l.b16 %v957
      %v1356 = vunpack.c.l.b16 %v958
      %v1357 = vunpack.c.h.b16 %v958
      %v1358 = vunpack.c.l.b16 %v959
      %v1359 = vunpack.c.l.b16 %v960
      %v1360 = vunpack.c.h.b16 %v960
      %v1361 = vunpack.c.l.b16 %v961
      %v1362 = vunpack.c.l.b16 %v962
      %v1363 = vunpack.c.h.b16 %v962
      %v1364 = vunpack.c.l.b16 %v963
      %v1365 = vunpack.c.l.b16 %v964
      %v1366 = vunpack.c.h.b16 %v964
      %v1367 = vunpack.c.l.b16 %v965
      %v1368 = vunpack.c.l.b16 %v966
      %v1369 = vunpack.c.h.b16 %v966
      %v1370 = vunpack.c.l.b16 %v967
      %v1371 = vunpack.c.l.b16 %v968
      %v1372 = vunpack.c.h.b16 %v968
      %v1373 = vunpack.c.l.b16 %v969
      %v1374 = vunpack.c.l.b16 %v970
      %v1375 = vunpack.c.h.b16 %v970
      %v1376 = vunpack.c.l.b16 %v971
      %v1377 = vunpack.c.l.b16 %v972
      %v1378 = vunpack.c.h.b16 %v972
      %v1379 = vunpack.c.l.b16 %v973
      %v1380 = vunpack.c.l.b16 %v974
      %v1381 = vunpack.c.h.b16 %v974
      %v1382 = vunpack.c.l.b16 %v975
      %v1383 = vunpack.c.l.b16 %v976
      %v1384 = vunpack.c.h.b16 %v976
      %v1385 = vunpack.c.l.b16 %v977
      %v1386 = vunpack.c.l.b16 %v978
      %v1387 = vunpack.c.h.b16 %v978
      %v1388 = vunpack.c.l.b16 %v979
      %v1389 = vunpack.c.l.b16 %v980
      %v1390 = vunpack.c.h.b16 %v980
      %v1391 = vunpack.c.l.b16 %v981
      %v1392 = vunpack.c.l.b16 %v982
      %v1393 = vunpack.c.h.b16 %v982
      %v1394 = vunpack.c.l.b16 %v983
      %v1395 = vunpack.c.l.b16 %v984
      %v1396 = vunpack.c.h.b16 %v984
      %v1397 = vunpack.c.l.b16 %v985
      %v1398 = vunpack.c.l.b16 %v986
      %v1399 = vunpack.c.h.b16 %v986
      %v1400 = vunpack.c.l.b16 %v987
      %v1401 = vunpack.c.l.b16 %v988
      %v1402 = vunpack.c.h.b16 %v988
      %v1403 = vunpack.c.l.b16 %v989
      %v1404 = vunpack.c.l.b16 %v990
      %v1405 = vunpack.c.h.b16 %v990
      %v1406 = vunpack.c.l.b16 %v991
      %v1407 = vunpack.c.l.b16 %v992
      %v1408 = vunpack.c.h.b16 %v992
      %v1409 = vunpack.c.l.b16 %v993
      %v1410 = vunpack.c.l.b16 %v994
      %v1411 = vunpack.c.h.b16 %v994
      %v1412 = vunpack.c.l.b16 %v995
      %v1413 = vunpack.c.l.b16 %v996
      %v1414 = vunpack.c.h.b16 %v996
      %v1415 = vunpack.c.l.b16 %v997
      %v1416 = vunpack.c.l.b16 %v998
      %v1417 = vunpack.c.h.b16 %v998
      %v1418 = vunpack.c.l.b16 %v999
      %v1419 = vunpack.c.l.b16 %v1000
      %v1420 = vunpack.c.h.b16 %v1000
      %v1421 = vunpack.c.l.b16 %v1001
      %v1422 = vunpack.c.l.b16 %v1002
      %v1423 = vunpack.c.h.b16 %v1002
      %v1424 = vunpack.c.l.b16 %v1003
      %v1425 = vunpack.c.l.b16 %v1004
      %v1426 = vunpack.c.h.b16 %v1004
      %v1427 = vunpack.c.l.b16 %v1005
      %v1428 = vunpack.c.l.b16 %v1006
      %v1429 = vunpack.c.h.b16 %v1006
      %v1430 = vunpack.c.l.b16 %v1007
      %v1431 = vunpack.c.l.b16 %v1008
      %v1432 = vunpack.c.h.b16 %v1008
      %v1433 = vunpack.c.l.b16 %v1009
      %v1434 = vunpack.c.l.b16 %v1010
      %v1435 = vunpack.c.h.b16 %v1010
      %v1436 = vunpack.c.l.b16 %v1011
      %v1437 = vunpack.c.l.b16 %v1012
      %v1438 = vunpack.c.h.b16 %v1012
      %v1439 = vunpack.c.l.b16 %v1013
      %v1440 = vunpack.c.l.b16 %v1014
      %v1441 = vunpack.c.h.b16 %v1014
      %v1442 = vunpack.c.l.b16 %v1015
      %v1443 = vunpack.c.l.b16 %v1016
      %v1444 = vunpack.c.h.b16 %v1016
      %v1445 = vunpack.c.l.b16 %v1017
      %v1446 = vunpack.c.l.b16 %v1018
      %v1447 = vunpack.c.h.b16 %v1018
      %v1448 = vunpack.c.l.b16 %v1019
      %v1449 = vunpack.c.l.b16 %v1020
      %v1450 = vunpack.c.h.b16 %v1020
      %v1451 = vunpack.c.l.b16 %v1021
      %v1452 = vunpack.c.l.b16 %v1022
      %v1453 = vunpack.c.h.b16 %v1022
      %v1454 = vunpack.c.l.b16 %v1023
      %v1455 = vunpack.c.l.b16 %v1024
      %v1456 = vunpack.c.h.b16 %v1024
      %v1457 = vunpack.c.l.b16 %v1025
      %v1458 = vunpack.c.l.b16 %v1026
      %v1459 = vunpack.c.h.b16 %v1026
      %v1460 = vunpack.c.l.b16 %v1027
      %v1461 = vunpack.c.l.b16 %v1028
      %v1462 = vunpack.c.h.b16 %v1028
      %v1463 = vunpack.c.l.b16 %v1029
      %v1464 = vunpack.c.l.b16 %v1030
      %v1465 = vunpack.c.h.b16 %v1030
      %v1466 = vunpack.c.l.b16 %v1031
      %v1467 = vunpack.c.l.b16 %v1032
      %v1468 = vunpack.c.h.b16 %v1032
      %v1469 = vunpack.c.l.b16 %v1033
      %v1470 = vunpack.c.l.b16 %v1034
      %v1471 = vunpack.c.h.b16 %v1034
      %v1472 = vunpack.c.l.b16 %v1035
      %v1473 = vunpack.c.l.b16 %v1036
      %v1474 = vunpack.c.h.b16 %v1036
      %v1475 = vunpack.c.l.b16 %v1037
      %v1476 = vunpack.c.l.b16 %v1038
      %v1477 = vunpack.c.h.b16 %v1038
      %v1478 = vunpack.c.l.b16 %v1039
      %v1479 = vunpack.c.l.b16 %v1040
      %v1480 = vunpack.c.h.b16 %v1040
      %v1481 = vunpack.c.l.b16 %v1041
      %v1482 = vunpack.c.l.b16 %v1042
      %v1483 = vunpack.c.h.b16 %v1042
      %v1484 = vunpack.c.l.b16 %v1043
      %v1485 = vunpack.c.l.b16 %v1044
      %v1486 = vunpack.c.h.b16 %v1044
      %v1487 = vunpack.c.l.b16 %v1045
      %v1488 = vunpack.c.l.b16 %v1046
      %v1489 = vunpack.c.h.b16 %v1046
      %v1490 = vunpack.c.l.b16 %v1047
      %v1491 = vunpack.c.l.b16 %v1048
      %v1492 = vunpack.c.h.b16 %v1048
      %v1493 = vunpack.c.l.b16 %v1049
      %v1494 = vunpack.c.l.b16 %v1050
      %v1495 = vunpack.c.h.b16 %v1050
      %v1496 = vunpack.c.l.b16 %v1051
      %v1497 = vunpack.c.l.b16 %v1052
      %v1498 = vunpack.c.h.b16 %v1052
      %v1499 = vunpack.c.l.b16 %v1053
      %v1500 = vunpack.c.l.b16 %v1054
      %v1501 = vunpack.c.h.b16 %v1054
      %v1502 = vunpack.c.l.b16 %v1055
      %v1503 = vunpack.c.l.b16 %v1056
      %v1504 = vunpack.c.h.b16 %v1056
      %v1505 = vunpack.c.l.b16 %v1057
      %v1506 = vunpack.c.l.b16 %v1058
      %v1507 = vunpack.c.h.b16 %v1058
      %v1508 = vunpack.c.l.b16 %v1059
      %v1509 = vunpack.c.l.b16 %v1060
      %v1510 = vunpack.c.h.b16 %v1060
      %v1511 = vunpack.c.l.b16 %v1061
      %v1512 = vunpack.c.l.b16 %v1062
      %v1513 = vunpack.c.h.b16 %v1062
      %v1514 = vunpack.c.l.b16 %v1063
      %v1515 = vunpack.c.l.b16 %v1064
      %v1516 = vunpack.c.h.b16 %v1064
      %v1517 = vunpack.c.l.b16 %v1065
      %v1518 = vunpack.c.l.b16 %v1066
      %v1519 = vunpack.c.h.b16 %v1066
      %v1520 = vunpack.c.l.b16 %v1067
      %v1521 = vunpack.c.l.b16 %v1068
      %v1522 = vunpack.c.h.b16 %v1068
      %v1523 = vunpack.c.l.b16 %v1069
      %v1524 = vunpack.c.l.b16 %v1070
      %v1525 = vunpack.c.h.b16 %v1070
      %v1526 = vunpack.c.l.b16 %v1071
      %v1527 = vunpack.c.l.b16 %v1072
      %v1528 = vunpack.c.h.b16 %v1072
      %v1529 = vunpack.c.l.b16 %v1073
      %v1530 = vunpack.c.l.b16 %v1074
      %v1531 = vunpack.c.h.b16 %v1074
      %v1532 = vunpack.c.l.b16 %v1075
      %v1533 = vunpack.c.l.b16 %v1076
      %v1534 = vunpack.c.h.b16 %v1076
      %v1535 = vunpack.c.l.b16 %v1077
      %v1536 = vunpack.c.l.b16 %v1078
      %v1537 = vunpack.c.h.b16 %v1078
      %v1538 = vunpack.c.l.b16 %v1079
      %v1539 = vunpack.c.l.b16 %v1080
      %v1540 = vunpack.c.h.b16 %v1080
      %v1541 = vunpack.c.l.b16 %v1081
      %v1542 = vunpack.c.l.b16 %v1082
      %v1543 = vunpack.c.h.b16 %v1082
      %v1544 = vunpack.c.l.b16 %v1083
      %v1545 = vunpack.c.l.b16 %v1084
      %v1546 = vunpack.c.h.b16 %v1084
      %v1547 = vunpack.c.l.b16 %v1085
      %v1548 = vunpack.c.l.b16 %v1086
      %v1549 = vunpack.c.h.b16 %v1086
      %v1550 = vunpack.c.l.b16 %v1087
      %v1551 = vunpack.c.l.b16 %v1088
      %v1552 = vunpack.c.h.b16 %v1088
      %v1553 = vunpack.c.l.b16 %v1089
      %v1554 = vunpack.c.l.b16 %v1090
      %v1555 = vunpack.c.h.b16 %v1090
      %v1556 = vunpack.c.l.b16 %v1091
      %v1557 = vunpack.c.l.b16 %v1092
      %v1558 = vunpack.c.h.b16 %v1092
      %v1559 = vunpack.c.l.b16 %v1093
      %v1560 = vunpack.c.l.b16 %v1094
      %v1561 = vunpack.c.h.b16 %v1094
      %v1562 = vunpack.c.l.b16 %v1095
      %v1563 = vunpack.c.l.b16 %v1096
      %v1564 = vunpack.c.h.b16 %v1096
      %v1565 = vunpack.c.l.b16 %v1097
      %v1566 = vunpack.c.l.b16 %v1098
      %v1567 = vunpack.c.h.b16 %v1098
      %v1568 = vunpack.c.l.b16 %v1099
      %v1569 = vunpack.c.l.b16 %v1100
      %v1570 = vunpack.c.h.b16 %v1100
      %v1571 = vunpack.c.l.b16 %v1101
      %v1572 = vunpack.c.l.b16 %v1102
      %v1573 = vunpack.c.h.b16 %v1102
      %v1574 = vunpack.c.l.b16 %v1103
      %v1575 = vunpack.c.l.b16 %v1104
      %v1576 = vunpack.c.h.b16 %v1104
      %v1577 = vunpack.c.l.b16 %v1105
      %v1578 = vunpack.c.l.b16 %v1106
      %v1579 = vunpack.c.h.b16 %v1106
      %v1580 = vunpack.c.l.b16 %v1107
      %v1581 = vunpack.c.l.b16 %v1108
      %v1582 = vunpack.c.h.b16 %v1108
      %v1583 = vunpack.c.l.b16 %v1109
      %v1584 = vunpack.c.l.b16 %v1110
      %v1585 = vunpack.c.h.b16 %v1110
      %v1586 = vunpack.c.l.b16 %v1111
      %v1587 = vunpack.c.l.b16 %v1112
      %v1588 = vunpack.c.h.b16 %v1112
      %v1589 = vunpack.c.l.b16 %v1113
      %v1590 = vunpack.c.l.b16 %v1114
      %v1591 = vunpack.c.h.b16 %v1114
      %v1592 = vunpack.c.l.b16 %v1115
      %v1593 = vunpack.c.l.b16 %v1116
      %v1594 = vunpack.c.h.b16 %v1116
      %v1595 = vunpack.c.l.b16 %v1117
      %v1596 = vunpack.c.l.b16 %v1118
      %v1597 = vunpack.c.h.b16 %v1118
      %v1598 = vunpack.c.l.b16 %v1119
      %v1599 = vunpack.c.l.b16 %v1120
      %v1600 = vunpack.c.h.b16 %v1120
      %v1601 = vunpack.c.l.b16 %v1121
      %v1602 = vpack.c.b16 %v1317, %v1314
      %v1603 = vpack.c.b16 %v1318, %v1315
      %v1604 = vpack.c.b16 %v1319, %v1316
      %v1605 = vpack.c.b16 %v1323, %v1320
      %v1606 = vpack.c.b16 %v1324, %v1321
      %v1607 = vpack.c.b16 %v1325, %v1322
      %v1608 = vpack.c.b16 %v1329, %v1326
      %v1609 = vpack.c.b16 %v1330, %v1327
      %v1610 = vpack.c.b16 %v1331, %v1328
      %v1611 = vpack.c.b16 %v1335, %v1332
      %v1612 = vpack.c.b16 %v1336, %v1333
      %v1613 = vpack.c.b16 %v1337, %v1334
      %v1614 = vpack.c.b16 %v1341, %v1338
      %v1615 = vpack.c.b16 %v1342, %v1339
      %v1616 = vpack.c.b16 %v1343, %v1340
      %v1617 = vpack.c.b16 %v1347, %v1344
      %v1618 = vpack.c.b16 %v1348, %v1345
      %v1619 = vpack.c.b16 %v1349, %v1346
      %v1620 = vpack.c.b16 %v1353, %v1350
      %v1621 = vpack.c.b16 %v1354, %v1351
      %v1622 = vpack.c.b16 %v1355, %v1352
      %v1623 = vpack.c.b16 %v1359, %v1356
      %v1624 = vpack.c.b16 %v1360, %v1357
      %v1625 = vpack.c.b16 %v1361, %v1358
      %v1626 = vpack.c.b16 %v1365, %v1362
      %v1627 = vpack.c.b16 %v1366, %v1363
      %v1628 = vpack.c.b16 %v1367, %v1364
      %v1629 = vpack.c.b16 %v1371, %v1368
      %v1630 = vpack.c.b16 %v1372, %v1369
      %v1631 = vpack.c.b16 %v1373, %v1370
      %v1632 = vpack.c.b16 %v1377, %v1374
      %v1633 = vpack.c.b16 %v1378, %v1375
      %v1634 = vpack.c.b16 %v1379, %v1376
      %v1635 = vpack.c.b16 %v1383, %v1380
      %v1636 = vpack.c.b16 %v1384, %v1381
      %v1637 = vpack.c.b16 %v1385, %v1382
      %v1638 = vpack.c.b16 %v1389, %v1386
      %v1639 = vpack.c.b16 %v1390, %v1387
      %v1640 = vpack.c.b16 %v1391, %v1388
      %v1641 = vpack.c.b16 %v1395, %v1392
      %v1642 = vpack.c.b16 %v1396, %v1393
      %v1643 = vpack.c.b16 %v1397, %v1394
      %v1644 = vpack.c.b16 %v1401, %v1398
      %v1645 = vpack.c.b16 %v1402, %v1399
      %v1646 = vpack.c.b16 %v1403, %v1400
      %v1647 = vpack.c.b16 %v1407, %v1404
      %v1648 = vpack.c.b16 %v1408, %v1405
      %v1649 = vpack.c.b16 %v1409, %v1406
      %v1650 = vpack.c.b16 %v1413, %v1410
      %v1651 = vpack.c.b16 %v1414, %v1411
      %v1652 = vpack.c.b16 %v1415, %v1412
      %v1653 = vpack.c.b16 %v1419, %v1416
      %v1654 = vpack.c.b16 %v1420, %v1417
      %v1655 = vpack.c.b16 %v1421, %v1418
      %v1656 = vpack.c.b16 %v1425, %v1422
      %v1657 = vpack.c.b16 %v1426, %v1423
      %v1658 = vpack.c.b16 %v1427, %v1424
      %v1659 = vpack.c.b16 %v1431, %v1428
      %v1660 = vpack.c.b16 %v1432, %v1429
      %v1661 = vpack.c.b16 %v1433, %v1430
      %v1662 = vpack.c.b16 %v1437, %v1434
      %v1663 = vpack.c.b16 %v1438, %v1435
      %v1664 = vpack.c.b16 %v1439, %v1436
      %v1665 = vpack.c.b16 %v1443, %v1440
      %v1666 = vpack.c.b16 %v1444, %v1441
      %v1667 = vpack.c.b16 %v1445, %v1442
      %v1668 = vpack.c.b16 %v1449, %v1446
      %v1669 = vpack.c.b16 %v1450, %v1447
      %v1670 = vpack.c.b16 %v1451, %v1448
      %v1671 = vpack.c.b16 %v1455, %v1452
      %v1672 = vpack.c.b16 %v1456, %v1453
      %v1673 = vpack.c.b16 %v1457, %v1454
      %v1674 = vpack.c.b16 %v1461, %v1458
      %v1675 = vpack.c.b16 %v1462, %v1459
      %v1676 = vpack.c.b16 %v1463, %v1460
      %v1677 = vpack.c.b16 %v1467, %v1464
      %v1678 = vpack.c.b16 %v1468, %v1465
      %v1679 = vpack.c.b16 %v1469, %v1466
      %v1680 = vpack.c.b16 %v1473, %v1470
      %v1681 = vpack.c.b16 %v1474, %v1471
      %v1682 = vpack.c.b16 %v1475, %v1472
      %v1683 = vpack.c.b16 %v1479, %v1476
      %v1684 = vpack.c.b16 %v1480, %v1477
      %v1685 = vpack.c.b16 %v1481, %v1478
      %v1686 = vpack.c.b16 %v1485, %v1482
      %v1687 = vpack.c.b16 %v1486, %v1483
      %v1688 = vpack.c.b16 %v1487, %v1484
      %v1689 = vpack.c.b16 %v1491, %v1488
      %v1690 = vpack.c.b16 %v1492, %v1489
      %v1691 = vpack.c.b16 %v1493, %v1490
      %v1692 = vpack.c.b16 %v1497, %v1494
      %v1693 = vpack.c.b16 %v1498, %v1495
      %v1694 = vpack.c.b16 %v1499, %v1496
      %v1695 = vpack.c.b16 %v1503, %v1500
      %v1696 = vpack.c.b16 %v1504, %v1501
      %v1697 = vpack.c.b16 %v1505, %v1502
      %v1698 = vpack.c.b16 %v1509, %v1506
      %v1699 = vpack.c.b16 %v1510, %v1507
      %v1700 = vpack.c.b16 %v1511, %v1508
      %v1701 = vpack.c.b16 %v1515, %v1512
      %v1702 = vpack.c.b16 %v1516, %v1513
      %v1703 = vpack.c.b16 %v1517, %v1514
      %v1704 = vpack.c.b16 %v1521, %v1518
      %v1705 = vpack.c.b16 %v1522, %v1519
      %v1706 = vpack.c.b16 %v1523, %v1520
      %v1707 = vpack.c.b16 %v1527, %v1524
      %v1708 = vpack.c.b16 %v1528, %v1525
      %v1709 = vpack.c.b16 %v1529, %v1526
      %v1710 = vpack.c.b16 %v1533, %v1530
      %v1711 = vpack.c.b16 %v1534, %v1531
      %v1712 = vpack.c.b16 %v1535, %v1532
      %v1713 = vpack.c.b16 %v1539, %v1536
      %v1714 = vpack.c.b16 %v1540, %v1537
      %v1715 = vpack.c.b16 %v1541, %v1538
      %v1716 = vpack.c.b16 %v1545, %v1542
      %v1717 = vpack.c.b16 %v1546, %v1543
      %v1718 = vpack.c.b16 %v1547, %v1544
      %v1719 = vpack.c.b16 %v1551, %v1548
      %v1720 = vpack.c.b16 %v1552, %v1549
      %v1721 = vpack.c.b16 %v1553, %v1550
      %v1722 = vpack.c.b16 %v1557, %v1554
      %v1723 = vpack.c.b16 %v1558, %v1555
      %v1724 = vpack.c.b16 %v1559, %v1556
      %v1725 = vpack.c.b16 %v1563, %v1560
      %v1726 = vpack.c.b16 %v1564, %v1561
      %v1727 = vpack.c.b16 %v1565, %v1562
      %v1728 = vpack.c.b16 %v1569, %v1566
      %v1729 = vpack.c.b16 %v1570, %v1567
      %v1730 = vpack.c.b16 %v1571, %v1568
      %v1731 = vpack.c.b16 %v1575, %v1572
      %v1732 = vpack.c.b16 %v1576, %v1573
      %v1733 = vpack.c.b16 %v1577, %v1574
      %v1734 = vpack.c.b16 %v1581, %v1578
      %v1735 = vpack.c.b16 %v1582, %v1579
      %v1736 = vpack.c.b16 %v1583, %v1580
      %v1737 = vpack.c.b16 %v1587, %v1584
      %v1738 = vpack.c.b16 %v1588, %v1585
      %v1739 = vpack.c.b16 %v1589, %v1586
      %v1740 = vpack.c.b16 %v1593, %v1590
      %v1741 = vpack.c.b16 %v1594, %v1591
      %v1742 = vpack.c.b16 %v1595, %v1592
      %v1743 = vpack.c.b16 %v1599, %v1596
      %v1744 = vpack.c.b16 %v1600, %v1597
      %v1745 = vpack.c.b16 %v1601, %v1598
      %1890 = vmatpush.bf16.msra.mxu0 %v1623
      %1891 = vmatpush.bf16.msra.mxu0 %v1620
      %1892 = vmatpush.bf16.msra.mxu0 %v1617
      %1893 = vmatpush.bf16.msra.mxu0 %v1614
      %1894 = vmatpush.bf16.msra.mxu0 %v1611
      %1895 = vmatpush.bf16.msra.mxu0 %v1608
      %1896 = vmatpush.bf16.msra.mxu0 %v1605
      %1897 = vmatpush.bf16.msra.mxu0 %v1602
      %1898 = vmatmul.bf16.gmra.mxu0 %v918
      %v1899 = vpop.f32.mrf.mxu0
      %v1900 = vadd.f32 0.0, %v1899
      %v1901 = vpop.f32.mrf.mxu0
      %v1902 = vadd.f32 0.0, %v1901
      %1903 = vmatmul.bf16.gmra.mxu0 %v924
      %v1904 = vpop.f32.mrf.mxu0
      %v1905 = vadd.f32 0.0, %v1904
      %v1906 = vpop.f32.mrf.mxu0
      %v1907 = vadd.f32 0.0, %v1906
      %1908 = vdwg.mxu0
      %1909 = vmatpush.bf16.msra.mxu0 %v1647
      %1910 = vmatpush.bf16.msra.mxu0 %v1644
      %1911 = vmatpush.bf16.msra.mxu0 %v1641
      %1912 = vmatpush.bf16.msra.mxu0 %v1638
      %1913 = vmatpush.bf16.msra.mxu0 %v1635
      %1914 = vmatpush.bf16.msra.mxu0 %v1632
      %1915 = vmatpush.bf16.msra.mxu0 %v1629
      %1916 = vmatpush.bf16.msra.mxu0 %v1626
      %1917 = vmatmul.bf16.gmra.mxu0 %v919
      %v1918 = vpop.f32.mrf.mxu0
      %v1919 = vadd.f32 %v1900, %v1918
      %v1920 = vpop.f32.mrf.mxu0
      %v1921 = vadd.f32 %v1902, %v1920
      %1922 = vmatmul.bf16.gmra.mxu0 %v925
      %v1923 = vpop.f32.mrf.mxu0
      %v1924 = vadd.f32 %v1905, %v1923
      %v1925 = vpop.f32.mrf.mxu0
      %v1926 = vadd.f32 %v1907, %v1925
      %1927 = vdwg.mxu0
      %1928 = vmatpush.bf16.msra.mxu0 %v1671
      %1929 = vmatpush.bf16.msra.mxu0 %v1668
      %1930 = vmatpush.bf16.msra.mxu0 %v1665
      %1931 = vmatpush.bf16.msra.mxu0 %v1662
      %1932 = vmatpush.bf16.msra.mxu0 %v1659
      %1933 = vmatpush.bf16.msra.mxu0 %v1656
      %1934 = vmatpush.bf16.msra.mxu0 %v1653
      %1935 = vmatpush.bf16.msra.mxu0 %v1650
      %1936 = vmatmul.bf16.gmra.mxu0 %v920
      %v1937 = vpop.f32.mrf.mxu0
      %v1938 = vadd.f32 %v1919, %v1937
      %v1939 = vpop.f32.mrf.mxu0
      %v1940 = vadd.f32 %v1921, %v1939
      %1941 = vmatmul.bf16.gmra.mxu0 %v926
      %v1942 = vpop.f32.mrf.mxu0
      %v1943 = vadd.f32 %v1924, %v1942
      %v1944 = vpop.f32.mrf.mxu0
      %v1945 = vadd.f32 %v1926, %v1944
      %1946 = vdwg.mxu0
      %1947 = vmatpush.bf16.msra.mxu0 %v1695
      %1948 = vmatpush.bf16.msra.mxu0 %v1692
      %1949 = vmatpush.bf16.msra.mxu0 %v1689
      %1950 = vmatpush.bf16.msra.mxu0 %v1686
      %1951 = vmatpush.bf16.msra.mxu0 %v1683
      %1952 = vmatpush.bf16.msra.mxu0 %v1680
      %1953 = vmatpush.bf16.msra.mxu0 %v1677
      %1954 = vmatpush.bf16.msra.mxu0 %v1674
      %1955 = vmatmul.bf16.gmra.mxu0 %v921
      %v1956 = vpop.f32.mrf.mxu0
      %v1957 = vadd.f32 %v1938, %v1956
      %v1958 = vpop.f32.mrf.mxu0
      %v1959 = vadd.f32 %v1940, %v1958
      %1960 = vmatmul.bf16.gmra.mxu0 %v927
      %v1961 = vpop.f32.mrf.mxu0
      %v1962 = vadd.f32 %v1943, %v1961
      %v1963 = vpop.f32.mrf.mxu0
      %v1964 = vadd.f32 %v1945, %v1963
      %1965 = vdwg.mxu0
      %1966 = vmatpush.bf16.msra.mxu0 %v1719
      %1967 = vmatpush.bf16.msra.mxu0 %v1716
      %1968 = vmatpush.bf16.msra.mxu0 %v1713
      %1969 = vmatpush.bf16.msra.mxu0 %v1710
      %1970 = vmatpush.bf16.msra.mxu0 %v1707
      %1971 = vmatpush.bf16.msra.mxu0 %v1704
      %1972 = vmatpush.bf16.msra.mxu0 %v1701
      %1973 = vmatpush.bf16.msra.mxu0 %v1698
      %1974 = vmatmul.bf16.gmra.mxu0 %v922
      %v1975 = vpop.f32.mrf.mxu0
      %v1976 = vadd.f32 %v1957, %v1975
      %v1977 = vpop.f32.mrf.mxu0
      %v1978 = vadd.f32 %v1959, %v1977
      %1979 = vmatmul.bf16.gmra.mxu0 %v928
      %v1980 = vpop.f32.mrf.mxu0
      %v1981 = vadd.f32 %v1962, %v1980
      %v1982 = vpop.f32.mrf.mxu0
      %v1983 = vadd.f32 %v1964, %v1982
      %1984 = vdwg.mxu0
      %1985 = vmatpush.bf16.msra.mxu0 %v1743
      %1986 = vmatpush.bf16.msra.mxu0 %v1740
      %1987 = vmatpush.bf16.msra.mxu0 %v1737
      %1988 = vmatpush.bf16.msra.mxu0 %v1734
      %1989 = vmatpush.bf16.msra.mxu0 %v1731
      %1990 = vmatpush.bf16.msra.mxu0 %v1728
      %1991 = vmatpush.bf16.msra.mxu0 %v1725
      %1992 = vmatpush.bf16.msra.mxu0 %v1722
      %1993 = vmatmul.bf16.gmra.mxu0 %v923
      %v1994 = vpop.f32.mrf.mxu0
      %v1995 = vadd.f32 %v1976, %v1994
      %v1996 = vpop.f32.mrf.mxu0
      %v1997 = vadd.f32 %v1978, %v1996
      %1998 = vmatmul.bf16.gmra.mxu0 %v929
      %v1999 = vpop.f32.mrf.mxu0
      %v2000 = vadd.f32 %v1981, %v1999
      %v2001 = vpop.f32.mrf.mxu0
      %v2002 = vadd.f32 %v1983, %v2001
      %2003 = vdwg.mxu0
      %2004 = vmatpush.bf16.msra.mxu0 %v1624
      %2005 = vmatpush.bf16.msra.mxu0 %v1621
      %2006 = vmatpush.bf16.msra.mxu0 %v1618
      %2007 = vmatpush.bf16.msra.mxu0 %v1615
      %2008 = vmatpush.bf16.msra.mxu0 %v1612
      %2009 = vmatpush.bf16.msra.mxu0 %v1609
      %2010 = vmatpush.bf16.msra.mxu0 %v1606
      %2011 = vmatpush.bf16.msra.mxu0 %v1603
      %2012 = vmatmul.bf16.gmra.mxu0 %v918
      %v2013 = vpop.f32.mrf.mxu0
      %v2014 = vadd.f32 0.0, %v2013
      %v2015 = vpop.f32.mrf.mxu0
      %v2016 = vadd.f32 0.0, %v2015
      %2017 = vmatmul.bf16.gmra.mxu0 %v924
      %v2018 = vpop.f32.mrf.mxu0
      %v2019 = vadd.f32 0.0, %v2018
      %v2020 = vpop.f32.mrf.mxu0
      %v2021 = vadd.f32 0.0, %v2020
      %2022 = vdwg.mxu0
      %2023 = vmatpush.bf16.msra.mxu0 %v1648
      %2024 = vmatpush.bf16.msra.mxu0 %v1645
      %2025 = vmatpush.bf16.msra.mxu0 %v1642
      %2026 = vmatpush.bf16.msra.mxu0 %v1639
      %2027 = vmatpush.bf16.msra.mxu0 %v1636
      %2028 = vmatpush.bf16.msra.mxu0 %v1633
      %2029 = vmatpush.bf16.msra.mxu0 %v1630
      %2030 = vmatpush.bf16.msra.mxu0 %v1627
      %2031 = vmatmul.bf16.gmra.mxu0 %v919
      %v2032 = vpop.f32.mrf.mxu0
      %v2033 = vadd.f32 %v2014, %v2032
      %v2034 = vpop.f32.mrf.mxu0
      %v2035 = vadd.f32 %v2016, %v2034
      %2036 = vmatmul.bf16.gmra.mxu0 %v925
      %v2037 = vpop.f32.mrf.mxu0
      %v2038 = vadd.f32 %v2019, %v2037
      %v2039 = vpop.f32.mrf.mxu0
      %v2040 = vadd.f32 %v2021, %v2039
      %2041 = vdwg.mxu0
      %2042 = vmatpush.bf16.msra.mxu0 %v1672
      %2043 = vmatpush.bf16.msra.mxu0 %v1669
      %2044 = vmatpush.bf16.msra.mxu0 %v1666
      %2045 = vmatpush.bf16.msra.mxu0 %v1663
      %2046 = vmatpush.bf16.msra.mxu0 %v1660
      %2047 = vmatpush.bf16.msra.mxu0 %v1657
      %2048 = vmatpush.bf16.msra.mxu0 %v1654
      %2049 = vmatpush.bf16.msra.mxu0 %v1651
      %2050 = vmatmul.bf16.gmra.mxu0 %v920
      %v2051 = vpop.f32.mrf.mxu0
      %v2052 = vadd.f32 %v2033, %v2051
      %v2053 = vpop.f32.mrf.mxu0
      %v2054 = vadd.f32 %v2035, %v2053
      %2055 = vmatmul.bf16.gmra.mxu0 %v926
      %v2056 = vpop.f32.mrf.mxu0
      %v2057 = vadd.f32 %v2038, %v2056
      %v2058 = vpop.f32.mrf.mxu0
      %v2059 = vadd.f32 %v2040, %v2058
      %2060 = vdwg.mxu0
      %2061 = vmatpush.bf16.msra.mxu0 %v1696
      %2062 = vmatpush.bf16.msra.mxu0 %v1693
      %2063 = vmatpush.bf16.msra.mxu0 %v1690
      %2064 = vmatpush.bf16.msra.mxu0 %v1687
      %2065 = vmatpush.bf16.msra.mxu0 %v1684
      %2066 = vmatpush.bf16.msra.mxu0 %v1681
      %2067 = vmatpush.bf16.msra.mxu0 %v1678
      %2068 = vmatpush.bf16.msra.mxu0 %v1675
      %2069 = vmatmul.bf16.gmra.mxu0 %v921
      %v2070 = vpop.f32.mrf.mxu0
      %v2071 = vadd.f32 %v2052, %v2070
      %v2072 = vpop.f32.mrf.mxu0
      %v2073 = vadd.f32 %v2054, %v2072
      %2074 = vmatmul.bf16.gmra.mxu0 %v927
      %v2075 = vpop.f32.mrf.mxu0
      %v2076 = vadd.f32 %v2057, %v2075
      %v2077 = vpop.f32.mrf.mxu0
      %v2078 = vadd.f32 %v2059, %v2077
      %2079 = vdwg.mxu0
      %2080 = vmatpush.bf16.msra.mxu0 %v1720
      %2081 = vmatpush.bf16.msra.mxu0 %v1717
      %2082 = vmatpush.bf16.msra.mxu0 %v1714
      %2083 = vmatpush.bf16.msra.mxu0 %v1711
      %2084 = vmatpush.bf16.msra.mxu0 %v1708
      %2085 = vmatpush.bf16.msra.mxu0 %v1705
      %2086 = vmatpush.bf16.msra.mxu0 %v1702
      %2087 = vmatpush.bf16.msra.mxu0 %v1699
      %2088 = vmatmul.bf16.gmra.mxu0 %v922
      %v2089 = vpop.f32.mrf.mxu0
      %v2090 = vadd.f32 %v2071, %v2089
      %v2091 = vpop.f32.mrf.mxu0
      %v2092 = vadd.f32 %v2073, %v2091
      %2093 = vmatmul.bf16.gmra.mxu0 %v928
      %v2094 = vpop.f32.mrf.mxu0
      %v2095 = vadd.f32 %v2076, %v2094
      %v2096 = vpop.f32.mrf.mxu0
      %v2097 = vadd.f32 %v2078, %v2096
      %2098 = vdwg.mxu0
      %2099 = vmatpush.bf16.msra.mxu0 %v1744
      %2100 = vmatpush.bf16.msra.mxu0 %v1741
      %2101 = vmatpush.bf16.msra.mxu0 %v1738
      %2102 = vmatpush.bf16.msra.mxu0 %v1735
      %2103 = vmatpush.bf16.msra.mxu0 %v1732
      %2104 = vmatpush.bf16.msra.mxu0 %v1729
      %2105 = vmatpush.bf16.msra.mxu0 %v1726
      %2106 = vmatpush.bf16.msra.mxu0 %v1723
      %2107 = vmatmul.bf16.gmra.mxu0 %v923
      %v2108 = vpop.f32.mrf.mxu0
      %v2109 = vadd.f32 %v2090, %v2108
      %v2110 = vpop.f32.mrf.mxu0
      %v2111 = vadd.f32 %v2092, %v2110
      %2112 = vmatmul.bf16.gmra.mxu0 %v929
      %v2113 = vpop.f32.mrf.mxu0
      %v2114 = vadd.f32 %v2095, %v2113
      %v2115 = vpop.f32.mrf.mxu0
      %v2116 = vadd.f32 %v2097, %v2115
      %2117 = vdwg.mxu0
      %2118 = vmatpush.bf16.msra.mxu0 %v1625
      %2119 = vmatpush.bf16.msra.mxu0 %v1622
      %2120 = vmatpush.bf16.msra.mxu0 %v1619
      %2121 = vmatpush.bf16.msra.mxu0 %v1616
      %2122 = vmatpush.bf16.msra.mxu0 %v1613
      %2123 = vmatpush.bf16.msra.mxu0 %v1610
      %2124 = vmatpush.bf16.msra.mxu0 %v1607
      %2125 = vmatpush.bf16.msra.mxu0 %v1604
      %2126 = vmatmul.bf16.gmra.mxu0 %v918
      %v2127 = vpop.f32.mrf.mxu0
      %v2128 = vadd.f32 0.0, %v2127
      %v2129 = vpop.f32.mrf.mxu0
      %v2130 = vadd.f32 0.0, %v2129
      %2131 = vmatmul.bf16.gmra.mxu0 %v924
      %v2132 = vpop.f32.mrf.mxu0
      %v2133 = vadd.f32 0.0, %v2132
      %v2134 = vpop.f32.mrf.mxu0
      %v2135 = vadd.f32 0.0, %v2134
      %2136 = vdwg.mxu0
      %2137 = vmatpush.bf16.msra.mxu0 %v1649
      %2138 = vmatpush.bf16.msra.mxu0 %v1646
      %2139 = vmatpush.bf16.msra.mxu0 %v1643
      %2140 = vmatpush.bf16.msra.mxu0 %v1640
      %2141 = vmatpush.bf16.msra.mxu0 %v1637
      %2142 = vmatpush.bf16.msra.mxu0 %v1634
      %2143 = vmatpush.bf16.msra.mxu0 %v1631
      %2144 = vmatpush.bf16.msra.mxu0 %v1628
      %2145 = vmatmul.bf16.gmra.mxu0 %v919
      %v2146 = vpop.f32.mrf.mxu0
      %v2147 = vadd.f32 %v2128, %v2146
      %v2148 = vpop.f32.mrf.mxu0
      %v2149 = vadd.f32 %v2130, %v2148
      %2150 = vmatmul.bf16.gmra.mxu0 %v925
      %v2151 = vpop.f32.mrf.mxu0
      %v2152 = vadd.f32 %v2133, %v2151
      %v2153 = vpop.f32.mrf.mxu0
      %v2154 = vadd.f32 %v2135, %v2153
      %2155 = vdwg.mxu0
      %2156 = vmatpush.bf16.msra.mxu0 %v1673
      %2157 = vmatpush.bf16.msra.mxu0 %v1670
      %2158 = vmatpush.bf16.msra.mxu0 %v1667
      %2159 = vmatpush.bf16.msra.mxu0 %v1664
      %2160 = vmatpush.bf16.msra.mxu0 %v1661
      %2161 = vmatpush.bf16.msra.mxu0 %v1658
      %2162 = vmatpush.bf16.msra.mxu0 %v1655
      %2163 = vmatpush.bf16.msra.mxu0 %v1652
      %2164 = vmatmul.bf16.gmra.mxu0 %v920
      %v2165 = vpop.f32.mrf.mxu0
      %v2166 = vadd.f32 %v2147, %v2165
      %v2167 = vpop.f32.mrf.mxu0
      %v2168 = vadd.f32 %v2149, %v2167
      %2169 = vmatmul.bf16.gmra.mxu0 %v926
      %v2170 = vpop.f32.mrf.mxu0
      %v2171 = vadd.f32 %v2152, %v2170
      %v2172 = vpop.f32.mrf.mxu0
      %v2173 = vadd.f32 %v2154, %v2172
      %2174 = vdwg.mxu0
      %2175 = vmatpush.bf16.msra.mxu0 %v1697
      %2176 = vmatpush.bf16.msra.mxu0 %v1694
      %2177 = vmatpush.bf16.msra.mxu0 %v1691
      %2178 = vmatpush.bf16.msra.mxu0 %v1688
      %2179 = vmatpush.bf16.msra.mxu0 %v1685
      %2180 = vmatpush.bf16.msra.mxu0 %v1682
      %2181 = vmatpush.bf16.msra.mxu0 %v1679
      %2182 = vmatpush.bf16.msra.mxu0 %v1676
      %2183 = vmatmul.bf16.gmra.mxu0 %v921
      %v2184 = vpop.f32.mrf.mxu0
      %v2185 = vadd.f32 %v2166, %v2184
      %v2186 = vpop.f32.mrf.mxu0
      %v2187 = vadd.f32 %v2168, %v2186
      %2188 = vmatmul.bf16.gmra.mxu0 %v927
      %v2189 = vpop.f32.mrf.mxu0
      %v2190 = vadd.f32 %v2171, %v2189
      %v2191 = vpop.f32.mrf.mxu0
      %v2192 = vadd.f32 %v2173, %v2191
      %2193 = vdwg.mxu0
      %2194 = vmatpush.bf16.msra.mxu0 %v1721
      %2195 = vmatpush.bf16.msra.mxu0 %v1718
      %2196 = vmatpush.bf16.msra.mxu0 %v1715
      %2197 = vmatpush.bf16.msra.mxu0 %v1712
      %2198 = vmatpush.bf16.msra.mxu0 %v1709
      %2199 = vmatpush.bf16.msra.mxu0 %v1706
      %2200 = vmatpush.bf16.msra.mxu0 %v1703
      %2201 = vmatpush.bf16.msra.mxu0 %v1700
      %2202 = vmatmul.bf16.gmra.mxu0 %v922
      %v2203 = vpop.f32.mrf.mxu0
      %v2204 = vadd.f32 %v2185, %v2203
      %v2205 = vpop.f32.mrf.mxu0
      %v2206 = vadd.f32 %v2187, %v2205
      %2207 = vmatmul.bf16.gmra.mxu0 %v928
      %v2208 = vpop.f32.mrf.mxu0
      %v2209 = vadd.f32 %v2190, %v2208
      %v2210 = vpop.f32.mrf.mxu0
      %v2211 = vadd.f32 %v2192, %v2210
      %2212 = vdwg.mxu0
      %2213 = vmatpush.bf16.msra.mxu0 %v1745
      %2214 = vmatpush.bf16.msra.mxu0 %v1742
      %2215 = vmatpush.bf16.msra.mxu0 %v1739
      %2216 = vmatpush.bf16.msra.mxu0 %v1736
      %2217 = vmatpush.bf16.msra.mxu0 %v1733
      %2218 = vmatpush.bf16.msra.mxu0 %v1730
      %2219 = vmatpush.bf16.msra.mxu0 %v1727
      %2220 = vmatpush.bf16.msra.mxu0 %v1724
      %2221 = vmatmul.bf16.gmra.mxu0 %v923
      %v2222 = vpop.f32.mrf.mxu0
      %v2223 = vadd.f32 %v2204, %v2222
      %v2224 = vpop.f32.mrf.mxu0
      %v2225 = vadd.f32 %v2206, %v2224
      %2226 = vmatmul.bf16.gmra.mxu0 %v929
      %v2227 = vpop.f32.mrf.mxu0
      %v2228 = vadd.f32 %v2209, %v2227
      %v2229 = vpop.f32.mrf.mxu0
      %v2230 = vadd.f32 %v2211, %v2229
      %2231 = vdwg.mxu0
      %v2232 = vpack.c.bf16 %v2109, %v1995
      %v2233 = vpack.c.bf16 %v2223, %v2223
      %v2234 = vpack.c.bf16 %v2111, %v1997
      %v2235 = vpack.c.bf16 %v2225, %v2225
      %v2236 = vpack.c.bf16 %v2114, %v2000
      %v2237 = vpack.c.bf16 %v2228, %v2228
      %v2238 = vpack.c.bf16 %v2116, %v2002
      %v2239 = vpack.c.bf16 %v2230, %v2230
      %2240 = vst [vmem:[#allocation2] sm:$0xff] %v2232
      %2241 = vst [vmem:[#allocation2 + $0x8] sm:$0xff] %v2234
      %2242 = vst [vmem:[#allocation2 + $0x10] sm:$0xff] %v2236
      %2243 = vst [vmem:[#allocation2 + $0x18] sm:$0xff] %v2238
      %2252 = vrot.lane.b32.xlu0 %v2232, 127
      %v2253 = vpop.permute.xlu0 %2252
      %2254 = vrot.lane.b32.xlu0 %v2233, 127
      %v2255 = vpop.permute.xlu0 %2254
      %2256 = vrot.lane.b32.xlu0 %v2234, 127
      %v2257 = vpop.permute.xlu0 %2256
      %2258 = vrot.lane.b32.xlu0 %v2235, 127
      %v2259 = vpop.permute.xlu0 %2258
      %2260 = vrot.lane.b32.xlu0 %v2236, 127
      %v2261 = vpop.permute.xlu0 %2260
      %2262 = vrot.lane.b32.xlu0 %v2237, 127
      %v2263 = vpop.permute.xlu0 %2262
      %2264 = vrot.lane.b32.xlu0 %v2238, 127
      %v2265 = vpop.permute.xlu0 %2264
      %2266 = vrot.lane.b32.xlu0 %v2239, 127
      %v2267 = vpop.permute.xlu0 %2266
      %v2268 = vrot.slane %v2253, 4
      %v2269 = vrot.slane %v2255, 4
      %v2270 = vrot.slane %v2257, 4
      %v2271 = vrot.slane %v2259, 4
      %v2272 = vrot.slane %v2261, 4
      %v2273 = vrot.slane %v2263, 4
      %v2274 = vrot.slane %v2265, 4
      %v2275 = vrot.slane %v2267, 4
      %vm2276 = vcmask 1043456
      %v2277 = vsel %vm2276, %v2268, %v2269
      %vm2278 = vcmask 1039360
      %v2279 = vsel %vm2278, %v2253, %v2277
      %v2280 = vsel %vm2276, %v2270, %v2271
      %v2281 = vsel %vm2278, %v2257, %v2280
      %v2282 = vsel %vm2276, %v2272, %v2273
      %v2283 = vsel %vm2278, %v2261, %v2282
      %v2284 = vsel %vm2276, %v2274, %v2275
      %v2285 = vsel %vm2278, %v2265, %v2284
      %2290 = vst [vmem:[#allocation2 + $0x20] sm:$0xff] %v2279
      %2291 = vst [vmem:[#allocation2 + $0x28] sm:$0xff] %v2281
      %2292 = vst [vmem:[#allocation2 + $0x30] sm:$0xff] %v2283
      %2293 = vst [vmem:[#allocation2 + $0x38] sm:$0xff] %v2285
      %2294 = vrot.lane.b32.xlu0 %v2232, 126
      %v2295 = vpop.permute.xlu0 %2294
      %2296 = vrot.lane.b32.xlu0 %v2233, 126
      %v2297 = vpop.permute.xlu0 %2296
      %2298 = vrot.lane.b32.xlu0 %v2234, 126
      %v2299 = vpop.permute.xlu0 %2298
      %2300 = vrot.lane.b32.xlu0 %v2235, 126
      %v2301 = vpop.permute.xlu0 %2300
      %2302 = vrot.lane.b32.xlu0 %v2236, 126
      %v2303 = vpop.permute.xlu0 %2302
      %2304 = vrot.lane.b32.xlu0 %v2237, 126
      %v2305 = vpop.permute.xlu0 %2304
      %2306 = vrot.lane.b32.xlu0 %v2238, 126
      %v2307 = vpop.permute.xlu0 %2306
      %2308 = vrot.lane.b32.xlu0 %v2239, 126
      %v2309 = vpop.permute.xlu0 %2308
      %v2310 = vrot.slane %v2295, 4
      %v2311 = vrot.slane %v2297, 4
      %v2312 = vrot.slane %v2299, 4
      %v2313 = vrot.slane %v2301, 4
      %v2314 = vrot.slane %v2303, 4
      %v2315 = vrot.slane %v2305, 4
      %v2316 = vrot.slane %v2307, 4
      %v2317 = vrot.slane %v2309, 4
      %v2318 = vsel %vm2276, %v2310, %v2311
      %vm2319 = vcmask 1031168
      %v2320 = vsel %vm2319, %v2295, %v2318
      %v2321 = vsel %vm2276, %v2312, %v2313
      %v2322 = vsel %vm2319, %v2299, %v2321
      %v2323 = vsel %vm2276, %v2314, %v2315
      %v2324 = vsel %vm2319, %v2303, %v2323
      %v2325 = vsel %vm2276, %v2316, %v2317
      %v2326 = vsel %vm2319, %v2307, %v2325
      %2331 = vst [vmem:[#allocation2 + $0x40] sm:$0xff] %v2320
      %2332 = vst [vmem:[#allocation2 + $0x48] sm:$0xff] %v2322
      %2333 = vst [vmem:[#allocation2 + $0x50] sm:$0xff] %v2324
      %2334 = vst [vmem:[#allocation2 + $0x58] sm:$0xff] %v2326
      %2335 = vrot.lane.b32.xlu0 %v2232, 125
      %v2336 = vpop.permute.xlu0 %2335
      %2337 = vrot.lane.b32.xlu0 %v2233, 125
      %v2338 = vpop.permute.xlu0 %2337
      %2339 = vrot.lane.b32.xlu0 %v2234, 125
      %v2340 = vpop.permute.xlu0 %2339
      %2341 = vrot.lane.b32.xlu0 %v2235, 125
      %v2342 = vpop.permute.xlu0 %2341
      %2343 = vrot.lane.b32.xlu0 %v2236, 125
      %v2344 = vpop.permute.xlu0 %2343
      %2345 = vrot.lane.b32.xlu0 %v2237, 125
      %v2346 = vpop.permute.xlu0 %2345
      %2347 = vrot.lane.b32.xlu0 %v2238, 125
      %v2348 = vpop.permute.xlu0 %2347
      %2349 = vrot.lane.b32.xlu0 %v2239, 125
      %v2350 = vpop.permute.xlu0 %2349
      %v2351 = vrot.slane %v2336, 4
      %v2352 = vrot.slane %v2338, 4
      %v2353 = vrot.slane %v2340, 4
      %v2354 = vrot.slane %v2342, 4
      %v2355 = vrot.slane %v2344, 4
      %v2356 = vrot.slane %v2346, 4
      %v2357 = vrot.slane %v2348, 4
      %v2358 = vrot.slane %v2350, 4
      %v2359 = vsel %vm2276, %v2351, %v2352
      %vm2360 = vcmask 1022976
      %v2361 = vsel %vm2360, %v2336, %v2359
      %v2362 = vsel %vm2276, %v2353, %v2354
      %v2363 = vsel %vm2360, %v2340, %v2362
      %v2364 = vsel %vm2276, %v2355, %v2356
      %v2365 = vsel %vm2360, %v2344, %v2364
      %v2366 = vsel %vm2276, %v2357, %v2358
      %v2367 = vsel %vm2360, %v2348, %v2366
      %2372 = vst [vmem:[#allocation2 + $0x60] sm:$0xff] %v2361
      %2373 = vst [vmem:[#allocation2 + $0x68] sm:$0xff] %v2363
      %2374 = vst [vmem:[#allocation2 + $0x70] sm:$0xff] %v2365
      %2375 = vst [vmem:[#allocation2 + $0x78] sm:$0xff] %v2367
      %2376 = vrot.lane.b32.xlu0 %v2232, 124
      %v2377 = vpop.permute.xlu0 %2376
      %2378 = vrot.lane.b32.xlu0 %v2233, 124
      %v2379 = vpop.permute.xlu0 %2378
      %2380 = vrot.lane.b32.xlu0 %v2234, 124
      %v2381 = vpop.permute.xlu0 %2380
      %2382 = vrot.lane.b32.xlu0 %v2235, 124
      %v2383 = vpop.permute.xlu0 %2382
      %2384 = vrot.lane.b32.xlu0 %v2236, 124
      %v2385 = vpop.permute.xlu0 %2384
      %2386 = vrot.lane.b32.xlu0 %v2237, 124
      %v2387 = vpop.permute.xlu0 %2386
      %2388 = vrot.lane.b32.xlu0 %v2238, 124
      %v2389 = vpop.permute.xlu0 %2388
      %2390 = vrot.lane.b32.xlu0 %v2239, 124
      %v2391 = vpop.permute.xlu0 %2390
      %v2392 = vrot.slane %v2377, 4
      %v2393 = vrot.slane %v2379, 4
      %v2394 = vrot.slane %v2381, 4
      %v2395 = vrot.slane %v2383, 4
      %v2396 = vrot.slane %v2385, 4
      %v2397 = vrot.slane %v2387, 4
      %v2398 = vrot.slane %v2389, 4
      %v2399 = vrot.slane %v2391, 4
      %v2400 = vsel %vm2276, %v2392, %v2393
      %vm2401 = vcmask 1014784
      %v2402 = vsel %vm2401, %v2377, %v2400
      %v2403 = vsel %vm2276, %v2394, %v2395
      %v2404 = vsel %vm2401, %v2381, %v2403
      %v2405 = vsel %vm2276, %v2396, %v2397
      %v2406 = vsel %vm2401, %v2385, %v2405
      %v2407 = vsel %vm2276, %v2398, %v2399
      %v2408 = vsel %vm2401, %v2389, %v2407
      %2413 = vst [vmem:[#allocation2 + $0x80] sm:$0xff] %v2402
      %2414 = vst [vmem:[#allocation2 + $0x88] sm:$0xff] %v2404
      %2415 = vst [vmem:[#allocation2 + $0x90] sm:$0xff] %v2406
      %2416 = vst [vmem:[#allocation2 + $0x98] sm:$0xff] %v2408
      %2417 = vrot.lane.b32.xlu0 %v2232, 123
      %v2418 = vpop.permute.xlu0 %2417
      %2419 = vrot.lane.b32.xlu0 %v2233, 123
      %v2420 = vpop.permute.xlu0 %2419
      %2421 = vrot.lane.b32.xlu0 %v2234, 123
      %v2422 = vpop.permute.xlu0 %2421
      %2423 = vrot.lane.b32.xlu0 %v2235, 123
      %v2424 = vpop.permute.xlu0 %2423
      %2425 = vrot.lane.b32.xlu0 %v2236, 123
      %v2426 = vpop.permute.xlu0 %2425
      %2427 = vrot.lane.b32.xlu0 %v2237, 123
      %v2428 = vpop.permute.xlu0 %2427
      %2429 = vrot.lane.b32.xlu0 %v2238, 123
      %v2430 = vpop.permute.xlu0 %2429
      %2431 = vrot.lane.b32.xlu0 %v2239, 123
      %v2432 = vpop.permute.xlu0 %2431
      %v2433 = vrot.slane %v2418, 4
      %v2434 = vrot.slane %v2420, 4
      %v2435 = vrot.slane %v2422, 4
      %v2436 = vrot.slane %v2424, 4
      %v2437 = vrot.slane %v2426, 4
      %v2438 = vrot.slane %v2428, 4
      %v2439 = vrot.slane %v2430, 4
      %v2440 = vrot.slane %v2432, 4
      %v2441 = vsel %vm2276, %v2433, %v2434
      %vm2442 = vcmask 1006592
      %v2443 = vsel %vm2442, %v2418, %v2441
      %v2444 = vsel %vm2276, %v2435, %v2436
      %v2445 = vsel %vm2442, %v2422, %v2444
      %v2446 = vsel %vm2276, %v2437, %v2438
      %v2447 = vsel %vm2442, %v2426, %v2446
      %v2448 = vsel %vm2276, %v2439, %v2440
      %v2449 = vsel %vm2442, %v2430, %v2448
      %2454 = vst [vmem:[#allocation2 + $0xa0] sm:$0xff] %v2443
      %2455 = vst [vmem:[#allocation2 + $0xa8] sm:$0xff] %v2445
      %2456 = vst [vmem:[#allocation2 + $0xb0] sm:$0xff] %v2447
      %2457 = vst [vmem:[#allocation2 + $0xb8] sm:$0xff] %v2449
      %2458 = vrot.lane.b32.xlu0 %v2232, 122
      %v2459 = vpop.permute.xlu0 %2458
      %2460 = vrot.lane.b32.xlu0 %v2233, 122
      %v2461 = vpop.permute.xlu0 %2460
      %2462 = vrot.lane.b32.xlu0 %v2234, 122
      %v2463 = vpop.permute.xlu0 %2462
      %2464 = vrot.lane.b32.xlu0 %v2235, 122
      %v2465 = vpop.permute.xlu0 %2464
      %2466 = vrot.lane.b32.xlu0 %v2236, 122
      %v2467 = vpop.permute.xlu0 %2466
      %2468 = vrot.lane.b32.xlu0 %v2237, 122
      %v2469 = vpop.permute.xlu0 %2468
      %2470 = vrot.lane.b32.xlu0 %v2238, 122
      %v2471 = vpop.permute.xlu0 %2470
      %2472 = vrot.lane.b32.xlu0 %v2239, 122
      %v2473 = vpop.permute.xlu0 %2472
      %v2474 = vrot.slane %v2459, 4
      %v2475 = vrot.slane %v2461, 4
      %v2476 = vrot.slane %v2463, 4
      %v2477 = vrot.slane %v2465, 4
      %v2478 = vrot.slane %v2467, 4
      %v2479 = vrot.slane %v2469, 4
      %v2480 = vrot.slane %v2471, 4
      %v2481 = vrot.slane %v2473, 4
      %v2482 = vsel %vm2276, %v2474, %v2475
      %vm2483 = vcmask 998400
      %v2484 = vsel %vm2483, %v2459, %v2482
      %v2485 = vsel %vm2276, %v2476, %v2477
      %v2486 = vsel %vm2483, %v2463, %v2485
      %v2487 = vsel %vm2276, %v2478, %v2479
      %v2488 = vsel %vm2483, %v2467, %v2487
      %v2489 = vsel %vm2276, %v2480, %v2481
      %v2490 = vsel %vm2483, %v2471, %v2489
      %2495 = vst [vmem:[#allocation2 + $0xc0] sm:$0xff] %v2484
      %2496 = vst [vmem:[#allocation2 + $0xc8] sm:$0xff] %v2486
      %2497 = vst [vmem:[#allocation2 + $0xd0] sm:$0xff] %v2488
      %2498 = vst [vmem:[#allocation2 + $0xd8] sm:$0xff] %v2490
      %2499 = vrot.lane.b32.xlu0 %v2232, 121
      %v2500 = vpop.permute.xlu0 %2499
      %2501 = vrot.lane.b32.xlu0 %v2233, 121
      %v2502 = vpop.permute.xlu0 %2501
      %2503 = vrot.lane.b32.xlu0 %v2234, 121
      %v2504 = vpop.permute.xlu0 %2503
      %2505 = vrot.lane.b32.xlu0 %v2235, 121
      %v2506 = vpop.permute.xlu0 %2505
      %2507 = vrot.lane.b32.xlu0 %v2236, 121
      %v2508 = vpop.permute.xlu0 %2507
      %2509 = vrot.lane.b32.xlu0 %v2237, 121
      %v2510 = vpop.permute.xlu0 %2509
      %2511 = vrot.lane.b32.xlu0 %v2238, 121
      %v2512 = vpop.permute.xlu0 %2511
      %2513 = vrot.lane.b32.xlu0 %v2239, 121
      %v2514 = vpop.permute.xlu0 %2513
      %v2515 = vrot.slane %v2500, 4
      %v2516 = vrot.slane %v2502, 4
      %v2517 = vrot.slane %v2504, 4
      %v2518 = vrot.slane %v2506, 4
      %v2519 = vrot.slane %v2508, 4
      %v2520 = vrot.slane %v2510, 4
      %v2521 = vrot.slane %v2512, 4
      %v2522 = vrot.slane %v2514, 4
      %v2523 = vsel %vm2276, %v2515, %v2516
      %vm2524 = vcmask 990208
      %v2525 = vsel %vm2524, %v2500, %v2523
      %v2526 = vsel %vm2276, %v2517, %v2518
      %v2527 = vsel %vm2524, %v2504, %v2526
      %v2528 = vsel %vm2276, %v2519, %v2520
      %v2529 = vsel %vm2524, %v2508, %v2528
      %v2530 = vsel %vm2276, %v2521, %v2522
      %v2531 = vsel %vm2524, %v2512, %v2530
      %2536 = vst [vmem:[#allocation2 + $0xe0] sm:$0xff] %v2525
      %2537 = vst [vmem:[#allocation2 + $0xe8] sm:$0xff] %v2527
      %2538 = vst [vmem:[#allocation2 + $0xf0] sm:$0xff] %v2529
      %2539 = vst [vmem:[#allocation2 + $0xf8] sm:$0xff] %v2531
      %2540 = vrot.lane.b32.xlu0 %v2232, 120
      %v2541 = vpop.permute.xlu0 %2540
      %2542 = vrot.lane.b32.xlu0 %v2233, 120
      %v2543 = vpop.permute.xlu0 %2542
      %2544 = vrot.lane.b32.xlu0 %v2234, 120
      %v2545 = vpop.permute.xlu0 %2544
      %2546 = vrot.lane.b32.xlu0 %v2235, 120
      %v2547 = vpop.permute.xlu0 %2546
      %2548 = vrot.lane.b32.xlu0 %v2236, 120
      %v2549 = vpop.permute.xlu0 %2548
      %2550 = vrot.lane.b32.xlu0 %v2237, 120
      %v2551 = vpop.permute.xlu0 %2550
      %2552 = vrot.lane.b32.xlu0 %v2238, 120
      %v2553 = vpop.permute.xlu0 %2552
      %2554 = vrot.lane.b32.xlu0 %v2239, 120
      %v2555 = vpop.permute.xlu0 %2554
      %v2556 = vrot.slane %v2541, 4
      %v2557 = vrot.slane %v2543, 4
      %v2558 = vrot.slane %v2545, 4
      %v2559 = vrot.slane %v2547, 4
      %v2560 = vrot.slane %v2549, 4
      %v2561 = vrot.slane %v2551, 4
      %v2562 = vrot.slane %v2553, 4
      %v2563 = vrot.slane %v2555, 4
      %v2564 = vsel %vm2276, %v2556, %v2557
      %vm2565 = vcmask 982016
      %v2566 = vsel %vm2565, %v2541, %v2564
      %v2567 = vsel %vm2276, %v2558, %v2559
      %v2568 = vsel %vm2565, %v2545, %v2567
      %v2569 = vsel %vm2276, %v2560, %v2561
      %v2570 = vsel %vm2565, %v2549, %v2569
      %v2571 = vsel %vm2276, %v2562, %v2563
      %v2572 = vsel %vm2565, %v2553, %v2571
      %2577 = vst [vmem:[#allocation2 + $0x100] sm:$0xff] %v2566
      %2578 = vst [vmem:[#allocation2 + $0x108] sm:$0xff] %v2568
      %2579 = vst [vmem:[#allocation2 + $0x110] sm:$0xff] %v2570
      %2580 = vst [vmem:[#allocation2 + $0x118] sm:$0xff] %v2572
      %2581 = vrot.lane.b32.xlu0 %v2232, 119
      %v2582 = vpop.permute.xlu0 %2581
      %2583 = vrot.lane.b32.xlu0 %v2233, 119
      %v2584 = vpop.permute.xlu0 %2583
      %2585 = vrot.lane.b32.xlu0 %v2234, 119
      %v2586 = vpop.permute.xlu0 %2585
      %2587 = vrot.lane.b32.xlu0 %v2235, 119
      %v2588 = vpop.permute.xlu0 %2587
      %2589 = vrot.lane.b32.xlu0 %v2236, 119
      %v2590 = vpop.permute.xlu0 %2589
      %2591 = vrot.lane.b32.xlu0 %v2237, 119
      %v2592 = vpop.permute.xlu0 %2591
      %2593 = vrot.lane.b32.xlu0 %v2238, 119
      %v2594 = vpop.permute.xlu0 %2593
      %2595 = vrot.lane.b32.xlu0 %v2239, 119
      %v2596 = vpop.permute.xlu0 %2595
      %v2597 = vrot.slane %v2582, 4
      %v2598 = vrot.slane %v2584, 4
      %v2599 = vrot.slane %v2586, 4
      %v2600 = vrot.slane %v2588, 4
      %v2601 = vrot.slane %v2590, 4
      %v2602 = vrot.slane %v2592, 4
      %v2603 = vrot.slane %v2594, 4
      %v2604 = vrot.slane %v2596, 4
      %v2605 = vsel %vm2276, %v2597, %v2598
      %vm2606 = vcmask 973824
      %v2607 = vsel %vm2606, %v2582, %v2605
      %v2608 = vsel %vm2276, %v2599, %v2600
      %v2609 = vsel %vm2606, %v2586, %v2608
      %v2610 = vsel %vm2276, %v2601, %v2602
      %v2611 = vsel %vm2606, %v2590, %v2610
      %v2612 = vsel %vm2276, %v2603, %v2604
      %v2613 = vsel %vm2606, %v2594, %v2612
      %2618 = vst [vmem:[#allocation2 + $0x120] sm:$0xff] %v2607
      %2619 = vst [vmem:[#allocation2 + $0x128] sm:$0xff] %v2609
      %2620 = vst [vmem:[#allocation2 + $0x130] sm:$0xff] %v2611
      %2621 = vst [vmem:[#allocation2 + $0x138] sm:$0xff] %v2613
      %2622 = vrot.lane.b32.xlu0 %v2232, 118
      %v2623 = vpop.permute.xlu0 %2622
      %2624 = vrot.lane.b32.xlu0 %v2233, 118
      %v2625 = vpop.permute.xlu0 %2624
      %2626 = vrot.lane.b32.xlu0 %v2234, 118
      %v2627 = vpop.permute.xlu0 %2626
      %2628 = vrot.lane.b32.xlu0 %v2235, 118
      %v2629 = vpop.permute.xlu0 %2628
      %2630 = vrot.lane.b32.xlu0 %v2236, 118
      %v2631 = vpop.permute.xlu0 %2630
      %2632 = vrot.lane.b32.xlu0 %v2237, 118
      %v2633 = vpop.permute.xlu0 %2632
      %2634 = vrot.lane.b32.xlu0 %v2238, 118
      %v2635 = vpop.permute.xlu0 %2634
      %2636 = vrot.lane.b32.xlu0 %v2239, 118
      %v2637 = vpop.permute.xlu0 %2636
      %v2638 = vrot.slane %v2623, 4
      %v2639 = vrot.slane %v2625, 4
      %v2640 = vrot.slane %v2627, 4
      %v2641 = vrot.slane %v2629, 4
      %v2642 = vrot.slane %v2631, 4
      %v2643 = vrot.slane %v2633, 4
      %v2644 = vrot.slane %v2635, 4
      %v2645 = vrot.slane %v2637, 4
      %v2646 = vsel %vm2276, %v2638, %v2639
      %vm2647 = vcmask 965632
      %v2648 = vsel %vm2647, %v2623, %v2646
      %v2649 = vsel %vm2276, %v2640, %v2641
      %v2650 = vsel %vm2647, %v2627, %v2649
      %v2651 = vsel %vm2276, %v2642, %v2643
      %v2652 = vsel %vm2647, %v2631, %v2651
      %v2653 = vsel %vm2276, %v2644, %v2645
      %v2654 = vsel %vm2647, %v2635, %v2653
      %2659 = vst [vmem:[#allocation2 + $0x140] sm:$0xff] %v2648
      %2660 = vst [vmem:[#allocation2 + $0x148] sm:$0xff] %v2650
      %2661 = vst [vmem:[#allocation2 + $0x150] sm:$0xff] %v2652
      %2662 = vst [vmem:[#allocation2 + $0x158] sm:$0xff] %v2654
      %2663 = vrot.lane.b32.xlu0 %v2232, 117
      %v2664 = vpop.permute.xlu0 %2663
      %2665 = vrot.lane.b32.xlu0 %v2233, 117
      %v2666 = vpop.permute.xlu0 %2665
      %2667 = vrot.lane.b32.xlu0 %v2234, 117
      %v2668 = vpop.permute.xlu0 %2667
      %2669 = vrot.lane.b32.xlu0 %v2235, 117
      %v2670 = vpop.permute.xlu0 %2669
      %2671 = vrot.lane.b32.xlu0 %v2236, 117
      %v2672 = vpop.permute.xlu0 %2671
      %2673 = vrot.lane.b32.xlu0 %v2237, 117
      %v2674 = vpop.permute.xlu0 %2673
      %2675 = vrot.lane.b32.xlu0 %v2238, 117
      %v2676 = vpop.permute.xlu0 %2675
      %2677 = vrot.lane.b32.xlu0 %v2239, 117
      %v2678 = vpop.permute.xlu0 %2677
      %v2679 = vrot.slane %v2664, 4
      %v2680 = vrot.slane %v2666, 4
      %v2681 = vrot.slane %v2668, 4
      %v2682 = vrot.slane %v2670, 4
      %v2683 = vrot.slane %v2672, 4
      %v2684 = vrot.slane %v2674, 4
      %v2685 = vrot.slane %v2676, 4
      %v2686 = vrot.slane %v2678, 4
      %v2687 = vsel %vm2276, %v2679, %v2680
      %vm2688 = vcmask 957440
      %v2689 = vsel %vm2688, %v2664, %v2687
      %v2690 = vsel %vm2276, %v2681, %v2682
      %v2691 = vsel %vm2688, %v2668, %v2690
      %v2692 = vsel %vm2276, %v2683, %v2684
      %v2693 = vsel %vm2688, %v2672, %v2692
      %v2694 = vsel %vm2276, %v2685, %v2686
      %v2695 = vsel %vm2688, %v2676, %v2694
      %2700 = vst [vmem:[#allocation2 + $0x160] sm:$0xff] %v2689
      %2701 = vst [vmem:[#allocation2 + $0x168] sm:$0xff] %v2691
      %2702 = vst [vmem:[#allocation2 + $0x170] sm:$0xff] %v2693
      %2703 = vst [vmem:[#allocation2 + $0x178] sm:$0xff] %v2695
      %2704 = vrot.lane.b32.xlu0 %v2232, 116
      %v2705 = vpop.permute.xlu0 %2704
      %2706 = vrot.lane.b32.xlu0 %v2233, 116
      %v2707 = vpop.permute.xlu0 %2706
      %2708 = vrot.lane.b32.xlu0 %v2234, 116
      %v2709 = vpop.permute.xlu0 %2708
      %2710 = vrot.lane.b32.xlu0 %v2235, 116
      %v2711 = vpop.permute.xlu0 %2710
      %2712 = vrot.lane.b32.xlu0 %v2236, 116
      %v2713 = vpop.permute.xlu0 %2712
      %2714 = vrot.lane.b32.xlu0 %v2237, 116
      %v2715 = vpop.permute.xlu0 %2714
      %2716 = vrot.lane.b32.xlu0 %v2238, 116
      %v2717 = vpop.permute.xlu0 %2716
      %2718 = vrot.lane.b32.xlu0 %v2239, 116
      %v2719 = vpop.permute.xlu0 %2718
      %v2720 = vrot.slane %v2705, 4
      %v2721 = vrot.slane %v2707, 4
      %v2722 = vrot.slane %v2709, 4
      %v2723 = vrot.slane %v2711, 4
      %v2724 = vrot.slane %v2713, 4
      %v2725 = vrot.slane %v2715, 4
      %v2726 = vrot.slane %v2717, 4
      %v2727 = vrot.slane %v2719, 4
      %v2728 = vsel %vm2276, %v2720, %v2721
      %vm2729 = vcmask 949248
      %v2730 = vsel %vm2729, %v2705, %v2728
      %v2731 = vsel %vm2276, %v2722, %v2723
      %v2732 = vsel %vm2729, %v2709, %v2731
      %v2733 = vsel %vm2276, %v2724, %v2725
      %v2734 = vsel %vm2729, %v2713, %v2733
      %v2735 = vsel %vm2276, %v2726, %v2727
      %v2736 = vsel %vm2729, %v2717, %v2735
      %2741 = vst [vmem:[#allocation2 + $0x180] sm:$0xff] %v2730
      %2742 = vst [vmem:[#allocation2 + $0x188] sm:$0xff] %v2732
      %2743 = vst [vmem:[#allocation2 + $0x190] sm:$0xff] %v2734
      %2744 = vst [vmem:[#allocation2 + $0x198] sm:$0xff] %v2736
      %2745 = vrot.lane.b32.xlu0 %v2232, 115
      %v2746 = vpop.permute.xlu0 %2745
      %2747 = vrot.lane.b32.xlu0 %v2233, 115
      %v2748 = vpop.permute.xlu0 %2747
      %2749 = vrot.lane.b32.xlu0 %v2234, 115
      %v2750 = vpop.permute.xlu0 %2749
      %2751 = vrot.lane.b32.xlu0 %v2235, 115
      %v2752 = vpop.permute.xlu0 %2751
      %2753 = vrot.lane.b32.xlu0 %v2236, 115
      %v2754 = vpop.permute.xlu0 %2753
      %2755 = vrot.lane.b32.xlu0 %v2237, 115
      %v2756 = vpop.permute.xlu0 %2755
      %2757 = vrot.lane.b32.xlu0 %v2238, 115
      %v2758 = vpop.permute.xlu0 %2757
      %2759 = vrot.lane.b32.xlu0 %v2239, 115
      %v2760 = vpop.permute.xlu0 %2759
      %v2761 = vrot.slane %v2746, 4
      %v2762 = vrot.slane %v2748, 4
      %v2763 = vrot.slane %v2750, 4
      %v2764 = vrot.slane %v2752, 4
      %v2765 = vrot.slane %v2754, 4
      %v2766 = vrot.slane %v2756, 4
      %v2767 = vrot.slane %v2758, 4
      %v2768 = vrot.slane %v2760, 4
      %v2769 = vsel %vm2276, %v2761, %v2762
      %vm2770 = vcmask 941056
      %v2771 = vsel %vm2770, %v2746, %v2769
      %v2772 = vsel %vm2276, %v2763, %v2764
      %v2773 = vsel %vm2770, %v2750, %v2772
      %v2774 = vsel %vm2276, %v2765, %v2766
      %v2775 = vsel %vm2770, %v2754, %v2774
      %v2776 = vsel %vm2276, %v2767, %v2768
      %v2777 = vsel %vm2770, %v2758, %v2776
      %2782 = vst [vmem:[#allocation2 + $0x1a0] sm:$0xff] %v2771
      %2783 = vst [vmem:[#allocation2 + $0x1a8] sm:$0xff] %v2773
      %2784 = vst [vmem:[#allocation2 + $0x1b0] sm:$0xff] %v2775
      %2785 = vst [vmem:[#allocation2 + $0x1b8] sm:$0xff] %v2777
      %2786 = vrot.lane.b32.xlu0 %v2232, 114
      %v2787 = vpop.permute.xlu0 %2786
      %2788 = vrot.lane.b32.xlu0 %v2233, 114
      %v2789 = vpop.permute.xlu0 %2788
      %2790 = vrot.lane.b32.xlu0 %v2234, 114
      %v2791 = vpop.permute.xlu0 %2790
      %2792 = vrot.lane.b32.xlu0 %v2235, 114
      %v2793 = vpop.permute.xlu0 %2792
      %2794 = vrot.lane.b32.xlu0 %v2236, 114
      %v2795 = vpop.permute.xlu0 %2794
      %2796 = vrot.lane.b32.xlu0 %v2237, 114
      %v2797 = vpop.permute.xlu0 %2796
      %2798 = vrot.lane.b32.xlu0 %v2238, 114
      %v2799 = vpop.permute.xlu0 %2798
      %2800 = vrot.lane.b32.xlu0 %v2239, 114
      %v2801 = vpop.permute.xlu0 %2800
      %v2802 = vrot.slane %v2787, 4
      %v2803 = vrot.slane %v2789, 4
      %v2804 = vrot.slane %v2791, 4
      %v2805 = vrot.slane %v2793, 4
      %v2806 = vrot.slane %v2795, 4
      %v2807 = vrot.slane %v2797, 4
      %v2808 = vrot.slane %v2799, 4
      %v2809 = vrot.slane %v2801, 4
      %v2810 = vsel %vm2276, %v2802, %v2803
      %vm2811 = vcmask 932864
      %v2812 = vsel %vm2811, %v2787, %v2810
      %v2813 = vsel %vm2276, %v2804, %v2805
      %v2814 = vsel %vm2811, %v2791, %v2813
      %v2815 = vsel %vm2276, %v2806, %v2807
      %v2816 = vsel %vm2811, %v2795, %v2815
      %v2817 = vsel %vm2276, %v2808, %v2809
      %v2818 = vsel %vm2811, %v2799, %v2817
      %2823 = vst [vmem:[#allocation2 + $0x1c0] sm:$0xff] %v2812
      %2824 = vst [vmem:[#allocation2 + $0x1c8] sm:$0xff] %v2814
      %2825 = vst [vmem:[#allocation2 + $0x1d0] sm:$0xff] %v2816
      %2826 = vst [vmem:[#allocation2 + $0x1d8] sm:$0xff] %v2818
      %2827 = vrot.lane.b32.xlu0 %v2232, 113
      %v2828 = vpop.permute.xlu0 %2827
      %2829 = vrot.lane.b32.xlu0 %v2233, 113
      %v2830 = vpop.permute.xlu0 %2829
      %2831 = vrot.lane.b32.xlu0 %v2234, 113
      %v2832 = vpop.permute.xlu0 %2831
      %2833 = vrot.lane.b32.xlu0 %v2235, 113
      %v2834 = vpop.permute.xlu0 %2833
      %2835 = vrot.lane.b32.xlu0 %v2236, 113
      %v2836 = vpop.permute.xlu0 %2835
      %2837 = vrot.lane.b32.xlu0 %v2237, 113
      %v2838 = vpop.permute.xlu0 %2837
      %2839 = vrot.lane.b32.xlu0 %v2238, 113
      %v2840 = vpop.permute.xlu0 %2839
      %2841 = vrot.lane.b32.xlu0 %v2239, 113
      %v2842 = vpop.permute.xlu0 %2841
      %v2843 = vrot.slane %v2828, 4
      %v2844 = vrot.slane %v2830, 4
      %v2845 = vrot.slane %v2832, 4
      %v2846 = vrot.slane %v2834, 4
      %v2847 = vrot.slane %v2836, 4
      %v2848 = vrot.slane %v2838, 4
      %v2849 = vrot.slane %v2840, 4
      %v2850 = vrot.slane %v2842, 4
      %v2851 = vsel %vm2276, %v2843, %v2844
      %vm2852 = vcmask 924672
      %v2853 = vsel %vm2852, %v2828, %v2851
      %v2854 = vsel %vm2276, %v2845, %v2846
      %v2855 = vsel %vm2852, %v2832, %v2854
      %v2856 = vsel %vm2276, %v2847, %v2848
      %v2857 = vsel %vm2852, %v2836, %v2856
      %v2858 = vsel %vm2276, %v2849, %v2850
      %v2859 = vsel %vm2852, %v2840, %v2858
      %2864 = vst [vmem:[#allocation2 + $0x1e0] sm:$0xff] %v2853
      %2865 = vst [vmem:[#allocation2 + $0x1e8] sm:$0xff] %v2855
      %2866 = vst [vmem:[#allocation2 + $0x1f0] sm:$0xff] %v2857
      %2867 = vst [vmem:[#allocation2 + $0x1f8] sm:$0xff] %v2859
      %2868 = vrot.lane.b32.xlu0 %v2232, 112
      %v2869 = vpop.permute.xlu0 %2868
      %2870 = vrot.lane.b32.xlu0 %v2233, 112
      %v2871 = vpop.permute.xlu0 %2870
      %2872 = vrot.lane.b32.xlu0 %v2234, 112
      %v2873 = vpop.permute.xlu0 %2872
      %2874 = vrot.lane.b32.xlu0 %v2235, 112
      %v2875 = vpop.permute.xlu0 %2874
      %2876 = vrot.lane.b32.xlu0 %v2236, 112
      %v2877 = vpop.permute.xlu0 %2876
      %2878 = vrot.lane.b32.xlu0 %v2237, 112
      %v2879 = vpop.permute.xlu0 %2878
      %2880 = vrot.lane.b32.xlu0 %v2238, 112
      %v2881 = vpop.permute.xlu0 %2880
      %2882 = vrot.lane.b32.xlu0 %v2239, 112
      %v2883 = vpop.permute.xlu0 %2882
      %v2884 = vrot.slane %v2869, 4
      %v2885 = vrot.slane %v2871, 4
      %v2886 = vrot.slane %v2873, 4
      %v2887 = vrot.slane %v2875, 4
      %v2888 = vrot.slane %v2877, 4
      %v2889 = vrot.slane %v2879, 4
      %v2890 = vrot.slane %v2881, 4
      %v2891 = vrot.slane %v2883, 4
      %v2892 = vsel %vm2276, %v2884, %v2885
      %vm2893 = vcmask 916480
      %v2894 = vsel %vm2893, %v2869, %v2892
      %v2895 = vsel %vm2276, %v2886, %v2887
      %v2896 = vsel %vm2893, %v2873, %v2895
      %v2897 = vsel %vm2276, %v2888, %v2889
      %v2898 = vsel %vm2893, %v2877, %v2897
      %v2899 = vsel %vm2276, %v2890, %v2891
      %v2900 = vsel %vm2893, %v2881, %v2899
      %2905 = vst [vmem:[#allocation2 + $0x200] sm:$0xff] %v2894
      %2906 = vst [vmem:[#allocation2 + $0x208] sm:$0xff] %v2896
      %2907 = vst [vmem:[#allocation2 + $0x210] sm:$0xff] %v2898
      %2908 = vst [vmem:[#allocation2 + $0x218] sm:$0xff] %v2900
      %2909 = vrot.lane.b32.xlu0 %v2232, 111
      %v2910 = vpop.permute.xlu0 %2909
      %2911 = vrot.lane.b32.xlu0 %v2233, 111
      %v2912 = vpop.permute.xlu0 %2911
      %2913 = vrot.lane.b32.xlu0 %v2234, 111
      %v2914 = vpop.permute.xlu0 %2913
      %2915 = vrot.lane.b32.xlu0 %v2235, 111
      %v2916 = vpop.permute.xlu0 %2915
      %2917 = vrot.lane.b32.xlu0 %v2236, 111
      %v2918 = vpop.permute.xlu0 %2917
      %2919 = vrot.lane.b32.xlu0 %v2237, 111
      %v2920 = vpop.permute.xlu0 %2919
      %2921 = vrot.lane.b32.xlu0 %v2238, 111
      %v2922 = vpop.permute.xlu0 %2921
      %2923 = vrot.lane.b32.xlu0 %v2239, 111
      %v2924 = vpop.permute.xlu0 %2923
      %v2925 = vrot.slane %v2910, 4
      %v2926 = vrot.slane %v2912, 4
      %v2927 = vrot.slane %v2914, 4
      %v2928 = vrot.slane %v2916, 4
      %v2929 = vrot.slane %v2918, 4
      %v2930 = vrot.slane %v2920, 4
      %v2931 = vrot.slane %v2922, 4
      %v2932 = vrot.slane %v2924, 4
      %v2933 = vsel %vm2276, %v2925, %v2926
      %vm2934 = vcmask 908288
      %v2935 = vsel %vm2934, %v2910, %v2933
      %v2936 = vsel %vm2276, %v2927, %v2928
      %v2937 = vsel %vm2934, %v2914, %v2936
      %v2938 = vsel %vm2276, %v2929, %v2930
      %v2939 = vsel %vm2934, %v2918, %v2938
      %v2940 = vsel %vm2276, %v2931, %v2932
      %v2941 = vsel %vm2934, %v2922, %v2940
      %2946 = vst [vmem:[#allocation2 + $0x220] sm:$0xff] %v2935
      %2947 = vst [vmem:[#allocation2 + $0x228] sm:$0xff] %v2937
      %2948 = vst [vmem:[#allocation2 + $0x230] sm:$0xff] %v2939
      %2949 = vst [vmem:[#allocation2 + $0x238] sm:$0xff] %v2941
      %2950 = vrot.lane.b32.xlu0 %v2232, 110
      %v2951 = vpop.permute.xlu0 %2950
      %2952 = vrot.lane.b32.xlu0 %v2233, 110
      %v2953 = vpop.permute.xlu0 %2952
      %2954 = vrot.lane.b32.xlu0 %v2234, 110
      %v2955 = vpop.permute.xlu0 %2954
      %2956 = vrot.lane.b32.xlu0 %v2235, 110
      %v2957 = vpop.permute.xlu0 %2956
      %2958 = vrot.lane.b32.xlu0 %v2236, 110
      %v2959 = vpop.permute.xlu0 %2958
      %2960 = vrot.lane.b32.xlu0 %v2237, 110
      %v2961 = vpop.permute.xlu0 %2960
      %2962 = vrot.lane.b32.xlu0 %v2238, 110
      %v2963 = vpop.permute.xlu0 %2962
      %2964 = vrot.lane.b32.xlu0 %v2239, 110
      %v2965 = vpop.permute.xlu0 %2964
      %v2966 = vrot.slane %v2951, 4
      %v2967 = vrot.slane %v2953, 4
      %v2968 = vrot.slane %v2955, 4
      %v2969 = vrot.slane %v2957, 4
      %v2970 = vrot.slane %v2959, 4
      %v2971 = vrot.slane %v2961, 4
      %v2972 = vrot.slane %v2963, 4
      %v2973 = vrot.slane %v2965, 4
      %v2974 = vsel %vm2276, %v2966, %v2967
      %vm2975 = vcmask 900096
      %v2976 = vsel %vm2975, %v2951, %v2974
      %v2977 = vsel %vm2276, %v2968, %v2969
      %v2978 = vsel %vm2975, %v2955, %v2977
      %v2979 = vsel %vm2276, %v2970, %v2971
      %v2980 = vsel %vm2975, %v2959, %v2979
      %v2981 = vsel %vm2276, %v2972, %v2973
      %v2982 = vsel %vm2975, %v2963, %v2981
      %2987 = vst [vmem:[#allocation2 + $0x240] sm:$0xff] %v2976
      %2988 = vst [vmem:[#allocation2 + $0x248] sm:$0xff] %v2978
      %2989 = vst [vmem:[#allocation2 + $0x250] sm:$0xff] %v2980
      %2990 = vst [vmem:[#allocation2 + $0x258] sm:$0xff] %v2982
      %2991 = vrot.lane.b32.xlu0 %v2232, 109
      %v2992 = vpop.permute.xlu0 %2991
      %2993 = vrot.lane.b32.xlu0 %v2233, 109
      %v2994 = vpop.permute.xlu0 %2993
      %2995 = vrot.lane.b32.xlu0 %v2234, 109
      %v2996 = vpop.permute.xlu0 %2995
      %2997 = vrot.lane.b32.xlu0 %v2235, 109
      %v2998 = vpop.permute.xlu0 %2997
      %2999 = vrot.lane.b32.xlu0 %v2236, 109
      %v3000 = vpop.permute.xlu0 %2999
      %3001 = vrot.lane.b32.xlu0 %v2237, 109
      %v3002 = vpop.permute.xlu0 %3001
      %3003 = vrot.lane.b32.xlu0 %v2238, 109
      %v3004 = vpop.permute.xlu0 %3003
      %3005 = vrot.lane.b32.xlu0 %v2239, 109
      %v3006 = vpop.permute.xlu0 %3005
      %v3007 = vrot.slane %v2992, 4
      %v3008 = vrot.slane %v2994, 4
      %v3009 = vrot.slane %v2996, 4
      %v3010 = vrot.slane %v2998, 4
      %v3011 = vrot.slane %v3000, 4
      %v3012 = vrot.slane %v3002, 4
      %v3013 = vrot.slane %v3004, 4
      %v3014 = vrot.slane %v3006, 4
      %v3015 = vsel %vm2276, %v3007, %v3008
      %vm3016 = vcmask 891904
      %v3017 = vsel %vm3016, %v2992, %v3015
      %v3018 = vsel %vm2276, %v3009, %v3010
      %v3019 = vsel %vm3016, %v2996, %v3018
      %v3020 = vsel %vm2276, %v3011, %v3012
      %v3021 = vsel %vm3016, %v3000, %v3020
      %v3022 = vsel %vm2276, %v3013, %v3014
      %v3023 = vsel %vm3016, %v3004, %v3022
      %3028 = vst [vmem:[#allocation2 + $0x260] sm:$0xff] %v3017
      %3029 = vst [vmem:[#allocation2 + $0x268] sm:$0xff] %v3019
      %3030 = vst [vmem:[#allocation2 + $0x270] sm:$0xff] %v3021
      %3031 = vst [vmem:[#allocation2 + $0x278] sm:$0xff] %v3023
      %3032 = vrot.lane.b32.xlu0 %v2232, 108
      %v3033 = vpop.permute.xlu0 %3032
      %3034 = vrot.lane.b32.xlu0 %v2233, 108
      %v3035 = vpop.permute.xlu0 %3034
      %3036 = vrot.lane.b32.xlu0 %v2234, 108
      %v3037 = vpop.permute.xlu0 %3036
      %3038 = vrot.lane.b32.xlu0 %v2235, 108
      %v3039 = vpop.permute.xlu0 %3038
      %3040 = vrot.lane.b32.xlu0 %v2236, 108
      %v3041 = vpop.permute.xlu0 %3040
      %3042 = vrot.lane.b32.xlu0 %v2237, 108
      %v3043 = vpop.permute.xlu0 %3042
      %3044 = vrot.lane.b32.xlu0 %v2238, 108
      %v3045 = vpop.permute.xlu0 %3044
      %3046 = vrot.lane.b32.xlu0 %v2239, 108
      %v3047 = vpop.permute.xlu0 %3046
      %v3048 = vrot.slane %v3033, 4
      %v3049 = vrot.slane %v3035, 4
      %v3050 = vrot.slane %v3037, 4
      %v3051 = vrot.slane %v3039, 4
      %v3052 = vrot.slane %v3041, 4
      %v3053 = vrot.slane %v3043, 4
      %v3054 = vrot.slane %v3045, 4
      %v3055 = vrot.slane %v3047, 4
      %v3056 = vsel %vm2276, %v3048, %v3049
      %vm3057 = vcmask 883712
      %v3058 = vsel %vm3057, %v3033, %v3056
      %v3059 = vsel %vm2276, %v3050, %v3051
      %v3060 = vsel %vm3057, %v3037, %v3059
      %v3061 = vsel %vm2276, %v3052, %v3053
      %v3062 = vsel %vm3057, %v3041, %v3061
      %v3063 = vsel %vm2276, %v3054, %v3055
      %v3064 = vsel %vm3057, %v3045, %v3063
      %3069 = vst [vmem:[#allocation2 + $0x280] sm:$0xff] %v3058
      %3070 = vst [vmem:[#allocation2 + $0x288] sm:$0xff] %v3060
      %3071 = vst [vmem:[#allocation2 + $0x290] sm:$0xff] %v3062
      %3072 = vst [vmem:[#allocation2 + $0x298] sm:$0xff] %v3064
      %3073 = vrot.lane.b32.xlu0 %v2232, 107
      %v3074 = vpop.permute.xlu0 %3073
      %3075 = vrot.lane.b32.xlu0 %v2233, 107
      %v3076 = vpop.permute.xlu0 %3075
      %3077 = vrot.lane.b32.xlu0 %v2234, 107
      %v3078 = vpop.permute.xlu0 %3077
      %3079 = vrot.lane.b32.xlu0 %v2235, 107
      %v3080 = vpop.permute.xlu0 %3079
      %3081 = vrot.lane.b32.xlu0 %v2236, 107
      %v3082 = vpop.permute.xlu0 %3081
      %3083 = vrot.lane.b32.xlu0 %v2237, 107
      %v3084 = vpop.permute.xlu0 %3083
      %3085 = vrot.lane.b32.xlu0 %v2238, 107
      %v3086 = vpop.permute.xlu0 %3085
      %3087 = vrot.lane.b32.xlu0 %v2239, 107
      %v3088 = vpop.permute.xlu0 %3087
      %v3089 = vrot.slane %v3074, 4
      %v3090 = vrot.slane %v3076, 4
      %v3091 = vrot.slane %v3078, 4
      %v3092 = vrot.slane %v3080, 4
      %v3093 = vrot.slane %v3082, 4
      %v3094 = vrot.slane %v3084, 4
      %v3095 = vrot.slane %v3086, 4
      %v3096 = vrot.slane %v3088, 4
      %v3097 = vsel %vm2276, %v3089, %v3090
      %vm3098 = vcmask 875520
      %v3099 = vsel %vm3098, %v3074, %v3097
      %v3100 = vsel %vm2276, %v3091, %v3092
      %v3101 = vsel %vm3098, %v3078, %v3100
      %v3102 = vsel %vm2276, %v3093, %v3094
      %v3103 = vsel %vm3098, %v3082, %v3102
      %v3104 = vsel %vm2276, %v3095, %v3096
      %v3105 = vsel %vm3098, %v3086, %v3104
      %3110 = vst [vmem:[#allocation2 + $0x2a0] sm:$0xff] %v3099
      %3111 = vst [vmem:[#allocation2 + $0x2a8] sm:$0xff] %v3101
      %3112 = vst [vmem:[#allocation2 + $0x2b0] sm:$0xff] %v3103
      %3113 = vst [vmem:[#allocation2 + $0x2b8] sm:$0xff] %v3105
      %3114 = vrot.lane.b32.xlu0 %v2232, 106
      %v3115 = vpop.permute.xlu0 %3114
      %3116 = vrot.lane.b32.xlu0 %v2233, 106
      %v3117 = vpop.permute.xlu0 %3116
      %3118 = vrot.lane.b32.xlu0 %v2234, 106
      %v3119 = vpop.permute.xlu0 %3118
      %3120 = vrot.lane.b32.xlu0 %v2235, 106
      %v3121 = vpop.permute.xlu0 %3120
      %3122 = vrot.lane.b32.xlu0 %v2236, 106
      %v3123 = vpop.permute.xlu0 %3122
      %3124 = vrot.lane.b32.xlu0 %v2237, 106
      %v3125 = vpop.permute.xlu0 %3124
      %3126 = vrot.lane.b32.xlu0 %v2238, 106
      %v3127 = vpop.permute.xlu0 %3126
      %3128 = vrot.lane.b32.xlu0 %v2239, 106
      %v3129 = vpop.permute.xlu0 %3128
      %v3130 = vrot.slane %v3115, 4
      %v3131 = vrot.slane %v3117, 4
      %v3132 = vrot.slane %v3119, 4
      %v3133 = vrot.slane %v3121, 4
      %v3134 = vrot.slane %v3123, 4
      %v3135 = vrot.slane %v3125, 4
      %v3136 = vrot.slane %v3127, 4
      %v3137 = vrot.slane %v3129, 4
      %v3138 = vsel %vm2276, %v3130, %v3131
      %vm3139 = vcmask 867328
      %v3140 = vsel %vm3139, %v3115, %v3138
      %v3141 = vsel %vm2276, %v3132, %v3133
      %v3142 = vsel %vm3139, %v3119, %v3141
      %v3143 = vsel %vm2276, %v3134, %v3135
      %v3144 = vsel %vm3139, %v3123, %v3143
      %v3145 = vsel %vm2276, %v3136, %v3137
      %v3146 = vsel %vm3139, %v3127, %v3145
      %3151 = vst [vmem:[#allocation2 + $0x2c0] sm:$0xff] %v3140
      %3152 = vst [vmem:[#allocation2 + $0x2c8] sm:$0xff] %v3142
      %3153 = vst [vmem:[#allocation2 + $0x2d0] sm:$0xff] %v3144
      %3154 = vst [vmem:[#allocation2 + $0x2d8] sm:$0xff] %v3146
      %3155 = vrot.lane.b32.xlu0 %v2232, 105
      %v3156 = vpop.permute.xlu0 %3155
      %3157 = vrot.lane.b32.xlu0 %v2233, 105
      %v3158 = vpop.permute.xlu0 %3157
      %3159 = vrot.lane.b32.xlu0 %v2234, 105
      %v3160 = vpop.permute.xlu0 %3159
      %3161 = vrot.lane.b32.xlu0 %v2235, 105
      %v3162 = vpop.permute.xlu0 %3161
      %3163 = vrot.lane.b32.xlu0 %v2236, 105
      %v3164 = vpop.permute.xlu0 %3163
      %3165 = vrot.lane.b32.xlu0 %v2237, 105
      %v3166 = vpop.permute.xlu0 %3165
      %3167 = vrot.lane.b32.xlu0 %v2238, 105
      %v3168 = vpop.permute.xlu0 %3167
      %3169 = vrot.lane.b32.xlu0 %v2239, 105
      %v3170 = vpop.permute.xlu0 %3169
      %v3171 = vrot.slane %v3156, 4
      %v3172 = vrot.slane %v3158, 4
      %v3173 = vrot.slane %v3160, 4
      %v3174 = vrot.slane %v3162, 4
      %v3175 = vrot.slane %v3164, 4
      %v3176 = vrot.slane %v3166, 4
      %v3177 = vrot.slane %v3168, 4
      %v3178 = vrot.slane %v3170, 4
      %v3179 = vsel %vm2276, %v3171, %v3172
      %vm3180 = vcmask 859136
      %v3181 = vsel %vm3180, %v3156, %v3179
      %v3182 = vsel %vm2276, %v3173, %v3174
      %v3183 = vsel %vm3180, %v3160, %v3182
      %v3184 = vsel %vm2276, %v3175, %v3176
      %v3185 = vsel %vm3180, %v3164, %v3184
      %v3186 = vsel %vm2276, %v3177, %v3178
      %v3187 = vsel %vm3180, %v3168, %v3186
      %3192 = vst [vmem:[#allocation2 + $0x2e0] sm:$0xff] %v3181
      %3193 = vst [vmem:[#allocation2 + $0x2e8] sm:$0xff] %v3183
      %3194 = vst [vmem:[#allocation2 + $0x2f0] sm:$0xff] %v3185
      %3195 = vst [vmem:[#allocation2 + $0x2f8] sm:$0xff] %v3187
      %3196 = vrot.lane.b32.xlu0 %v2232, 104
      %v3197 = vpop.permute.xlu0 %3196
      %3198 = vrot.lane.b32.xlu0 %v2233, 104
      %v3199 = vpop.permute.xlu0 %3198
      %3200 = vrot.lane.b32.xlu0 %v2234, 104
      %v3201 = vpop.permute.xlu0 %3200
      %3202 = vrot.lane.b32.xlu0 %v2235, 104
      %v3203 = vpop.permute.xlu0 %3202
      %3204 = vrot.lane.b32.xlu0 %v2236, 104
      %v3205 = vpop.permute.xlu0 %3204
      %3206 = vrot.lane.b32.xlu0 %v2237, 104
      %v3207 = vpop.permute.xlu0 %3206
      %3208 = vrot.lane.b32.xlu0 %v2238, 104
      %v3209 = vpop.permute.xlu0 %3208
      %3210 = vrot.lane.b32.xlu0 %v2239, 104
      %v3211 = vpop.permute.xlu0 %3210
      %v3212 = vrot.slane %v3197, 4
      %v3213 = vrot.slane %v3199, 4
      %v3214 = vrot.slane %v3201, 4
      %v3215 = vrot.slane %v3203, 4
      %v3216 = vrot.slane %v3205, 4
      %v3217 = vrot.slane %v3207, 4
      %v3218 = vrot.slane %v3209, 4
      %v3219 = vrot.slane %v3211, 4
      %v3220 = vsel %vm2276, %v3212, %v3213
      %vm3221 = vcmask 850944
      %v3222 = vsel %vm3221, %v3197, %v3220
      %v3223 = vsel %vm2276, %v3214, %v3215
      %v3224 = vsel %vm3221, %v3201, %v3223
      %v3225 = vsel %vm2276, %v3216, %v3217
      %v3226 = vsel %vm3221, %v3205, %v3225
      %v3227 = vsel %vm2276, %v3218, %v3219
      %v3228 = vsel %vm3221, %v3209, %v3227
      %3233 = vst [vmem:[#allocation2 + $0x300] sm:$0xff] %v3222
      %3234 = vst [vmem:[#allocation2 + $0x308] sm:$0xff] %v3224
      %3235 = vst [vmem:[#allocation2 + $0x310] sm:$0xff] %v3226
      %3236 = vst [vmem:[#allocation2 + $0x318] sm:$0xff] %v3228
      %v3237 = vld [vmem:[%s4] sm:$0xff]
      %v3238 = vld [vmem:[%s4 + $0x8] sm:$0xff]
      %v3239 = vld [vmem:[%s4 + $0x10] sm:$0xff]
      %v3240 = vld [vmem:[%s4 + $0x18] sm:$0xf]
      %v3241 = vld [vmem:[%s4 + $0x1c] sm:$0xff]
      %v3242 = vld [vmem:[%s4 + $0x24] sm:$0xff]
      %v3243 = vld [vmem:[%s4 + $0x2c] sm:$0xff]
      %v3244 = vld [vmem:[%s4 + $0x34] sm:$0xf]
      %v3245 = vld [vmem:[%s4 + $0x38] sm:$0xff]
      %v3246 = vld [vmem:[%s4 + $0x40] sm:$0xff]
      %v3247 = vld [vmem:[%s4 + $0x48] sm:$0xff]
      %v3248 = vld [vmem:[%s4 + $0x50] sm:$0xf]
      %v3249 = vld [vmem:[%s4 + $0x54] sm:$0xff]
      %v3250 = vld [vmem:[%s4 + $0x5c] sm:$0xff]
      %v3251 = vld [vmem:[%s4 + $0x64] sm:$0xff]
      %v3252 = vld [vmem:[%s4 + $0x6c] sm:$0xf]
      %v3253 = vld [vmem:[#allocation2] sm:$0xff]
      %v3254 = vld [vmem:[#allocation2 + $0x8] sm:$0xff]
      %v3255 = vld [vmem:[#allocation2 + $0x10] sm:$0xff]
      %v3256 = vld [vmem:[#allocation2 + $0x18] sm:$0xff]
      %v3257 = vld [vmem:[#allocation2 + $0x20] sm:$0xff]
      %v3258 = vld [vmem:[#allocation2 + $0x28] sm:$0xff]
      %v3259 = vld [vmem:[#allocation2 + $0x30] sm:$0xff]
      %v3260 = vld [vmem:[#allocation2 + $0x38] sm:$0xff]
      %v3261 = vld [vmem:[#allocation2 + $0x40] sm:$0xff]
      %v3262 = vld [vmem:[#allocation2 + $0x48] sm:$0xff]
      %v3263 = vld [vmem:[#allocation2 + $0x50] sm:$0xff]
      %v3264 = vld [vmem:[#allocation2 + $0x58] sm:$0xff]
      %v3265 = vld [vmem:[#allocation2 + $0x60] sm:$0xff]
      %v3266 = vld [vmem:[#allocation2 + $0x68] sm:$0xff]
      %v3267 = vld [vmem:[#allocation2 + $0x70] sm:$0xff]
      %v3268 = vld [vmem:[#allocation2 + $0x78] sm:$0xff]
      %v3269 = vld [vmem:[#allocation2 + $0x80] sm:$0xff]
      %v3270 = vld [vmem:[#allocation2 + $0x88] sm:$0xff]
      %v3271 = vld [vmem:[#allocation2 + $0x90] sm:$0xff]
      %v3272 = vld [vmem:[#allocation2 + $0x98] sm:$0xff]
      %v3273 = vld [vmem:[#allocation2 + $0xa0] sm:$0xff]
      %v3274 = vld [vmem:[#allocation2 + $0xa8] sm:$0xff]
      %v3275 = vld [vmem:[#allocation2 + $0xb0] sm:$0xff]
      %v3276 = vld [vmem:[#allocation2 + $0xb8] sm:$0xff]
      %v3277 = vld [vmem:[#allocation2 + $0xc0] sm:$0xff]
      %v3278 = vld [vmem:[#allocation2 + $0xc8] sm:$0xff]
      %v3279 = vld [vmem:[#allocation2 + $0xd0] sm:$0xff]
      %v3280 = vld [vmem:[#allocation2 + $0xd8] sm:$0xff]
      %v3281 = vld [vmem:[#allocation2 + $0xe0] sm:$0xff]
      %v3282 = vld [vmem:[#allocation2 + $0xe8] sm:$0xff]
      %v3283 = vld [vmem:[#allocation2 + $0xf0] sm:$0xff]
      %v3284 = vld [vmem:[#allocation2 + $0xf8] sm:$0xff]
      %v3285 = vld [vmem:[#allocation2 + $0x100] sm:$0xff]
      %v3286 = vld [vmem:[#allocation2 + $0x108] sm:$0xff]
      %v3287 = vld [vmem:[#allocation2 + $0x110] sm:$0xff]
      %v3288 = vld [vmem:[#allocation2 + $0x118] sm:$0xff]
      %v3289 = vld [vmem:[#allocation2 + $0x120] sm:$0xff]
      %v3290 = vld [vmem:[#allocation2 + $0x128] sm:$0xff]
      %v3291 = vld [vmem:[#allocation2 + $0x130] sm:$0xff]
      %v3292 = vld [vmem:[#allocation2 + $0x138] sm:$0xff]
      %v3293 = vld [vmem:[#allocation2 + $0x140] sm:$0xff]
      %v3294 = vld [vmem:[#allocation2 + $0x148] sm:$0xff]
      %v3295 = vld [vmem:[#allocation2 + $0x150] sm:$0xff]
      %v3296 = vld [vmem:[#allocation2 + $0x158] sm:$0xff]
      %v3297 = vld [vmem:[#allocation2 + $0x160] sm:$0xff]
      %v3298 = vld [vmem:[#allocation2 + $0x168] sm:$0xff]
      %v3299 = vld [vmem:[#allocation2 + $0x170] sm:$0xff]
      %v3300 = vld [vmem:[#allocation2 + $0x178] sm:$0xff]
      %v3301 = vld [vmem:[#allocation2 + $0x180] sm:$0xff]
      %v3302 = vld [vmem:[#allocation2 + $0x188] sm:$0xff]
      %v3303 = vld [vmem:[#allocation2 + $0x190] sm:$0xff]
      %v3304 = vld [vmem:[#allocation2 + $0x198] sm:$0xff]
      %v3305 = vld [vmem:[#allocation2 + $0x1a0] sm:$0xff]
      %v3306 = vld [vmem:[#allocation2 + $0x1a8] sm:$0xff]
      %v3307 = vld [vmem:[#allocation2 + $0x1b0] sm:$0xff]
      %v3308 = vld [vmem:[#allocation2 + $0x1b8] sm:$0xff]
      %v3309 = vld [vmem:[#allocation2 + $0x1c0] sm:$0xff]
      %v3310 = vld [vmem:[#allocation2 + $0x1c8] sm:$0xff]
      %v3311 = vld [vmem:[#allocation2 + $0x1d0] sm:$0xff]
      %v3312 = vld [vmem:[#allocation2 + $0x1d8] sm:$0xff]
      %v3313 = vld [vmem:[#allocation2 + $0x1e0] sm:$0xff]
      %v3314 = vld [vmem:[#allocation2 + $0x1e8] sm:$0xff]
      %v3315 = vld [vmem:[#allocation2 + $0x1f0] sm:$0xff]
      %v3316 = vld [vmem:[#allocation2 + $0x1f8] sm:$0xff]
      %v3317 = vld [vmem:[#allocation2 + $0x200] sm:$0xff]
      %v3318 = vld [vmem:[#allocation2 + $0x208] sm:$0xff]
      %v3319 = vld [vmem:[#allocation2 + $0x210] sm:$0xff]
      %v3320 = vld [vmem:[#allocation2 + $0x218] sm:$0xff]
      %v3321 = vld [vmem:[#allocation2 + $0x220] sm:$0xff]
      %v3322 = vld [vmem:[#allocation2 + $0x228] sm:$0xff]
      %v3323 = vld [vmem:[#allocation2 + $0x230] sm:$0xff]
      %v3324 = vld [vmem:[#allocation2 + $0x238] sm:$0xff]
      %v3325 = vld [vmem:[#allocation2 + $0x240] sm:$0xff]
      %v3326 = vld [vmem:[#allocation2 + $0x248] sm:$0xff]
      %v3327 = vld [vmem:[#allocation2 + $0x250] sm:$0xff]
      %v3328 = vld [vmem:[#allocation2 + $0x258] sm:$0xff]
      %v3329 = vld [vmem:[#allocation2 + $0x260] sm:$0xff]
      %v3330 = vld [vmem:[#allocation2 + $0x268] sm:$0xff]
      %v3331 = vld [vmem:[#allocation2 + $0x270] sm:$0xff]
      %v3332 = vld [vmem:[#allocation2 + $0x278] sm:$0xff]
      %v3333 = vld [vmem:[#allocation2 + $0x280] sm:$0xff]
      %v3334 = vld [vmem:[#allocation2 + $0x288] sm:$0xff]
      %v3335 = vld [vmem:[#allocation2 + $0x290] sm:$0xff]
      %v3336 = vld [vmem:[#allocation2 + $0x298] sm:$0xff]
      %v3337 = vld [vmem:[#allocation2 + $0x2a0] sm:$0xff]
      %v3338 = vld [vmem:[#allocation2 + $0x2a8] sm:$0xff]
      %v3339 = vld [vmem:[#allocation2 + $0x2b0] sm:$0xff]
      %v3340 = vld [vmem:[#allocation2 + $0x2b8] sm:$0xff]
      %v3341 = vld [vmem:[#allocation2 + $0x2c0] sm:$0xff]
      %v3342 = vld [vmem:[#allocation2 + $0x2c8] sm:$0xff]
      %v3343 = vld [vmem:[#allocation2 + $0x2d0] sm:$0xff]
      %v3344 = vld [vmem:[#allocation2 + $0x2d8] sm:$0xff]
      %v3345 = vld [vmem:[#allocation2 + $0x2e0] sm:$0xff]
      %v3346 = vld [vmem:[#allocation2 + $0x2e8] sm:$0xff]
      %v3347 = vld [vmem:[#allocation2 + $0x2f0] sm:$0xff]
      %v3348 = vld [vmem:[#allocation2 + $0x2f8] sm:$0xff]
      %v3349 = vld [vmem:[#allocation2 + $0x300] sm:$0xff]
      %v3350 = vld [vmem:[#allocation2 + $0x308] sm:$0xff]
      %v3351 = vld [vmem:[#allocation2 + $0x310] sm:$0xff]
      %v3352 = vld [vmem:[#allocation2 + $0x318] sm:$0xff]
      %v3353 = vld [vmem:[%s5] sm:$0xff]
      %v3354 = vld [vmem:[%s5 + $0x8] sm:$0xff]
      %v3355 = vld [vmem:[%s5 + $0x10] sm:$0xff]
      %v3356 = vld [vmem:[%s5 + $0x18] sm:$0xff]
      %3358 = vset.pattern.permute.xlu0 0
      %3359 = vperm.xlu0 %3358, %v3353
      %v3360 = vpop.permute.xlu0 %3359
      %3363 = vset.pattern.permute.xlu0 0
      %3364 = vperm.xlu0 %3363, %v3354
      %v3365 = vpop.permute.xlu0 %3364
      %3368 = vset.pattern.permute.xlu0 0
      %3369 = vperm.xlu0 %3368, %v3355
      %v3370 = vpop.permute.xlu0 %3369
      %3373 = vset.pattern.permute.xlu0 0
      %3374 = vperm.xlu0 %3373, %v3356
      %v3375 = vpop.permute.xlu0 %3374
      %v3393 = vunpack.c.l.b16 %v3237
      %v3394 = vunpack.c.h.b16 %v3237
      %v3395 = vunpack.c.l.b16 %v3238
      %v3396 = vunpack.c.h.b16 %v3238
      %v3397 = vunpack.c.l.b16 %v3239
      %v3398 = vunpack.c.h.b16 %v3239
      %v3399 = vunpack.c.l.b16 %v3240
      %v3400 = vunpack.c.l.b16 %v3241
      %v3401 = vunpack.c.h.b16 %v3241
      %v3402 = vunpack.c.l.b16 %v3242
      %v3403 = vunpack.c.h.b16 %v3242
      %v3404 = vunpack.c.l.b16 %v3243
      %v3405 = vunpack.c.h.b16 %v3243
      %v3406 = vunpack.c.l.b16 %v3244
      %v3407 = vunpack.c.l.b16 %v3245
      %v3408 = vunpack.c.h.b16 %v3245
      %v3409 = vunpack.c.l.b16 %v3246
      %v3410 = vunpack.c.h.b16 %v3246
      %v3411 = vunpack.c.l.b16 %v3247
      %v3412 = vunpack.c.h.b16 %v3247
      %v3413 = vunpack.c.l.b16 %v3248
      %v3414 = vunpack.c.l.b16 %v3249
      %v3415 = vunpack.c.h.b16 %v3249
      %v3416 = vunpack.c.l.b16 %v3250
      %v3417 = vunpack.c.h.b16 %v3250
      %v3418 = vunpack.c.l.b16 %v3251
      %v3419 = vunpack.c.h.b16 %v3251
      %v3420 = vunpack.c.l.b16 %v3252
      %v3421 = vpack.c.b16 %v3400, %v3393
      %v3422 = vpack.c.b16 %v3401, %v3394
      %v3423 = vpack.c.b16 %v3402, %v3395
      %v3424 = vpack.c.b16 %v3403, %v3396
      %v3425 = vpack.c.b16 %v3404, %v3397
      %v3426 = vpack.c.b16 %v3405, %v3398
      %v3427 = vpack.c.b16 %v3406, %v3399
      %v3428 = vpack.c.b16 %v3414, %v3407
      %v3429 = vpack.c.b16 %v3415, %v3408
      %v3430 = vpack.c.b16 %v3416, %v3409
      %v3431 = vpack.c.b16 %v3417, %v3410
      %v3432 = vpack.c.b16 %v3418, %v3411
      %v3433 = vpack.c.b16 %v3419, %v3412
      %v3434 = vpack.c.b16 %v3420, %v3413
      %v3547 = vunpack.c.l.b16 %v3253
      %v3548 = vunpack.c.h.b16 %v3253
      %v3549 = vunpack.c.l.b16 %v3254
      %v3550 = vunpack.c.h.b16 %v3254
      %v3551 = vunpack.c.l.b16 %v3255
      %v3552 = vunpack.c.h.b16 %v3255
      %v3553 = vunpack.c.l.b16 %v3256
      %v3554 = vunpack.c.h.b16 %v3256
      %v3555 = vunpack.c.l.b16 %v3257
      %v3556 = vunpack.c.h.b16 %v3257
      %v3557 = vunpack.c.l.b16 %v3258
      %v3558 = vunpack.c.h.b16 %v3258
      %v3559 = vunpack.c.l.b16 %v3259
      %v3560 = vunpack.c.h.b16 %v3259
      %v3561 = vunpack.c.l.b16 %v3260
      %v3562 = vunpack.c.h.b16 %v3260
      %v3563 = vunpack.c.l.b16 %v3261
      %v3564 = vunpack.c.h.b16 %v3261
      %v3565 = vunpack.c.l.b16 %v3262
      %v3566 = vunpack.c.h.b16 %v3262
      %v3567 = vunpack.c.l.b16 %v3263
      %v3568 = vunpack.c.h.b16 %v3263
      %v3569 = vunpack.c.l.b16 %v3264
      %v3570 = vunpack.c.h.b16 %v3264
      %v3571 = vunpack.c.l.b16 %v3265
      %v3572 = vunpack.c.h.b16 %v3265
      %v3573 = vunpack.c.l.b16 %v3266
      %v3574 = vunpack.c.h.b16 %v3266
      %v3575 = vunpack.c.l.b16 %v3267
      %v3576 = vunpack.c.h.b16 %v3267
      %v3577 = vunpack.c.l.b16 %v3268
      %v3578 = vunpack.c.h.b16 %v3268
      %v3579 = vunpack.c.l.b16 %v3269
      %v3580 = vunpack.c.h.b16 %v3269
      %v3581 = vunpack.c.l.b16 %v3270
      %v3582 = vunpack.c.h.b16 %v3270
      %v3583 = vunpack.c.l.b16 %v3271
      %v3584 = vunpack.c.h.b16 %v3271
      %v3585 = vunpack.c.l.b16 %v3272
      %v3586 = vunpack.c.h.b16 %v3272
      %v3587 = vunpack.c.l.b16 %v3273
      %v3588 = vunpack.c.h.b16 %v3273
      %v3589 = vunpack.c.l.b16 %v3274
      %v3590 = vunpack.c.h.b16 %v3274
      %v3591 = vunpack.c.l.b16 %v3275
      %v3592 = vunpack.c.h.b16 %v3275
      %v3593 = vunpack.c.l.b16 %v3276
      %v3594 = vunpack.c.h.b16 %v3276
      %v3595 = vunpack.c.l.b16 %v3277
      %v3596 = vunpack.c.h.b16 %v3277
      %v3597 = vunpack.c.l.b16 %v3278
      %v3598 = vunpack.c.h.b16 %v3278
      %v3599 = vunpack.c.l.b16 %v3279
      %v3600 = vunpack.c.h.b16 %v3279
      %v3601 = vunpack.c.l.b16 %v3280
      %v3602 = vunpack.c.h.b16 %v3280
      %v3603 = vunpack.c.l.b16 %v3281
      %v3604 = vunpack.c.h.b16 %v3281
      %v3605 = vunpack.c.l.b16 %v3282
      %v3606 = vunpack.c.h.b16 %v3282
      %v3607 = vunpack.c.l.b16 %v3283
      %v3608 = vunpack.c.h.b16 %v3283
      %v3609 = vunpack.c.l.b16 %v3284
      %v3610 = vunpack.c.h.b16 %v3284
      %v3611 = vunpack.c.l.b16 %v3285
      %v3612 = vunpack.c.h.b16 %v3285
      %v3613 = vunpack.c.l.b16 %v3286
      %v3614 = vunpack.c.h.b16 %v3286
      %v3615 = vunpack.c.l.b16 %v3287
      %v3616 = vunpack.c.h.b16 %v3287
      %v3617 = vunpack.c.l.b16 %v3288
      %v3618 = vunpack.c.h.b16 %v3288
      %v3619 = vunpack.c.l.b16 %v3289
      %v3620 = vunpack.c.h.b16 %v3289
      %v3621 = vunpack.c.l.b16 %v3290
      %v3622 = vunpack.c.h.b16 %v3290
      %v3623 = vunpack.c.l.b16 %v3291
      %v3624 = vunpack.c.h.b16 %v3291
      %v3625 = vunpack.c.l.b16 %v3292
      %v3626 = vunpack.c.h.b16 %v3292
      %v3627 = vunpack.c.l.b16 %v3293
      %v3628 = vunpack.c.h.b16 %v3293
      %v3629 = vunpack.c.l.b16 %v3294
      %v3630 = vunpack.c.h.b16 %v3294
      %v3631 = vunpack.c.l.b16 %v3295
      %v3632 = vunpack.c.h.b16 %v3295
      %v3633 = vunpack.c.l.b16 %v3296
      %v3634 = vunpack.c.h.b16 %v3296
      %v3635 = vunpack.c.l.b16 %v3297
      %v3636 = vunpack.c.h.b16 %v3297
      %v3637 = vunpack.c.l.b16 %v3298
      %v3638 = vunpack.c.h.b16 %v3298
      %v3639 = vunpack.c.l.b16 %v3299
      %v3640 = vunpack.c.h.b16 %v3299
      %v3641 = vunpack.c.l.b16 %v3300
      %v3642 = vunpack.c.h.b16 %v3300
      %v3643 = vunpack.c.l.b16 %v3301
      %v3644 = vunpack.c.h.b16 %v3301
      %v3645 = vunpack.c.l.b16 %v3302
      %v3646 = vunpack.c.h.b16 %v3302
      %v3647 = vunpack.c.l.b16 %v3303
      %v3648 = vunpack.c.h.b16 %v3303
      %v3649 = vunpack.c.l.b16 %v3304
      %v3650 = vunpack.c.h.b16 %v3304
      %v3651 = vunpack.c.l.b16 %v3305
      %v3652 = vunpack.c.h.b16 %v3305
      %v3653 = vunpack.c.l.b16 %v3306
      %v3654 = vunpack.c.h.b16 %v3306
      %v3655 = vunpack.c.l.b16 %v3307
      %v3656 = vunpack.c.h.b16 %v3307
      %v3657 = vunpack.c.l.b16 %v3308
      %v3658 = vunpack.c.h.b16 %v3308
      %v3659 = vunpack.c.l.b16 %v3309
      %v3660 = vunpack.c.h.b16 %v3309
      %v3661 = vunpack.c.l.b16 %v3310
      %v3662 = vunpack.c.h.b16 %v3310
      %v3663 = vunpack.c.l.b16 %v3311
      %v3664 = vunpack.c.h.b16 %v3311
      %v3665 = vunpack.c.l.b16 %v3312
      %v3666 = vunpack.c.h.b16 %v3312
      %v3667 = vunpack.c.l.b16 %v3313
      %v3668 = vunpack.c.h.b16 %v3313
      %v3669 = vunpack.c.l.b16 %v3314
      %v3670 = vunpack.c.h.b16 %v3314
      %v3671 = vunpack.c.l.b16 %v3315
      %v3672 = vunpack.c.h.b16 %v3315
      %v3673 = vunpack.c.l.b16 %v3316
      %v3674 = vunpack.c.h.b16 %v3316
      %v3675 = vunpack.c.l.b16 %v3317
      %v3676 = vunpack.c.h.b16 %v3317
      %v3677 = vunpack.c.l.b16 %v3318
      %v3678 = vunpack.c.h.b16 %v3318
      %v3679 = vunpack.c.l.b16 %v3319
      %v3680 = vunpack.c.h.b16 %v3319
      %v3681 = vunpack.c.l.b16 %v3320
      %v3682 = vunpack.c.h.b16 %v3320
      %v3683 = vunpack.c.l.b16 %v3321
      %v3684 = vunpack.c.h.b16 %v3321
      %v3685 = vunpack.c.l.b16 %v3322
      %v3686 = vunpack.c.h.b16 %v3322
      %v3687 = vunpack.c.l.b16 %v3323
      %v3688 = vunpack.c.h.b16 %v3323
      %v3689 = vunpack.c.l.b16 %v3324
      %v3690 = vunpack.c.h.b16 %v3324
      %v3691 = vunpack.c.l.b16 %v3325
      %v3692 = vunpack.c.h.b16 %v3325
      %v3693 = vunpack.c.l.b16 %v3326
      %v3694 = vunpack.c.h.b16 %v3326
      %v3695 = vunpack.c.l.b16 %v3327
      %v3696 = vunpack.c.h.b16 %v3327
      %v3697 = vunpack.c.l.b16 %v3328
      %v3698 = vunpack.c.h.b16 %v3328
      %v3699 = vunpack.c.l.b16 %v3329
      %v3700 = vunpack.c.h.b16 %v3329
      %v3701 = vunpack.c.l.b16 %v3330
      %v3702 = vunpack.c.h.b16 %v3330
      %v3703 = vunpack.c.l.b16 %v3331
      %v3704 = vunpack.c.h.b16 %v3331
      %v3705 = vunpack.c.l.b16 %v3332
      %v3706 = vunpack.c.h.b16 %v3332
      %v3707 = vunpack.c.l.b16 %v3333
      %v3708 = vunpack.c.h.b16 %v3333
      %v3709 = vunpack.c.l.b16 %v3334
      %v3710 = vunpack.c.h.b16 %v3334
      %v3711 = vunpack.c.l.b16 %v3335
      %v3712 = vunpack.c.h.b16 %v3335
      %v3713 = vunpack.c.l.b16 %v3336
      %v3714 = vunpack.c.h.b16 %v3336
      %v3715 = vunpack.c.l.b16 %v3337
      %v3716 = vunpack.c.h.b16 %v3337
      %v3717 = vunpack.c.l.b16 %v3338
      %v3718 = vunpack.c.h.b16 %v3338
      %v3719 = vunpack.c.l.b16 %v3339
      %v3720 = vunpack.c.h.b16 %v3339
      %v3721 = vunpack.c.l.b16 %v3340
      %v3722 = vunpack.c.h.b16 %v3340
      %v3723 = vunpack.c.l.b16 %v3341
      %v3724 = vunpack.c.h.b16 %v3341
      %v3725 = vunpack.c.l.b16 %v3342
      %v3726 = vunpack.c.h.b16 %v3342
      %v3727 = vunpack.c.l.b16 %v3343
      %v3728 = vunpack.c.h.b16 %v3343
      %v3729 = vunpack.c.l.b16 %v3344
      %v3730 = vunpack.c.h.b16 %v3344
      %v3731 = vunpack.c.l.b16 %v3345
      %v3732 = vunpack.c.h.b16 %v3345
      %v3733 = vunpack.c.l.b16 %v3346
      %v3734 = vunpack.c.h.b16 %v3346
      %v3735 = vunpack.c.l.b16 %v3347
      %v3736 = vunpack.c.h.b16 %v3347
      %v3737 = vunpack.c.l.b16 %v3348
      %v3738 = vunpack.c.h.b16 %v3348
      %v3739 = vunpack.c.l.b16 %v3349
      %v3740 = vunpack.c.h.b16 %v3349
      %v3741 = vunpack.c.l.b16 %v3350
      %v3742 = vunpack.c.h.b16 %v3350
      %v3743 = vunpack.c.l.b16 %v3351
      %v3744 = vunpack.c.h.b16 %v3351
      %v3745 = vunpack.c.l.b16 %v3352
      %v3746 = vunpack.c.h.b16 %v3352
      %v3747 = vpack.c.b16 %v3549, %v3547
      %v3748 = vpack.c.b16 %v3550, %v3548
      %v3749 = vpack.c.b16 %v3553, %v3551
      %v3750 = vpack.c.b16 %v3554, %v3552
      %v3751 = vpack.c.b16 %v3557, %v3555
      %v3752 = vpack.c.b16 %v3558, %v3556
      %v3753 = vpack.c.b16 %v3561, %v3559
      %v3754 = vpack.c.b16 %v3562, %v3560
      %v3755 = vpack.c.b16 %v3565, %v3563
      %v3756 = vpack.c.b16 %v3566, %v3564
      %v3757 = vpack.c.b16 %v3569, %v3567
      %v3758 = vpack.c.b16 %v3570, %v3568
      %v3759 = vpack.c.b16 %v3573, %v3571
      %v3760 = vpack.c.b16 %v3574, %v3572
      %v3761 = vpack.c.b16 %v3577, %v3575
      %v3762 = vpack.c.b16 %v3578, %v3576
      %v3763 = vpack.c.b16 %v3581, %v3579
      %v3764 = vpack.c.b16 %v3582, %v3580
      %v3765 = vpack.c.b16 %v3585, %v3583
      %v3766 = vpack.c.b16 %v3586, %v3584
      %v3767 = vpack.c.b16 %v3589, %v3587
      %v3768 = vpack.c.b16 %v3590, %v3588
      %v3769 = vpack.c.b16 %v3593, %v3591
      %v3770 = vpack.c.b16 %v3594, %v3592
      %v3771 = vpack.c.b16 %v3597, %v3595
      %v3772 = vpack.c.b16 %v3598, %v3596
      %v3773 = vpack.c.b16 %v3601, %v3599
      %v3774 = vpack.c.b16 %v3602, %v3600
      %v3775 = vpack.c.b16 %v3605, %v3603
      %v3776 = vpack.c.b16 %v3606, %v3604
      %v3777 = vpack.c.b16 %v3609, %v3607
      %v3778 = vpack.c.b16 %v3610, %v3608
      %v3779 = vpack.c.b16 %v3613, %v3611
      %v3780 = vpack.c.b16 %v3614, %v3612
      %v3781 = vpack.c.b16 %v3617, %v3615
      %v3782 = vpack.c.b16 %v3618, %v3616
      %v3783 = vpack.c.b16 %v3621, %v3619
      %v3784 = vpack.c.b16 %v3622, %v3620
      %v3785 = vpack.c.b16 %v3625, %v3623
      %v3786 = vpack.c.b16 %v3626, %v3624
      %v3787 = vpack.c.b16 %v3629, %v3627
      %v3788 = vpack.c.b16 %v3630, %v3628
      %v3789 = vpack.c.b16 %v3633, %v3631
      %v3790 = vpack.c.b16 %v3634, %v3632
      %v3791 = vpack.c.b16 %v3637, %v3635
      %v3792 = vpack.c.b16 %v3638, %v3636
      %v3793 = vpack.c.b16 %v3641, %v3639
      %v3794 = vpack.c.b16 %v3642, %v3640
      %v3795 = vpack.c.b16 %v3645, %v3643
      %v3796 = vpack.c.b16 %v3646, %v3644
      %v3797 = vpack.c.b16 %v3649, %v3647
      %v3798 = vpack.c.b16 %v3650, %v3648
      %v3799 = vpack.c.b16 %v3653, %v3651
      %v3800 = vpack.c.b16 %v3654, %v3652
      %v3801 = vpack.c.b16 %v3657, %v3655
      %v3802 = vpack.c.b16 %v3658, %v3656
      %v3803 = vpack.c.b16 %v3661, %v3659
      %v3804 = vpack.c.b16 %v3662, %v3660
      %v3805 = vpack.c.b16 %v3665, %v3663
      %v3806 = vpack.c.b16 %v3666, %v3664
      %v3807 = vpack.c.b16 %v3669, %v3667
      %v3808 = vpack.c.b16 %v3670, %v3668
      %v3809 = vpack.c.b16 %v3673, %v3671
      %v3810 = vpack.c.b16 %v3674, %v3672
      %v3811 = vpack.c.b16 %v3677, %v3675
      %v3812 = vpack.c.b16 %v3678, %v3676
      %v3813 = vpack.c.b16 %v3681, %v3679
      %v3814 = vpack.c.b16 %v3682, %v3680
      %v3815 = vpack.c.b16 %v3685, %v3683
      %v3816 = vpack.c.b16 %v3686, %v3684
      %v3817 = vpack.c.b16 %v3689, %v3687
      %v3818 = vpack.c.b16 %v3690, %v3688
      %v3819 = vpack.c.b16 %v3693, %v3691
      %v3820 = vpack.c.b16 %v3694, %v3692
      %v3821 = vpack.c.b16 %v3697, %v3695
      %v3822 = vpack.c.b16 %v3698, %v3696
      %v3823 = vpack.c.b16 %v3701, %v3699
      %v3824 = vpack.c.b16 %v3702, %v3700
      %v3825 = vpack.c.b16 %v3705, %v3703
      %v3826 = vpack.c.b16 %v3706, %v3704
      %v3827 = vpack.c.b16 %v3709, %v3707
      %v3828 = vpack.c.b16 %v3710, %v3708
      %v3829 = vpack.c.b16 %v3713, %v3711
      %v3830 = vpack.c.b16 %v3714, %v3712
      %v3831 = vpack.c.b16 %v3717, %v3715
      %v3832 = vpack.c.b16 %v3718, %v3716
      %v3833 = vpack.c.b16 %v3721, %v3719
      %v3834 = vpack.c.b16 %v3722, %v3720
      %v3835 = vpack.c.b16 %v3725, %v3723
      %v3836 = vpack.c.b16 %v3726, %v3724
      %v3837 = vpack.c.b16 %v3729, %v3727
      %v3838 = vpack.c.b16 %v3730, %v3728
      %v3839 = vpack.c.b16 %v3733, %v3731
      %v3840 = vpack.c.b16 %v3734, %v3732
      %v3841 = vpack.c.b16 %v3737, %v3735
      %v3842 = vpack.c.b16 %v3738, %v3736
      %v3843 = vpack.c.b16 %v3741, %v3739
      %v3844 = vpack.c.b16 %v3742, %v3740
      %v3845 = vpack.c.b16 %v3745, %v3743
      %v3846 = vpack.c.b16 %v3746, %v3744
      %vm3947 = vcmask 261120
      %v3949 = vsel %vm3947, %v3427, 0
      %v3952 = vsel %vm3947, %v3434, 0
      %3954 = vmatpush.bf16.msra.mxu0 %v3761
      %3955 = vmatpush.bf16.msra.mxu0 %v3759
      %3956 = vmatpush.bf16.msra.mxu0 %v3757
      %3957 = vmatpush.bf16.msra.mxu0 %v3755
      %3958 = vmatpush.bf16.msra.mxu0 %v3753
      %3959 = vmatpush.bf16.msra.mxu0 %v3751
      %3960 = vmatpush.bf16.msra.mxu0 %v3749
      %3961 = vmatpush.bf16.msra.mxu0 %v3747
      %3962 = vmatmul.bf16.gmra.mxu0 %v3421
      %v3963 = vpop.f32.mrf.mxu0
      %v3964 = vadd.f32 %v3360, %v3963
      %v3965 = vpop.f32.mrf.mxu0
      %v3966 = vadd.f32 %v3365, %v3965
      %3967 = vmatmul.bf16.gmra.mxu0 %v3428
      %v3968 = vpop.f32.mrf.mxu0
      %v3969 = vadd.f32 %v3370, %v3968
      %v3970 = vpop.f32.mrf.mxu0
      %v3971 = vadd.f32 %v3375, %v3970
      %3972 = vdwg.mxu0
      %3973 = vmatpush.bf16.msra.mxu0 %v3777
      %3974 = vmatpush.bf16.msra.mxu0 %v3775
      %3975 = vmatpush.bf16.msra.mxu0 %v3773
      %3976 = vmatpush.bf16.msra.mxu0 %v3771
      %3977 = vmatpush.bf16.msra.mxu0 %v3769
      %3978 = vmatpush.bf16.msra.mxu0 %v3767
      %3979 = vmatpush.bf16.msra.mxu0 %v3765
      %3980 = vmatpush.bf16.msra.mxu0 %v3763
      %3981 = vmatmul.bf16.gmra.mxu0 %v3422
      %v3982 = vpop.f32.mrf.mxu0
      %v3983 = vadd.f32 %v3964, %v3982
      %v3984 = vpop.f32.mrf.mxu0
      %v3985 = vadd.f32 %v3966, %v3984
      %3986 = vmatmul.bf16.gmra.mxu0 %v3429
      %v3987 = vpop.f32.mrf.mxu0
      %v3988 = vadd.f32 %v3969, %v3987
      %v3989 = vpop.f32.mrf.mxu0
      %v3990 = vadd.f32 %v3971, %v3989
      %3991 = vdwg.mxu0
      %3992 = vmatpush.bf16.msra.mxu0 %v3793
      %3993 = vmatpush.bf16.msra.mxu0 %v3791
      %3994 = vmatpush.bf16.msra.mxu0 %v3789
      %3995 = vmatpush.bf16.msra.mxu0 %v3787
      %3996 = vmatpush.bf16.msra.mxu0 %v3785
      %3997 = vmatpush.bf16.msra.mxu0 %v3783
      %3998 = vmatpush.bf16.msra.mxu0 %v3781
      %3999 = vmatpush.bf16.msra.mxu0 %v3779
      %4000 = vmatmul.bf16.gmra.mxu0 %v3423
      %v4001 = vpop.f32.mrf.mxu0
      %v4002 = vadd.f32 %v3983, %v4001
      %v4003 = vpop.f32.mrf.mxu0
      %v4004 = vadd.f32 %v3985, %v4003
      %4005 = vmatmul.bf16.gmra.mxu0 %v3430
      %v4006 = vpop.f32.mrf.mxu0
      %v4007 = vadd.f32 %v3988, %v4006
      %v4008 = vpop.f32.mrf.mxu0
      %v4009 = vadd.f32 %v3990, %v4008
      %4010 = vdwg.mxu0
      %4011 = vmatpush.bf16.msra.mxu0 %v3809
      %4012 = vmatpush.bf16.msra.mxu0 %v3807
      %4013 = vmatpush.bf16.msra.mxu0 %v3805
      %4014 = vmatpush.bf16.msra.mxu0 %v3803
      %4015 = vmatpush.bf16.msra.mxu0 %v3801
      %4016 = vmatpush.bf16.msra.mxu0 %v3799
      %4017 = vmatpush.bf16.msra.mxu0 %v3797
      %4018 = vmatpush.bf16.msra.mxu0 %v3795
      %4019 = vmatmul.bf16.gmra.mxu0 %v3424
      %v4020 = vpop.f32.mrf.mxu0
      %v4021 = vadd.f32 %v4002, %v4020
      %v4022 = vpop.f32.mrf.mxu0
      %v4023 = vadd.f32 %v4004, %v4022
      %4024 = vmatmul.bf16.gmra.mxu0 %v3431
      %v4025 = vpop.f32.mrf.mxu0
      %v4026 = vadd.f32 %v4007, %v4025
      %v4027 = vpop.f32.mrf.mxu0
      %v4028 = vadd.f32 %v4009, %v4027
      %4029 = vdwg.mxu0
      %4030 = vmatpush.bf16.msra.mxu0 %v3825
      %4031 = vmatpush.bf16.msra.mxu0 %v3823
      %4032 = vmatpush.bf16.msra.mxu0 %v3821
      %4033 = vmatpush.bf16.msra.mxu0 %v3819
      %4034 = vmatpush.bf16.msra.mxu0 %v3817
      %4035 = vmatpush.bf16.msra.mxu0 %v3815
      %4036 = vmatpush.bf16.msra.mxu0 %v3813
      %4037 = vmatpush.bf16.msra.mxu0 %v3811
      %4038 = vmatmul.bf16.gmra.mxu0 %v3425
      %v4039 = vpop.f32.mrf.mxu0
      %v4040 = vadd.f32 %v4021, %v4039
      %v4041 = vpop.f32.mrf.mxu0
      %v4042 = vadd.f32 %v4023, %v4041
      %4043 = vmatmul.bf16.gmra.mxu0 %v3432
      %v4044 = vpop.f32.mrf.mxu0
      %v4045 = vadd.f32 %v4026, %v4044
      %v4046 = vpop.f32.mrf.mxu0
      %v4047 = vadd.f32 %v4028, %v4046
      %4048 = vdwg.mxu0
      %4049 = vmatpush.bf16.msra.mxu0 %v3841
      %4050 = vmatpush.bf16.msra.mxu0 %v3839
      %4051 = vmatpush.bf16.msra.mxu0 %v3837
      %4052 = vmatpush.bf16.msra.mxu0 %v3835
      %4053 = vmatpush.bf16.msra.mxu0 %v3833
      %4054 = vmatpush.bf16.msra.mxu0 %v3831
      %4055 = vmatpush.bf16.msra.mxu0 %v3829
      %4056 = vmatpush.bf16.msra.mxu0 %v3827
      %4057 = vmatmul.bf16.gmra.mxu0 %v3426
      %v4058 = vpop.f32.mrf.mxu0
      %v4059 = vadd.f32 %v4040, %v4058
      %v4060 = vpop.f32.mrf.mxu0
      %v4061 = vadd.f32 %v4042, %v4060
      %4062 = vmatmul.bf16.gmra.mxu0 %v3433
      %v4063 = vpop.f32.mrf.mxu0
      %v4064 = vadd.f32 %v4045, %v4063
      %v4065 = vpop.f32.mrf.mxu0
      %v4066 = vadd.f32 %v4047, %v4065
      %4067 = vdwg.mxu0
      %4068 = vmatpush.bf16.msra.mxu0 0
      %4069 = vmatpush.bf16.msra.mxu0 0
      %4070 = vmatpush.bf16.msra.mxu0 0
      %4071 = vmatpush.bf16.msra.mxu0 0
      %4072 = vmatpush.bf16.msra.mxu0 0
      %4073 = vmatpush.bf16.msra.mxu0 0
      %4074 = vmatpush.bf16.msra.mxu0 %v3845
      %4075 = vmatpush.bf16.msra.mxu0 %v3843
      %4076 = vmatmul.bf16.gmra.mxu0 %v3949
      %v4077 = vpop.f32.mrf.mxu0
      %v4078 = vadd.f32 %v4059, %v4077
      %v4079 = vpop.f32.mrf.mxu0
      %v4080 = vadd.f32 %v4061, %v4079
      %4081 = vmatmul.bf16.gmra.mxu0 %v3952
      %v4082 = vpop.f32.mrf.mxu0
      %v4083 = vadd.f32 %v4064, %v4082
      %v4084 = vpop.f32.mrf.mxu0
      %v4085 = vadd.f32 %v4066, %v4084
      %4086 = vdwg.mxu0
      %4087 = vmatpush.bf16.msra.mxu0 %v3762
      %4088 = vmatpush.bf16.msra.mxu0 %v3760
      %4089 = vmatpush.bf16.msra.mxu0 %v3758
      %4090 = vmatpush.bf16.msra.mxu0 %v3756
      %4091 = vmatpush.bf16.msra.mxu0 %v3754
      %4092 = vmatpush.bf16.msra.mxu0 %v3752
      %4093 = vmatpush.bf16.msra.mxu0 %v3750
      %4094 = vmatpush.bf16.msra.mxu0 %v3748
      %4095 = vmatmul.bf16.gmra.mxu0 %v3421
      %v4096 = vpop.f32.mrf.mxu0
      %v4097 = vadd.f32 %v3360, %v4096
      %v4098 = vpop.f32.mrf.mxu0
      %v4099 = vadd.f32 %v3365, %v4098
      %4100 = vmatmul.bf16.gmra.mxu0 %v3428
      %v4101 = vpop.f32.mrf.mxu0
      %v4102 = vadd.f32 %v3370, %v4101
      %v4103 = vpop.f32.mrf.mxu0
      %v4104 = vadd.f32 %v3375, %v4103
      %4105 = vdwg.mxu0
      %4106 = vmatpush.bf16.msra.mxu0 %v3778
      %4107 = vmatpush.bf16.msra.mxu0 %v3776
      %4108 = vmatpush.bf16.msra.mxu0 %v3774
      %4109 = vmatpush.bf16.msra.mxu0 %v3772
      %4110 = vmatpush.bf16.msra.mxu0 %v3770
      %4111 = vmatpush.bf16.msra.mxu0 %v3768
      %4112 = vmatpush.bf16.msra.mxu0 %v3766
      %4113 = vmatpush.bf16.msra.mxu0 %v3764
      %4114 = vmatmul.bf16.gmra.mxu0 %v3422
      %v4115 = vpop.f32.mrf.mxu0
      %v4116 = vadd.f32 %v4097, %v4115
      %v4117 = vpop.f32.mrf.mxu0
      %v4118 = vadd.f32 %v4099, %v4117
      %4119 = vmatmul.bf16.gmra.mxu0 %v3429
      %v4120 = vpop.f32.mrf.mxu0
      %v4121 = vadd.f32 %v4102, %v4120
      %v4122 = vpop.f32.mrf.mxu0
      %v4123 = vadd.f32 %v4104, %v4122
      %4124 = vdwg.mxu0
      %4125 = vmatpush.bf16.msra.mxu0 %v3794
      %4126 = vmatpush.bf16.msra.mxu0 %v3792
      %4127 = vmatpush.bf16.msra.mxu0 %v3790
      %4128 = vmatpush.bf16.msra.mxu0 %v3788
      %4129 = vmatpush.bf16.msra.mxu0 %v3786
      %4130 = vmatpush.bf16.msra.mxu0 %v3784
      %4131 = vmatpush.bf16.msra.mxu0 %v3782
      %4132 = vmatpush.bf16.msra.mxu0 %v3780
      %4133 = vmatmul.bf16.gmra.mxu0 %v3423
      %v4134 = vpop.f32.mrf.mxu0
      %v4135 = vadd.f32 %v4116, %v4134
      %v4136 = vpop.f32.mrf.mxu0
      %v4137 = vadd.f32 %v4118, %v4136
      %4138 = vmatmul.bf16.gmra.mxu0 %v3430
      %v4139 = vpop.f32.mrf.mxu0
      %v4140 = vadd.f32 %v4121, %v4139
      %v4141 = vpop.f32.mrf.mxu0
      %v4142 = vadd.f32 %v4123, %v4141
      %4143 = vdwg.mxu0
      %4144 = vmatpush.bf16.msra.mxu0 %v3810
      %4145 = vmatpush.bf16.msra.mxu0 %v3808
      %4146 = vmatpush.bf16.msra.mxu0 %v3806
      %4147 = vmatpush.bf16.msra.mxu0 %v3804
      %4148 = vmatpush.bf16.msra.mxu0 %v3802
      %4149 = vmatpush.bf16.msra.mxu0 %v3800
      %4150 = vmatpush.bf16.msra.mxu0 %v3798
      %4151 = vmatpush.bf16.msra.mxu0 %v3796
      %4152 = vmatmul.bf16.gmra.mxu0 %v3424
      %v4153 = vpop.f32.mrf.mxu0
      %v4154 = vadd.f32 %v4135, %v4153
      %v4155 = vpop.f32.mrf.mxu0
      %v4156 = vadd.f32 %v4137, %v4155
      %4157 = vmatmul.bf16.gmra.mxu0 %v3431
      %v4158 = vpop.f32.mrf.mxu0
      %v4159 = vadd.f32 %v4140, %v4158
      %v4160 = vpop.f32.mrf.mxu0
      %v4161 = vadd.f32 %v4142, %v4160
      %4162 = vdwg.mxu0
      %4163 = vmatpush.bf16.msra.mxu0 %v3826
      %4164 = vmatpush.bf16.msra.mxu0 %v3824
      %4165 = vmatpush.bf16.msra.mxu0 %v3822
      %4166 = vmatpush.bf16.msra.mxu0 %v3820
      %4167 = vmatpush.bf16.msra.mxu0 %v3818
      %4168 = vmatpush.bf16.msra.mxu0 %v3816
      %4169 = vmatpush.bf16.msra.mxu0 %v3814
      %4170 = vmatpush.bf16.msra.mxu0 %v3812
      %4171 = vmatmul.bf16.gmra.mxu0 %v3425
      %v4172 = vpop.f32.mrf.mxu0
      %v4173 = vadd.f32 %v4154, %v4172
      %v4174 = vpop.f32.mrf.mxu0
      %v4175 = vadd.f32 %v4156, %v4174
      %4176 = vmatmul.bf16.gmra.mxu0 %v3432
      %v4177 = vpop.f32.mrf.mxu0
      %v4178 = vadd.f32 %v4159, %v4177
      %v4179 = vpop.f32.mrf.mxu0
      %v4180 = vadd.f32 %v4161, %v4179
      %4181 = vdwg.mxu0
      %4182 = vmatpush.bf16.msra.mxu0 %v3842
      %4183 = vmatpush.bf16.msra.mxu0 %v3840
      %4184 = vmatpush.bf16.msra.mxu0 %v3838
      %4185 = vmatpush.bf16.msra.mxu0 %v3836
      %4186 = vmatpush.bf16.msra.mxu0 %v3834
      %4187 = vmatpush.bf16.msra.mxu0 %v3832
      %4188 = vmatpush.bf16.msra.mxu0 %v3830
      %4189 = vmatpush.bf16.msra.mxu0 %v3828
      %4190 = vmatmul.bf16.gmra.mxu0 %v3426
      %v4191 = vpop.f32.mrf.mxu0
      %v4192 = vadd.f32 %v4173, %v4191
      %v4193 = vpop.f32.mrf.mxu0
      %v4194 = vadd.f32 %v4175, %v4193
      %4195 = vmatmul.bf16.gmra.mxu0 %v3433
      %v4196 = vpop.f32.mrf.mxu0
      %v4197 = vadd.f32 %v4178, %v4196
      %v4198 = vpop.f32.mrf.mxu0
      %v4199 = vadd.f32 %v4180, %v4198
      %4200 = vdwg.mxu0
      %4201 = vmatpush.bf16.msra.mxu0 0
      %4202 = vmatpush.bf16.msra.mxu0 0
      %4203 = vmatpush.bf16.msra.mxu0 0
      %4204 = vmatpush.bf16.msra.mxu0 0
      %4205 = vmatpush.bf16.msra.mxu0 0
      %4206 = vmatpush.bf16.msra.mxu0 0
      %4207 = vmatpush.bf16.msra.mxu0 %v3846
      %4208 = vmatpush.bf16.msra.mxu0 %v3844
      %4209 = vmatmul.bf16.gmra.mxu0 %v3949
      %v4210 = vpop.f32.mrf.mxu0
      %v4211 = vadd.f32 %v4192, %v4210
      %v4212 = vpop.f32.mrf.mxu0
      %v4213 = vadd.f32 %v4194, %v4212
      %4214 = vmatmul.bf16.gmra.mxu0 %v3952
      %v4215 = vpop.f32.mrf.mxu0
      %v4216 = vadd.f32 %v4197, %v4215
      %v4217 = vpop.f32.mrf.mxu0
      %v4218 = vadd.f32 %v4199, %v4217
      %4219 = vdwg.mxu0
      %vm4220 = vcmp.gt.f32.partialorder %v4078, 0.0
      %vm4221 = vcmp.gt.f32.partialorder %v4211, 0.0
      %vm4222 = vcmp.gt.f32.partialorder %v4080, 0.0
      %vm4223 = vcmp.gt.f32.partialorder %v4213, 0.0
      %vm4224 = vcmp.gt.f32.partialorder %v4083, 0.0
      %vm4225 = vcmp.gt.f32.partialorder %v4216, 0.0
      %vm4226 = vcmp.gt.f32.partialorder %v4085, 0.0
      %vm4227 = vcmp.gt.f32.partialorder %v4218, 0.0
      %v4228 = vmin.f32 %v4078, 0.0
      %v4229 = vmin.f32 %v4211, 0.0
      %v4230 = vmin.f32 %v4080, 0.0
      %v4231 = vmin.f32 %v4213, 0.0
      %v4232 = vmin.f32 %v4083, 0.0
      %v4233 = vmin.f32 %v4216, 0.0
      %v4234 = vmin.f32 %v4085, 0.0
      %v4235 = vmin.f32 %v4218, 0.0
      %v4236 = vmul.f32 %v4228, 1.442695
      %v4237 = vpow.pop %v4236
      %v4238 = vmul.f32 %v4229, 1.442695
      %v4239 = vpow.pop %v4238
      %v4240 = vmul.f32 %v4230, 1.442695
      %v4241 = vpow.pop %v4240
      %v4242 = vmul.f32 %v4231, 1.442695
      %v4243 = vpow.pop %v4242
      %v4244 = vmul.f32 %v4232, 1.442695
      %v4245 = vpow.pop %v4244
      %v4246 = vmul.f32 %v4233, 1.442695
      %v4247 = vpow.pop %v4246
      %v4248 = vmul.f32 %v4234, 1.442695
      %v4249 = vpow.pop %v4248
      %v4250 = vmul.f32 %v4235, 1.442695
      %v4251 = vpow.pop %v4250
      %v4252 = vsub.f32 %v4237, 1.0
      %v4253 = vsub.f32 %v4239, 1.0
      %v4254 = vsub.f32 %v4241, 1.0
      %v4255 = vsub.f32 %v4243, 1.0
      %v4256 = vsub.f32 %v4245, 1.0
      %v4257 = vsub.f32 %v4247, 1.0
      %v4258 = vsub.f32 %v4249, 1.0
      %v4259 = vsub.f32 %v4251, 1.0
      %v4260 = vsel %vm4220, %v4078, %v4252
      %v4261 = vsel %vm4221, %v4211, %v4253
      %v4262 = vsel %vm4222, %v4080, %v4254
      %v4263 = vsel %vm4223, %v4213, %v4255
      %v4264 = vsel %vm4224, %v4083, %v4256
      %v4265 = vsel %vm4225, %v4216, %v4257
      %v4266 = vsel %vm4226, %v4085, %v4258
      %v4267 = vsel %vm4227, %v4218, %v4259
      %v4268 = vpack.c.bf16 %v4262, %v4260
      %v4269 = vpack.c.bf16 %v4263, %v4261
      %v4270 = vpack.c.bf16 %v4266, %v4264
      %v4271 = vpack.c.bf16 %v4267, %v4265
      %v4272 = vld [vmem:[%s6] sm:$0xf]
      %v4273 = vld [vmem:[%s6 + $0x4] sm:$0xf]
      %v4274 = vld [vmem:[%s6 + $0x8] sm:$0xf]
      %v4275 = vld [vmem:[%s6 + $0xc] sm:$0xf]
      %v4276 = vld [vmem:[%s6 + $0x10] sm:$0xf]
      %v4277 = vld [vmem:[%s6 + $0x14] sm:$0xf]
      %v4278 = vld [vmem:[%s6 + $0x18] sm:$0xf]
      %v4279 = vld [vmem:[%s6 + $0x1c] sm:$0xf]
      %v4280 = vld [vmem:[%s6 + $0x20] sm:$0xf]
      %v4281 = vld [vmem:[%s6 + $0x24] sm:$0xf]
      %v4282 = vld [vmem:[%s6 + $0x28] sm:$0xf]
      %v4283 = vld [vmem:[%s6 + $0x2c] sm:$0xf]
      %v4284 = vld [vmem:[%s6 + $0x30] sm:$0xf]
      %v4285 = vld [vmem:[%s6 + $0x34] sm:$0xf]
      %v4286 = vld [vmem:[%s6 + $0x38] sm:$0xf]
      %v4287 = vld [vmem:[%s6 + $0x3c] sm:$0xf]
      %v4288 = vld [vmem:[%s6 + $0x40] sm:$0xf]
      %v4289 = vld [vmem:[%s6 + $0x44] sm:$0xf]
      %v4290 = vld [vmem:[%s6 + $0x48] sm:$0xf]
      %v4291 = vld [vmem:[%s6 + $0x4c] sm:$0xf]
      %v4292 = vld [vmem:[%s6 + $0x50] sm:$0xf]
      %v4293 = vld [vmem:[%s6 + $0x54] sm:$0xf]
      %v4294 = vld [vmem:[%s6 + $0x58] sm:$0xf]
      %v4295 = vld [vmem:[%s6 + $0x5c] sm:$0xf]
      %v4296 = vld [vmem:[%s6 + $0x60] sm:$0xf]
      %v4297 = vld [vmem:[%s6 + $0x64] sm:$0xf]
      %v4298 = vld [vmem:[%s6 + $0x68] sm:$0xf]
      %v4299 = vld [vmem:[%s6 + $0x6c] sm:$0xf]
      %v4300 = vld [vmem:[%s6 + $0x70] sm:$0xf]
      %v4301 = vld [vmem:[%s6 + $0x74] sm:$0xf]
      %v4302 = vld [vmem:[%s6 + $0x78] sm:$0xf]
      %v4303 = vld [vmem:[%s6 + $0x7c] sm:$0xf]
      %v4336 = vunpack.c.l.b16 %v4272
      %v4337 = vunpack.c.l.b16 %v4273
      %v4338 = vunpack.c.l.b16 %v4274
      %v4339 = vunpack.c.l.b16 %v4275
      %v4340 = vunpack.c.l.b16 %v4276
      %v4341 = vunpack.c.l.b16 %v4277
      %v4342 = vunpack.c.l.b16 %v4278
      %v4343 = vunpack.c.l.b16 %v4279
      %v4344 = vunpack.c.l.b16 %v4280
      %v4345 = vunpack.c.l.b16 %v4281
      %v4346 = vunpack.c.l.b16 %v4282
      %v4347 = vunpack.c.l.b16 %v4283
      %v4348 = vunpack.c.l.b16 %v4284
      %v4349 = vunpack.c.l.b16 %v4285
      %v4350 = vunpack.c.l.b16 %v4286
      %v4351 = vunpack.c.l.b16 %v4287
      %v4352 = vunpack.c.l.b16 %v4288
      %v4353 = vunpack.c.l.b16 %v4289
      %v4354 = vunpack.c.l.b16 %v4290
      %v4355 = vunpack.c.l.b16 %v4291
      %v4356 = vunpack.c.l.b16 %v4292
      %v4357 = vunpack.c.l.b16 %v4293
      %v4358 = vunpack.c.l.b16 %v4294
      %v4359 = vunpack.c.l.b16 %v4295
      %v4360 = vunpack.c.l.b16 %v4296
      %v4361 = vunpack.c.l.b16 %v4297
      %v4362 = vunpack.c.l.b16 %v4298
      %v4363 = vunpack.c.l.b16 %v4299
      %v4364 = vunpack.c.l.b16 %v4300
      %v4365 = vunpack.c.l.b16 %v4301
      %v4366 = vunpack.c.l.b16 %v4302
      %v4367 = vunpack.c.l.b16 %v4303
      %v4368 = vpack.c.b16 %v4337, %v4336
      %v4369 = vpack.c.b16 %v4339, %v4338
      %v4370 = vpack.c.b16 %v4341, %v4340
      %v4371 = vpack.c.b16 %v4343, %v4342
      %v4372 = vpack.c.b16 %v4345, %v4344
      %v4373 = vpack.c.b16 %v4347, %v4346
      %v4374 = vpack.c.b16 %v4349, %v4348
      %v4375 = vpack.c.b16 %v4351, %v4350
      %v4376 = vpack.c.b16 %v4353, %v4352
      %v4377 = vpack.c.b16 %v4355, %v4354
      %v4378 = vpack.c.b16 %v4357, %v4356
      %v4379 = vpack.c.b16 %v4359, %v4358
      %v4380 = vpack.c.b16 %v4361, %v4360
      %v4381 = vpack.c.b16 %v4363, %v4362
      %v4382 = vpack.c.b16 %v4365, %v4364
      %v4383 = vpack.c.b16 %v4367, %v4366
      %4400 = vmatpush.bf16.msra.mxu0 %v4375
      %4401 = vmatpush.bf16.msra.mxu0 %v4374
      %4402 = vmatpush.bf16.msra.mxu0 %v4373
      %4403 = vmatpush.bf16.msra.mxu0 %v4372
      %4404 = vmatpush.bf16.msra.mxu0 %v4371
      %4405 = vmatpush.bf16.msra.mxu0 %v4370
      %4406 = vmatpush.bf16.msra.mxu0 %v4369
      %4407 = vmatpush.bf16.msra.mxu0 %v4368
      %4408 = vmatmul.bf16.gmra.mxu0 %v4268
      %v4409 = vpop.f32.mrf.mxu0
      %v4410 = vadd.f32 0.0, %v4409
      %v4411 = vpop.f32.mrf.mxu0
      %v4412 = vadd.f32 0.0, %v4411
      %4413 = vmatmul.bf16.gmra.mxu0 %v4270
      %v4414 = vpop.f32.mrf.mxu0
      %v4415 = vadd.f32 0.0, %v4414
      %v4416 = vpop.f32.mrf.mxu0
      %v4417 = vadd.f32 0.0, %v4416
      %4418 = vdwg.mxu0
      %4419 = vmatpush.bf16.msra.mxu0 %v4383
      %4420 = vmatpush.bf16.msra.mxu0 %v4382
      %4421 = vmatpush.bf16.msra.mxu0 %v4381
      %4422 = vmatpush.bf16.msra.mxu0 %v4380
      %4423 = vmatpush.bf16.msra.mxu0 %v4379
      %4424 = vmatpush.bf16.msra.mxu0 %v4378
      %4425 = vmatpush.bf16.msra.mxu0 %v4377
      %4426 = vmatpush.bf16.msra.mxu0 %v4376
      %4427 = vmatmul.bf16.gmra.mxu0 %v4269
      %v4428 = vpop.f32.mrf.mxu0
      %v4429 = vadd.f32 %v4410, %v4428
      %v4430 = vpop.f32.mrf.mxu0
      %v4431 = vadd.f32 %v4412, %v4430
      %4432 = vmatmul.bf16.gmra.mxu0 %v4271
      %v4433 = vpop.f32.mrf.mxu0
      %v4434 = vadd.f32 %v4415, %v4433
      %v4435 = vpop.f32.mrf.mxu0
      %v4436 = vadd.f32 %v4417, %v4435
      %4437 = vdwg.mxu0
      %v4438 = vld [vmem:[%s7] sm:$0xff]
      %v4439 = vld [vmem:[%s7 + $0x8] sm:$0xff]
      %v4440 = vld [vmem:[%s7 + $0x10] sm:$0xff]
      %v4441 = vld [vmem:[%s7 + $0x18] sm:$0xff]
      %v4442 = vld [vmem:[%s7 + $0x20] sm:$0xff]
      %v4443 = vld [vmem:[%s7 + $0x28] sm:$0xff]
      %v4444 = vld [vmem:[%s7 + $0x30] sm:$0xff]
      %v4445 = vld [vmem:[%s7 + $0x38] sm:$0xff]
      %v4446 = vmul.f32 %v4438, %v4429
      %v4447 = vmul.f32 %v4439, %v4431
      %v4448 = vmul.f32 %v4440, %v4434
      %v4449 = vmul.f32 %v4441, %v4436
      %v4450 = vmul.f32 %v4442, %v4429
      %v4451 = vmul.f32 %v4443, %v4431
      %v4452 = vmul.f32 %v4444, %v4434
      %v4453 = vmul.f32 %v4445, %v4436
      %vm4454 = vcmask 187392
      %v4455 = vsel %vm4454, %v4446, 0.0
      %4456 = vadd.xlane.f32.xlu0 %v4455
      %v4457 = vpop.xlane.xlu0 %4456
      %v4458 = vsel %vm4454, %v4447, 0.0
      %4459 = vadd.xlane.f32.xlu0 %v4458
      %v4460 = vpop.xlane.xlu0 %4459
      %v4461 = vsel %vm4454, %v4448, 0.0
      %4462 = vadd.xlane.f32.xlu0 %v4461
      %v4463 = vpop.xlane.xlu0 %4462
      %v4464 = vsel %vm4454, %v4449, 0.0
      %4465 = vadd.xlane.f32.xlu0 %v4464
      %v4466 = vpop.xlane.xlu0 %4465
      %v4467 = vsel %vm4454, %v4450, 0.0
      %4468 = vadd.xlane.f32.xlu0 %v4467
      %v4469 = vpop.xlane.xlu0 %4468
      %v4470 = vsel %vm4454, %v4451, 0.0
      %4471 = vadd.xlane.f32.xlu0 %v4470
      %v4472 = vpop.xlane.xlu0 %4471
      %v4473 = vsel %vm4454, %v4452, 0.0
      %4474 = vadd.xlane.f32.xlu0 %v4473
      %v4475 = vpop.xlane.xlu0 %4474
      %v4476 = vsel %vm4454, %v4453, 0.0
      %4477 = vadd.xlane.f32.xlu0 %v4476
      %v4478 = vpop.xlane.xlu0 %4477
      %v4487 = vlaneseq
      %v4488 = vand.u32 %v4487, 127
      %v4489 = vperm.slane %v4457, %v4488
      %v4490 = vadd.s32 %v4488, 4294967288
      %v4491 = vperm.slane %v4460, %v4490
      %vm4492 = vcmask 130112
      %v4493 = vsel %vm4492, %v4491, %v4489
      %v4494 = vadd.s32 %v4488, 4294967280
      %v4495 = vperm.slane %v4463, %v4494
      %vm4496 = vcmask 195712
      %v4497 = vsel %vm4496, %v4495, %v4493
      %v4498 = vadd.s32 %v4488, 4294967272
      %v4499 = vperm.slane %v4466, %v4498
      %vm4500 = vcmask 261312
      %v4501 = vsel %vm4500, %v4499, %v4497
      %v4502 = vperm.slane %v4469, %v4488
      %v4503 = vperm.slane %v4472, %v4490
      %v4504 = vsel %vm4492, %v4503, %v4502
      %v4505 = vperm.slane %v4475, %v4494
      %v4506 = vsel %vm4496, %v4505, %v4504
      %v4507 = vperm.slane %v4478, %v4498
      %v4508 = vsel %vm4500, %v4507, %v4506
      %vm4509 = vcmask 1041409
      %v4510 = vsel %vm4509, %v4508, %v4501
      %vm4512 = vcmask 254976
      %v4513 = vsel %vm4512, %v4510, 0.0
      %4514 = vadd.xlane.f32.xlu0 %v4513
      %v4515 = vpop.xlane.xlu0 %4514
      %v4516 = vld [vmem:[%s8] sm:$0x3]
      %v4517 = vadd.f32 %v4515, %v4516
      %vm4518 = vcmask 1024
      %4519 = vst.msk [vmem:[%s330] sm:$0x3] %vm4518, %v4517
      %p4520 = scmp.lt.s32.totalorder %s20, 1
      %s4521 = scalar_select %p4520, %s20, 1
      %s4522 = smul.addr %s4521, 2
      %s4523 = scalar_lea.vmem %s9, %s4522
      // Predicated region
      $region57: #{eegnet_forward_pallas.1} parent=55 // pred_check
        %p4524 = pneg %p232
      $region58: #{eegnet_forward_pallas.1} parent=55 // pred_check_branch
        %4526 = sbr.rel (%p4524) target = $region60
      $region59: #{eegnet_forward_pallas.1} parent=55 // pred_region
        _
      $region60: #{eegnet_forward_pallas.1} parent=55 // pred_fallthru
        _
    $region56: #{eegnet_forward_pallas.1} parent=5 // pred_fallthru
      _
    %p4527 = scmp.le.s32.totalorder 2, %s15
    // Predicated region
    $region61: #{eegnet_forward_pallas.1} parent=5 // pred_check
      %p4528 = pneg %p4527
    $region62: #{eegnet_forward_pallas.1} parent=5 // pred_check_branch
      %4530 = sbr.rel (%p4528) target = $region64
    $region63: #{eegnet_forward_pallas.1} parent=5 // pred_region
      %s4531 = ssub.s32 %s15, 2
      // Predicated region
      $region65: #{eegnet_forward_pallas.1} parent=63 // pred_check
        %p4532 = pneg %p238
      $region66: #{eegnet_forward_pallas.1} parent=63 // pred_check_branch
        %4534 = sbr.rel (%p4532) target = $region68
      $region67: #{eegnet_forward_pallas.1} parent=63 // pred_region
        %p4535 = scmp.lt.s32.totalorder %s21, 1
        %s4536 = scalar_select %p4535, %s21, 1
        %s4537 = smul.addr %s4536, 2
        %s4538 = scalar_lea.vmem %s9, %s4537
      $region68: #{eegnet_forward_pallas.1} parent=63 // pred_fallthru
        _
    $region64: #{eegnet_forward_pallas.1} parent=5 // pred_fallthru
      _
  $region6: #{eegnet_forward_pallas.1} parent=0 // loop_footer
    %s19 = sadd.s32 1, %s15
  $region7: #{eegnet_forward_pallas.1} parent=0 // loop_footer_branch
    %14 = sbr.rel target = $region3
  $region8: #{eegnet_forward_pallas.1} parent=0 // loop_exit
    _

</llo_original>
